<compile_context>
chip_gen: v7x
topology: tpu7x:2x2x1
jax: 0.10.0
libtpu: 0.0.40
codegen_flags: <defaults>
</compile_context>

<pallas_src>
import math

import jax
import jax.numpy as jnp
from jax.experimental import pallas as pl
from jax.experimental.pallas import tpu as pltpu

# ----------------------------- small config -----------------------------
HIDDEN = 32
N_HEADS = 4
HEAD_DIM = HIDDEN // N_HEADS
INTERMEDIATE = 64
N_LAYERS = 2
VOCAB = 100
TYPE_VOCAB = 2
MAX_POS = 32
NUM_TOKENS = 4          # prompt_config.NUM_TOKENS
PROMPT_DIM = 16         # prompt_config.PROJECT
OUT_DIM = 8
SEQ = 8
BATCH = 2
LN_EPS_BERT = 1e-12
LN_EPS_HEAD = 1e-5


# ----------------------------- fused Pallas kernel -----------------------------
def _prompted_bert_kernel(
        emb_ref, mask_ref, prompts_ref,
        emb_ln_g_ref, emb_ln_b_ref,
        pp_w_ref, pp_b_ref,
        wqkv_ref, bqkv_ref, wo_ref, bo_ref,
        ln1_g_ref, ln1_b_ref,
        wi_ref, bi_ref, wo2_ref, bo2_ref,
        ln2_g_ref, ln2_b_ref,
        fin_ln_g_ref, fin_ln_b_ref,
        head_w_ref, head_b_ref,
        out_ref,
        hid_ref, ctx_ref):
    # static sizes derived from ref shapes (everything is unrolled at trace time)
    B, S_total = mask_ref.shape
    BS, H = emb_ref.shape
    S = BS // B
    T = S_total - S
    n_layers = wqkv_ref.shape[0]
    n_deep = prompts_ref.shape[0] // T - 1
    n_heads = N_HEADS
    d_head = H // n_heads
    scale = 1.0 / math.sqrt(d_head)

    def ln(x, g, b, eps):
        mu = jnp.mean(x, axis=-1, keepdims=True)
        var = jnp.mean(jnp.square(x - mu), axis=-1, keepdims=True)
        return (x - mu) * jax.lax.rsqrt(var + eps) * g + b

    def gelu(x):
        return 0.5 * x * (1.0 + jax.lax.erf(x * 0.7071067811865476))

    # ---- BERT embedding LayerNorm (eps = 1e-12) ----
    x2 = ln(emb_ref[...], emb_ln_g_ref[...], emb_ln_b_ref[...], LN_EPS_BERT)   # (B*S, H)

    # ---- shallow + deep prompt projection, one fused matmul ----
    prompts = (jnp.dot(prompts_ref[...], pp_w_ref[...],
                       preferred_element_type=jnp.float32) + pp_b_ref[...])    # (n_layers*T, H)

    # ---- splice prompt tokens after CLS; hidden state kept resident in VMEM ----
    for b in range(B):
        r = b * S_total
        e = b * S
        hid_ref[r:r + 1, :] = x2[e:e + 1, :]                 # CLS
        hid_ref[r + 1:r + 1 + T, :] = prompts[0:T, :]        # prompt tokens
        hid_ref[r + 1 + T:r + S_total, :] = x2[e + 1:e + S, :]

    mask = mask_ref[...]   # raw 0/1 mask, added directly to scores (as in PyTorch ref)

    # ---- encoder layers (statically unrolled; weights indexed by layer axis) ----
    for l in range(n_layers):
        # DEEP prompting: replace positions [1, 1+T) with the projected deep prompt
        if l > 0 and (l - 1) < n_deep:
            for b in range(B):
                r = b * S_total
                hid_ref[r + 1:r + 1 + T, :] = prompts[l * T:(l + 1) * T, :]

        h2 = hid_ref[...]                                                     # (B*S_total, H)

        # fused QKV projection: one lane-dense (H, 3H) matmul instead of three
        qkv = jnp.dot(h2, wqkv_ref[l], preferred_element_type=jnp.float32) + bqkv_ref[l]
        q = qkv[:, 0 * H:1 * H]
        k = qkv[:, 1 * H:2 * H]
        v = qkv[:, 2 * H:3 * H]

        # multi-head attention, fully unrolled over (batch, head); everything
        # stays in vregs / VMEM — no HBM traffic, no materialized transposes.
        for b in range(B):
            r = b * S_total
            m_b = mask[b:b + 1, :]                     # (1, S_total) additive mask row
            for h in range(n_heads):
                c = h * d_head
                q_bh = q[r:r + S_total, c:c + d_head]
                k_bh = k[r:r + S_total, c:c + d_head]
                v_bh = v[r:r + S_total, c:c + d_head]
                # q . k contracting the head dim (no k.T / XLU transpose)
                s = jax.lax.dot_general(
                    q_bh, k_bh, (((1,), (1,)), ((), ())),
                    preferred_element_type=jnp.float32) * scale + m_b
                s = s - jnp.max(s, axis=-1, keepdims=True)
                p = jnp.exp(s)
                p = p * pl.reciprocal(jnp.sum(p, axis=-1, keepdims=True), approx=True)
                ctx_ref[r:r + S_total, c:c + d_head] = jnp.dot(
                    p, v_bh, preferred_element_type=jnp.float32)

        attn_out = jnp.dot(ctx_ref[...], wo_ref[l],
                           preferred_element_type=jnp.float32) + bo_ref[l]
        attn_out = ln(attn_out + h2, ln1_g_ref[l], ln1_b_ref[l], LN_EPS_BERT)

        inter = gelu(jnp.dot(attn_out, wi_ref[l],
                             preferred_element_type=jnp.float32) + bi_ref[l])
        ffn = jnp.dot(inter, wo2_ref[l], preferred_element_type=jnp.float32) + bo2_ref[l]
        hid_ref[...] = ln(ffn + attn_out, ln2_g_ref[l], ln2_b_ref[l], LN_EPS_BERT)

    # ---- final LayerNorm (eps = 1e-5) + classification head on CLS tokens ----
    enc = ln(hid_ref[...], fin_ln_g_ref[...], fin_ln_b_ref[...], LN_EPS_HEAD)
    logits = jnp.dot(enc, head_w_ref[...], preferred_element_type=jnp.float32) + head_b_ref[...]
    for b in range(B):
        out_ref[b:b + 1, :] = logits[b * S_total:b * S_total + 1, :]


# ----------------------------- forward (glue + single pallas_call) -----------------------------
def prompted_bert_forward(params, token_idx, segment_idx, mask_idx):
    B, S = token_idx.shape
    S_total = S + NUM_TOKENS

    # extend attention mask with ones for the prompt tokens (raw 0/1, added to scores)
    new_mask = jnp.ones((B, NUM_TOKENS), dtype=jnp.float32)
    mask_f = mask_idx.astype(jnp.float32)
    mask_ext = jnp.concatenate([mask_f[:, :1], new_mask, mask_f[:, 1:]], axis=-1)  # (B, S_total)

    # TODO(synk): embedding-table gather has no clean rectangular Pallas tile; done in JAX glue.
    emb = (jnp.take(params["word_emb"], token_idx, axis=0)
           + params["pos_emb"][:S][None, :, :]
           + jnp.take(params["type_emb"], segment_idx, axis=0))
    emb2 = emb.reshape(B * S, HIDDEN).astype(jnp.float32)

    # stack shallow + deep prompt embeddings so the kernel projects them in one matmul
    prompts_raw = jnp.concatenate(
        [params["prompt_embeddings"].reshape(NUM_TOKENS, PROMPT_DIM),
         params["deep_prompt_embeddings"].reshape(-1, PROMPT_DIM)], axis=0)     # (N_LAYERS*T, P)

    lp = params["layers"]
    return pl.pallas_call(
        _prompted_bert_kernel,
        out_shape=jax.ShapeDtypeStruct((B, OUT_DIM), jnp.float32),
        scratch_shapes=[
            pltpu.VMEM((B * S_total, HIDDEN), jnp.float32),   # resident hidden state
            pltpu.VMEM((B * S_total, HIDDEN), jnp.float32),   # attention context assembly
        ],
    )(emb2, mask_ext, prompts_raw,
      params["emb_ln_g"], params["emb_ln_b"],
      params["prompt_proj_w"], params["prompt_proj_b"],
      lp["wqkv"], lp["bqkv"], lp["wo"], lp["bo"],
      lp["ln1_g"], lp["ln1_b"],
      lp["wi"], lp["bi"], lp["wo2"], lp["bo2"],
      lp["ln2_g"], lp["ln2_b"],
      params["final_ln_g"], params["final_ln_b"],
      params["head_w"], params["head_b"])


# ----------------------------- deterministic parameter init -----------------------------
def init_params(key):
    keys = iter(jax.random.split(key, 128))

    def nrm(shape, std=0.02):
        return (std * jax.random.normal(next(keys), shape)).astype(jnp.float32)

    params = {
        "word_emb": nrm((VOCAB, HIDDEN)),
        "pos_emb": nrm((MAX_POS, HIDDEN)),
        "type_emb": nrm((TYPE_VOCAB, HIDDEN)),
        "emb_ln_g": jnp.ones((1, HIDDEN), jnp.float32),
        "emb_ln_b": jnp.zeros((1, HIDDEN), jnp.float32),
        "final_ln_g": jnp.ones((1, HIDDEN), jnp.float32),
        "final_ln_b": jnp.zeros((1, HIDDEN), jnp.float32),
        # prompt_proj: kaiming_normal fan_out
        "prompt_proj_w": (math.sqrt(2.0 / HIDDEN)
                          * jax.random.normal(next(keys), (PROMPT_DIM, HIDDEN))).astype(jnp.float32),
        "prompt_proj_b": jnp.zeros((1, HIDDEN), jnp.float32),
        "head_w": nrm((HIDDEN, OUT_DIM)),
        "head_b": jnp.zeros((1, OUT_DIM), jnp.float32),
    }
    val = math.sqrt(6.0 / (NUM_TOKENS + PROMPT_DIM))
    params["prompt_embeddings"] = jax.random.uniform(
        next(keys), (1, NUM_TOKENS, PROMPT_DIM), minval=-val, maxval=val).astype(jnp.float32)
    params["deep_prompt_embeddings"] = jax.random.uniform(
        next(keys), (N_LAYERS - 1, NUM_TOKENS, PROMPT_DIM), minval=-val, maxval=val).astype(jnp.float32)

    wqkv, bqkv, wo, bo = [], [], [], []
    ln1_g, ln1_b, wi, bi, wo2, bo2, ln2_g, ln2_b = [], [], [], [], [], [], [], []
    for _ in range(N_LAYERS):
        wq, wk, wv = nrm((HIDDEN, HIDDEN)), nrm((HIDDEN, HIDDEN)), nrm((HIDDEN, HIDDEN))
        wqkv.append(jnp.concatenate([wq, wk, wv], axis=1))          # fused QKV weight
        bqkv.append(jnp.zeros((1, 3 * HIDDEN), jnp.float32))
        wo.append(nrm((HIDDEN, HIDDEN)))
        bo.append(jnp.zeros((1, HIDDEN), jnp.float32))
        ln1_g.append(jnp.ones((1, HIDDEN), jnp.float32))
        ln1_b.append(jnp.zeros((1, HIDDEN), jnp.float32))
        wi.append(nrm((HIDDEN, INTERMEDIATE)))
        bi.append(jnp.zeros((1, INTERMEDIATE), jnp.float32))
        wo2.append(nrm((INTERMEDIATE, HIDDEN)))
        bo2.append(jnp.zeros((1, HIDDEN), jnp.float32))
        ln2_g.append(jnp.ones((1, HIDDEN), jnp.float32))
        ln2_b.append(jnp.zeros((1, HIDDEN), jnp.float32))

    params["layers"] = {
        "wqkv": jnp.stack(wqkv), "bqkv": jnp.stack(bqkv),
        "wo": jnp.stack(wo), "bo": jnp.stack(bo),
        "ln1_g": jnp.stack(ln1_g), "ln1_b": jnp.stack(ln1_b),
        "wi": jnp.stack(wi), "bi": jnp.stack(bi),
        "wo2": jnp.stack(wo2), "bo2": jnp.stack(bo2),
        "ln2_g": jnp.stack(ln2_g), "ln2_b": jnp.stack(ln2_b),
    }
    return params


# ----------------------------- main -----------------------------
if __name__ == "__main__":
    key = jax.random.PRNGKey(0)
    pkey, tkey = jax.random.split(key)
    params = init_params(pkey)

    token_idx = jax.random.randint(tkey, (BATCH, SEQ), 0, VOCAB, dtype=jnp.int32)
    segment_idx = jnp.zeros((BATCH, SEQ), dtype=jnp.int32)
    mask_idx = jnp.ones((BATCH, SEQ), dtype=jnp.float32).at[:, -2:].set(0.0)

    fwd = jax.jit(prompted_bert_forward)
    logits = fwd(params, token_idx, segment_idx, mask_idx)
    jax.block_until_ready(logits)
    assert logits.shape == (BATCH, OUT_DIM)
    print("KERNEL_OK")
</pallas_src>

<mosaic_0001>
module attributes {stable_mosaic.version = 11 : i64} {
  func.func @_prompted_bert_kernel(%arg0: memref<16x32xf32, #tpu.memory_space<vmem>>, %arg1: memref<2x12xf32, #tpu.memory_space<vmem>>, %arg2: memref<8x16xf32, #tpu.memory_space<vmem>>, %arg3: memref<1x32xf32, #tpu.memory_space<vmem>>, %arg4: memref<1x32xf32, #tpu.memory_space<vmem>>, %arg5: memref<16x32xf32, #tpu.memory_space<vmem>>, %arg6: memref<1x32xf32, #tpu.memory_space<vmem>>, %arg7: memref<2x32x96xf32, #tpu.memory_space<vmem>>, %arg8: memref<2x1x96xf32, #tpu.memory_space<vmem>>, %arg9: memref<2x32x32xf32, #tpu.memory_space<vmem>>, %arg10: memref<2x1x32xf32, #tpu.memory_space<vmem>>, %arg11: memref<2x1x32xf32, #tpu.memory_space<vmem>>, %arg12: memref<2x1x32xf32, #tpu.memory_space<vmem>>, %arg13: memref<2x32x64xf32, #tpu.memory_space<vmem>>, %arg14: memref<2x1x64xf32, #tpu.memory_space<vmem>>, %arg15: memref<2x64x32xf32, #tpu.memory_space<vmem>>, %arg16: memref<2x1x32xf32, #tpu.memory_space<vmem>>, %arg17: memref<2x1x32xf32, #tpu.memory_space<vmem>>, %arg18: memref<2x1x32xf32, #tpu.memory_space<vmem>>, %arg19: memref<1x32xf32, #tpu.memory_space<vmem>>, %arg20: memref<1x32xf32, #tpu.memory_space<vmem>>, %arg21: memref<32x8xf32, #tpu.memory_space<vmem>>, %arg22: memref<1x8xf32, #tpu.memory_space<vmem>>, %arg23: memref<2x8xf32, #tpu.memory_space<vmem>>, %arg24: memref<24x32xf32, #tpu.memory_space<vmem>>, %arg25: memref<24x32xf32, #tpu.memory_space<vmem>>) attributes {dimension_semantics = [], scalar_prefetch = 0 : i64, scratch_operands = 2 : i64, tpu.core_type = #tpu.core_type<tc>} {
    %c0 = arith.constant 0 : index
    %c0_0 = arith.constant 0 : index
    %0 = vector.load %arg0[%c0, %c0_0] : memref<16x32xf32, #tpu.memory_space<vmem>>, vector<16x32xf32>
    %c0_1 = arith.constant 0 : index
    %c0_2 = arith.constant 0 : index
    %1 = vector.load %arg3[%c0_1, %c0_2] : memref<1x32xf32, #tpu.memory_space<vmem>>, vector<1x32xf32>
    %c0_3 = arith.constant 0 : index
    %c0_4 = arith.constant 0 : index
    %2 = vector.load %arg4[%c0_3, %c0_4] : memref<1x32xf32, #tpu.memory_space<vmem>>, vector<1x32xf32>
    %cst = arith.constant dense<0.000000e+00> : vector<16xf32>
    %3 = vector.multi_reduction <add>, %0, %cst [1] : vector<16x32xf32> to vector<16xf32>
    %4 = vector.shape_cast %3 : vector<16xf32> to vector<16x1xf32>
    %cst_5 = arith.constant 3.200000e+01 : f32
    %5 = vector.broadcast %cst_5 : f32 to vector<16x1xf32>
    %6 = arith.divf %4, %5 : vector<16x1xf32>
    %7 = vector.broadcast %6 : vector<16x1xf32> to vector<16x32xf32>
    %8 = arith.subf %0, %7 : vector<16x32xf32>
    %9 = arith.mulf %8, %8 : vector<16x32xf32>
    %cst_6 = arith.constant dense<0.000000e+00> : vector<16xf32>
    %10 = vector.multi_reduction <add>, %9, %cst_6 [1] : vector<16x32xf32> to vector<16xf32>
    %11 = vector.shape_cast %10 : vector<16xf32> to vector<16x1xf32>
    %cst_7 = arith.constant 3.200000e+01 : f32
    %12 = vector.broadcast %cst_7 : f32 to vector<16x1xf32>
    %13 = arith.divf %11, %12 : vector<16x1xf32>
    %14 = vector.broadcast %6 : vector<16x1xf32> to vector<16x32xf32>
    %15 = arith.subf %0, %14 : vector<16x32xf32>
    %cst_8 = arith.constant 9.99999996E-13 : f32
    %16 = vector.broadcast %cst_8 : f32 to vector<16x1xf32>
    %17 = arith.addf %13, %16 : vector<16x1xf32>
    %18 = math.rsqrt %17 : vector<16x1xf32>
    %19 = vector.broadcast %18 : vector<16x1xf32> to vector<16x32xf32>
    %20 = arith.mulf %15, %19 : vector<16x32xf32>
    %21 = vector.broadcast %1 : vector<1x32xf32> to vector<16x32xf32>
    %22 = arith.mulf %20, %21 : vector<16x32xf32>
    %23 = vector.broadcast %2 : vector<1x32xf32> to vector<16x32xf32>
    %24 = arith.addf %22, %23 : vector<16x32xf32>
    %c0_9 = arith.constant 0 : index
    %c0_10 = arith.constant 0 : index
    %25 = vector.load %arg2[%c0_9, %c0_10] : memref<8x16xf32, #tpu.memory_space<vmem>>, vector<8x16xf32>
    %c0_11 = arith.constant 0 : index
    %c0_12 = arith.constant 0 : index
    %26 = vector.load %arg5[%c0_11, %c0_12] : memref<16x32xf32, #tpu.memory_space<vmem>>, vector<16x32xf32>
    %cst_13 = arith.constant dense<0.000000e+00> : vector<8x32xf32>
    %27 = tpu.matmul %25, %26, %cst_13 {dimension_numbers = #tpu.dot_dimension_numbers<[1], [0], [0], [1], [0, 0, 1, 1], [], []>} : vector<8x16xf32>, vector<16x32xf32>, vector<8x32xf32> -> vector<8x32xf32>
    %c0_14 = arith.constant 0 : index
    %c0_15 = arith.constant 0 : index
    %28 = vector.load %arg6[%c0_14, %c0_15] : memref<1x32xf32, #tpu.memory_space<vmem>>, vector<1x32xf32>
    %29 = vector.broadcast %28 : vector<1x32xf32> to vector<8x32xf32>
    %30 = arith.addf %27, %29 : vector<8x32xf32>
    %31 = vector.extract_strided_slice %24 {offsets = [0, 0], sizes = [1, 32], strides = [1, 1]} : vector<16x32xf32> to vector<1x32xf32>
    %c0_16 = arith.constant 0 : index
    %c0_17 = arith.constant 0 : index
    %32 = vector.load %arg24[%c0_16, %c0_17] : memref<24x32xf32, #tpu.memory_space<vmem>>, vector<1x32xf32>
    tpu.vector_store %arg24[%c0_16, %c0_17], %31 {strides = array<i32>} : memref<24x32xf32, #tpu.memory_space<vmem>>, vector<1x32xf32>,
    %33 = vector.extract_strided_slice %30 {offsets = [0, 0], sizes = [4, 32], strides = [1, 1]} : vector<8x32xf32> to vector<4x32xf32>
    %c1 = arith.constant 1 : index
    %c0_18 = arith.constant 0 : index
    %34 = vector.load %arg24[%c1, %c0_18] : memref<24x32xf32, #tpu.memory_space<vmem>>, vector<4x32xf32>
    tpu.vector_store %arg24[%c1, %c0_18], %33 {strides = array<i32>} : memref<24x32xf32, #tpu.memory_space<vmem>>, vector<4x32xf32>,
    %35 = vector.extract_strided_slice %24 {offsets = [1, 0], sizes = [7, 32], strides = [1, 1]} : vector<16x32xf32> to vector<7x32xf32>
    %c5 = arith.constant 5 : index
    %c0_19 = arith.constant 0 : index
    %36 = vector.load %arg24[%c5, %c0_19] : memref<24x32xf32, #tpu.memory_space<vmem>>, vector<7x32xf32>
    tpu.vector_store %arg24[%c5, %c0_19], %35 {strides = array<i32>} : memref<24x32xf32, #tpu.memory_space<vmem>>, vector<7x32xf32>,
    %37 = vector.extract_strided_slice %24 {offsets = [8, 0], sizes = [1, 32], strides = [1, 1]} : vector<16x32xf32> to vector<1x32xf32>
    %c12 = arith.constant 12 : index
    %c0_20 = arith.constant 0 : index
    %38 = vector.load %arg24[%c12, %c0_20] : memref<24x32xf32, #tpu.memory_space<vmem>>, vector<1x32xf32>
    tpu.vector_store %arg24[%c12, %c0_20], %37 {strides = array<i32>} : memref<24x32xf32, #tpu.memory_space<vmem>>, vector<1x32xf32>,
    %39 = vector.extract_strided_slice %30 {offsets = [0, 0], sizes = [4, 32], strides = [1, 1]} : vector<8x32xf32> to vector<4x32xf32>
    %c13 = arith.constant 13 : index
    %c0_21 = arith.constant 0 : index
    %40 = vector.load %arg24[%c13, %c0_21] : memref<24x32xf32, #tpu.memory_space<vmem>>, vector<4x32xf32>
    tpu.vector_store %arg24[%c13, %c0_21], %39 {strides = array<i32>} : memref<24x32xf32, #tpu.memory_space<vmem>>, vector<4x32xf32>,
    %41 = vector.extract_strided_slice %24 {offsets = [9, 0], sizes = [7, 32], strides = [1, 1]} : vector<16x32xf32> to vector<7x32xf32>
    %c17 = arith.constant 17 : index
    %c0_22 = arith.constant 0 : index
    %42 = vector.load %arg24[%c17, %c0_22] : memref<24x32xf32, #tpu.memory_space<vmem>>, vector<7x32xf32>
    tpu.vector_store %arg24[%c17, %c0_22], %41 {strides = array<i32>} : memref<24x32xf32, #tpu.memory_space<vmem>>, vector<7x32xf32>,
    %c0_23 = arith.constant 0 : index
    %c0_24 = arith.constant 0 : index
    %43 = vector.load %arg1[%c0_23, %c0_24] : memref<2x12xf32, #tpu.memory_space<vmem>>, vector<2x12xf32>
    %c0_25 = arith.constant 0 : index
    %c0_26 = arith.constant 0 : index
    %44 = vector.load %arg24[%c0_25, %c0_26] : memref<24x32xf32, #tpu.memory_space<vmem>>, vector<24x32xf32>
    %c0_27 = arith.constant 0 : index
    %c0_28 = arith.constant 0 : index
    %c0_29 = arith.constant 0 : index
    %45 = vector.load %arg7[%c0_27, %c0_28, %c0_29] : memref<2x32x96xf32, #tpu.memory_space<vmem>>, vector<1x32x96xf32>
    %46 = vector.shape_cast %45 : vector<1x32x96xf32> to vector<32x96xf32>
    %cst_30 = arith.constant dense<0.000000e+00> : vector<24x96xf32>
    %47 = tpu.matmul %44, %46, %cst_30 {dimension_numbers = #tpu.dot_dimension_numbers<[1], [0], [0], [1], [0, 0, 1, 1], [], []>} : vector<24x32xf32>, vector<32x96xf32>, vector<24x96xf32> -> vector<24x96xf32>
    %c0_31 = arith.constant 0 : index
    %c0_32 = arith.constant 0 : index
    %c0_33 = arith.constant 0 : index
    %48 = vector.load %arg8[%c0_31, %c0_32, %c0_33] : memref<2x1x96xf32, #tpu.memory_space<vmem>>, vector<1x1x96xf32>
    %49 = vector.shape_cast %48 : vector<1x1x96xf32> to vector<1x96xf32>
    %50 = vector.broadcast %49 : vector<1x96xf32> to vector<24x96xf32>
    %51 = arith.addf %47, %50 : vector<24x96xf32>
    %52 = vector.extract_strided_slice %51 {offsets = [0, 0], sizes = [24, 32], strides = [1, 1]} : vector<24x96xf32> to vector<24x32xf32>
    %53 = vector.extract_strided_slice %51 {offsets = [0, 32], sizes = [24, 32], strides = [1, 1]} : vector<24x96xf32> to vector<24x32xf32>
    %54 = vector.extract_strided_slice %51 {offsets = [0, 64], sizes = [24, 32], strides = [1, 1]} : vector<24x96xf32> to vector<24x32xf32>
    %55 = vector.extract_strided_slice %43 {offsets = [0, 0], sizes = [1, 12], strides = [1, 1]} : vector<2x12xf32> to vector<1x12xf32>
    %56 = vector.extract_strided_slice %52 {offsets = [0, 0], sizes = [12, 8], strides = [1, 1]} : vector<24x32xf32> to vector<12x8xf32>
    %57 = vector.extract_strided_slice %53 {offsets = [0, 0], sizes = [12, 8], strides = [1, 1]} : vector<24x32xf32> to vector<12x8xf32>
    %58 = vector.extract_strided_slice %54 {offsets = [0, 0], sizes = [12, 8], strides = [1, 1]} : vector<24x32xf32> to vector<12x8xf32>
    %cst_34 = arith.constant dense<0.000000e+00> : vector<12x12xf32>
    %59 = tpu.matmul %56, %57, %cst_34 {dimension_numbers = #tpu.dot_dimension_numbers<[1], [1], [0], [0], [0, 0, 1, 0], [], []>} : vector<12x8xf32>, vector<12x8xf32>, vector<12x12xf32> -> vector<12x12xf32>
    %cst_35 = arith.constant 0.353553385 : f32
    %60 = vector.broadcast %cst_35 : f32 to vector<12x12xf32>
    %61 = arith.mulf %59, %60 : vector<12x12xf32>
    %62 = vector.broadcast %55 : vector<1x12xf32> to vector<12x12xf32>
    %63 = arith.addf %61, %62 : vector<12x12xf32>
    %cst_36 = arith.constant dense<0xFF800000> : vector<12xf32>
    %64 = vector.multi_reduction <maximumf>, %63, %cst_36 [1] : vector<12x12xf32> to vector<12xf32>
    %65 = vector.shape_cast %64 : vector<12xf32> to vector<12x1xf32>
    %66 = vector.broadcast %65 : vector<12x1xf32> to vector<12x12xf32>
    %67 = arith.subf %63, %66 : vector<12x12xf32>
    %68 = math.exp %67 : vector<12x12xf32>
    %cst_37 = arith.constant dense<0.000000e+00> : vector<12xf32>
    %69 = vector.multi_reduction <add>, %68, %cst_37 [1] : vector<12x12xf32> to vector<12xf32>
    %70 = vector.shape_cast %69 : vector<12xf32> to vector<12x1xf32>
    %71 = tpu.reciprocal %70 {approx = true} : vector<12x1xf32> -> vector<12x1xf32>
    %72 = vector.broadcast %71 : vector<12x1xf32> to vector<12x12xf32>
    %73 = arith.mulf %68, %72 : vector<12x12xf32>
    %cst_38 = arith.constant dense<0.000000e+00> : vector<12x8xf32>
    %74 = tpu.matmul %73, %58, %cst_38 {dimension_numbers = #tpu.dot_dimension_numbers<[1], [0], [0], [1], [0, 0, 1, 1], [], []>} : vector<12x12xf32>, vector<12x8xf32>, vector<12x8xf32> -> vector<12x8xf32>
    %c0_39 = arith.constant 0 : index
    %c0_40 = arith.constant 0 : index
    %75 = vector.load %arg25[%c0_39, %c0_40] : memref<24x32xf32, #tpu.memory_space<vmem>>, vector<12x8xf32>
    tpu.vector_store %arg25[%c0_39, %c0_40], %74 {strides = array<i32>} : memref<24x32xf32, #tpu.memory_space<vmem>>, vector<12x8xf32>,
    %76 = vector.extract_strided_slice %52 {offsets = [0, 8], sizes = [12, 8], strides = [1, 1]} : vector<24x32xf32> to vector<12x8xf32>
    %77 = vector.extract_strided_slice %53 {offsets = [0, 8], sizes = [12, 8], strides = [1, 1]} : vector<24x32xf32> to vector<12x8xf32>
    %78 = vector.extract_strided_slice %54 {offsets = [0, 8], sizes = [12, 8], strides = [1, 1]} : vector<24x32xf32> to vector<12x8xf32>
    %cst_41 = arith.constant dense<0.000000e+00> : vector<12x12xf32>
    %79 = tpu.matmul %76, %77, %cst_41 {dimension_numbers = #tpu.dot_dimension_numbers<[1], [1], [0], [0], [0, 0, 1, 0], [], []>} : vector<12x8xf32>, vector<12x8xf32>, vector<12x12xf32> -> vector<12x12xf32>
    %cst_42 = arith.constant 0.353553385 : f32
    %80 = vector.broadcast %cst_42 : f32 to vector<12x12xf32>
    %81 = arith.mulf %79, %80 : vector<12x12xf32>
    %82 = vector.broadcast %55 : vector<1x12xf32> to vector<12x12xf32>
    %83 = arith.addf %81, %82 : vector<12x12xf32>
    %cst_43 = arith.constant dense<0xFF800000> : vector<12xf32>
    %84 = vector.multi_reduction <maximumf>, %83, %cst_43 [1] : vector<12x12xf32> to vector<12xf32>
    %85 = vector.shape_cast %84 : vector<12xf32> to vector<12x1xf32>
    %86 = vector.broadcast %85 : vector<12x1xf32> to vector<12x12xf32>
    %87 = arith.subf %83, %86 : vector<12x12xf32>
    %88 = math.exp %87 : vector<12x12xf32>
    %cst_44 = arith.constant dense<0.000000e+00> : vector<12xf32>
    %89 = vector.multi_reduction <add>, %88, %cst_44 [1] : vector<12x12xf32> to vector<12xf32>
    %90 = vector.shape_cast %89 : vector<12xf32> to vector<12x1xf32>
    %91 = tpu.reciprocal %90 {approx = true} : vector<12x1xf32> -> vector<12x1xf32>
    %92 = vector.broadcast %91 : vector<12x1xf32> to vector<12x12xf32>
    %93 = arith.mulf %88, %92 : vector<12x12xf32>
    %cst_45 = arith.constant dense<0.000000e+00> : vector<12x8xf32>
    %94 = tpu.matmul %93, %78, %cst_45 {dimension_numbers = #tpu.dot_dimension_numbers<[1], [0], [0], [1], [0, 0, 1, 1], [], []>} : vector<12x12xf32>, vector<12x8xf32>, vector<12x8xf32> -> vector<12x8xf32>
    %c0_46 = arith.constant 0 : index
    %c8 = arith.constant 8 : index
    %95 = vector.load %arg25[%c0_46, %c8] : memref<24x32xf32, #tpu.memory_space<vmem>>, vector<12x8xf32>
    tpu.vector_store %arg25[%c0_46, %c8], %94 {strides = array<i32>} : memref<24x32xf32, #tpu.memory_space<vmem>>, vector<12x8xf32>,
    %96 = vector.extract_strided_slice %52 {offsets = [0, 16], sizes = [12, 8], strides = [1, 1]} : vector<24x32xf32> to vector<12x8xf32>
    %97 = vector.extract_strided_slice %53 {offsets = [0, 16], sizes = [12, 8], strides = [1, 1]} : vector<24x32xf32> to vector<12x8xf32>
    %98 = vector.extract_strided_slice %54 {offsets = [0, 16], sizes = [12, 8], strides = [1, 1]} : vector<24x32xf32> to vector<12x8xf32>
    %cst_47 = arith.constant dense<0.000000e+00> : vector<12x12xf32>
    %99 = tpu.matmul %96, %97, %cst_47 {dimension_numbers = #tpu.dot_dimension_numbers<[1], [1], [0], [0], [0, 0, 1, 0], [], []>} : vector<12x8xf32>, vector<12x8xf32>, vector<12x12xf32> -> vector<12x12xf32>
    %cst_48 = arith.constant 0.353553385 : f32
    %100 = vector.broadcast %cst_48 : f32 to vector<12x12xf32>
    %101 = arith.mulf %99, %100 : vector<12x12xf32>
    %102 = vector.broadcast %55 : vector<1x12xf32> to vector<12x12xf32>
    %103 = arith.addf %101, %102 : vector<12x12xf32>
    %cst_49 = arith.constant dense<0xFF800000> : vector<12xf32>
    %104 = vector.multi_reduction <maximumf>, %103, %cst_49 [1] : vector<12x12xf32> to vector<12xf32>
    %105 = vector.shape_cast %104 : vector<12xf32> to vector<12x1xf32>
    %106 = vector.broadcast %105 : vector<12x1xf32> to vector<12x12xf32>
    %107 = arith.subf %103, %106 : vector<12x12xf32>
    %108 = math.exp %107 : vector<12x12xf32>
    %cst_50 = arith.constant dense<0.000000e+00> : vector<12xf32>
    %109 = vector.multi_reduction <add>, %108, %cst_50 [1] : vector<12x12xf32> to vector<12xf32>
    %110 = vector.shape_cast %109 : vector<12xf32> to vector<12x1xf32>
    %111 = tpu.reciprocal %110 {approx = true} : vector<12x1xf32> -> vector<12x1xf32>
    %112 = vector.broadcast %111 : vector<12x1xf32> to vector<12x12xf32>
    %113 = arith.mulf %108, %112 : vector<12x12xf32>
    %cst_51 = arith.constant dense<0.000000e+00> : vector<12x8xf32>
    %114 = tpu.matmul %113, %98, %cst_51 {dimension_numbers = #tpu.dot_dimension_numbers<[1], [0], [0], [1], [0, 0, 1, 1], [], []>} : vector<12x12xf32>, vector<12x8xf32>, vector<12x8xf32> -> vector<12x8xf32>
    %c0_52 = arith.constant 0 : index
    %c16 = arith.constant 16 : index
    %115 = vector.load %arg25[%c0_52, %c16] : memref<24x32xf32, #tpu.memory_space<vmem>>, vector<12x8xf32>
    tpu.vector_store %arg25[%c0_52, %c16], %114 {strides = array<i32>} : memref<24x32xf32, #tpu.memory_space<vmem>>, vector<12x8xf32>,
    %116 = vector.extract_strided_slice %52 {offsets = [0, 24], sizes = [12, 8], strides = [1, 1]} : vector<24x32xf32> to vector<12x8xf32>
    %117 = vector.extract_strided_slice %53 {offsets = [0, 24], sizes = [12, 8], strides = [1, 1]} : vector<24x32xf32> to vector<12x8xf32>
    %118 = vector.extract_strided_slice %54 {offsets = [0, 24], sizes = [12, 8], strides = [1, 1]} : vector<24x32xf32> to vector<12x8xf32>
    %cst_53 = arith.constant dense<0.000000e+00> : vector<12x12xf32>
    %119 = tpu.matmul %116, %117, %cst_53 {dimension_numbers = #tpu.dot_dimension_numbers<[1], [1], [0], [0], [0, 0, 1, 0], [], []>} : vector<12x8xf32>, vector<12x8xf32>, vector<12x12xf32> -> vector<12x12xf32>
    %cst_54 = arith.constant 0.353553385 : f32
    %120 = vector.broadcast %cst_54 : f32 to vector<12x12xf32>
    %121 = arith.mulf %119, %120 : vector<12x12xf32>
    %122 = vector.broadcast %55 : vector<1x12xf32> to vector<12x12xf32>
    %123 = arith.addf %121, %122 : vector<12x12xf32>
    %cst_55 = arith.constant dense<0xFF800000> : vector<12xf32>
    %124 = vector.multi_reduction <maximumf>, %123, %cst_55 [1] : vector<12x12xf32> to vector<12xf32>
    %125 = vector.shape_cast %124 : vector<12xf32> to vector<12x1xf32>
    %126 = vector.broadcast %125 : vector<12x1xf32> to vector<12x12xf32>
    %127 = arith.subf %123, %126 : vector<12x12xf32>
    %128 = math.exp %127 : vector<12x12xf32>
    %cst_56 = arith.constant dense<0.000000e+00> : vector<12xf32>
    %129 = vector.multi_reduction <add>, %128, %cst_56 [1] : vector<12x12xf32> to vector<12xf32>
    %130 = vector.shape_cast %129 : vector<12xf32> to vector<12x1xf32>
    %131 = tpu.reciprocal %130 {approx = true} : vector<12x1xf32> -> vector<12x1xf32>
    %132 = vector.broadcast %131 : vector<12x1xf32> to vector<12x12xf32>
    %133 = arith.mulf %128, %132 : vector<12x12xf32>
    %cst_57 = arith.constant dense<0.000000e+00> : vector<12x8xf32>
    %134 = tpu.matmul %133, %118, %cst_57 {dimension_numbers = #tpu.dot_dimension_numbers<[1], [0], [0], [1], [0, 0, 1, 1], [], []>} : vector<12x12xf32>, vector<12x8xf32>, vector<12x8xf32> -> vector<12x8xf32>
    %c0_58 = arith.constant 0 : index
    %c24 = arith.constant 24 : index
    %135 = vector.load %arg25[%c0_58, %c24] : memref<24x32xf32, #tpu.memory_space<vmem>>, vector<12x8xf32>
    tpu.vector_store %arg25[%c0_58, %c24], %134 {strides = array<i32>} : memref<24x32xf32, #tpu.memory_space<vmem>>, vector<12x8xf32>,
    %136 = vector.extract_strided_slice %43 {offsets = [1, 0], sizes = [1, 12], strides = [1, 1]} : vector<2x12xf32> to vector<1x12xf32>
    %137 = vector.extract_strided_slice %52 {offsets = [12, 0], sizes = [12, 8], strides = [1, 1]} : vector<24x32xf32> to vector<12x8xf32>
    %138 = vector.extract_strided_slice %53 {offsets = [12, 0], sizes = [12, 8], strides = [1, 1]} : vector<24x32xf32> to vector<12x8xf32>
    %139 = vector.extract_strided_slice %54 {offsets = [12, 0], sizes = [12, 8], strides = [1, 1]} : vector<24x32xf32> to vector<12x8xf32>
    %cst_59 = arith.constant dense<0.000000e+00> : vector<12x12xf32>
    %140 = tpu.matmul %137, %138, %cst_59 {dimension_numbers = #tpu.dot_dimension_numbers<[1], [1], [0], [0], [0, 0, 1, 0], [], []>} : vector<12x8xf32>, vector<12x8xf32>, vector<12x12xf32> -> vector<12x12xf32>
    %cst_60 = arith.constant 0.353553385 : f32
    %141 = vector.broadcast %cst_60 : f32 to vector<12x12xf32>
    %142 = arith.mulf %140, %141 : vector<12x12xf32>
    %143 = vector.broadcast %136 : vector<1x12xf32> to vector<12x12xf32>
    %144 = arith.addf %142, %143 : vector<12x12xf32>
    %cst_61 = arith.constant dense<0xFF800000> : vector<12xf32>
    %145 = vector.multi_reduction <maximumf>, %144, %cst_61 [1] : vector<12x12xf32> to vector<12xf32>
    %146 = vector.shape_cast %145 : vector<12xf32> to vector<12x1xf32>
    %147 = vector.broadcast %146 : vector<12x1xf32> to vector<12x12xf32>
    %148 = arith.subf %144, %147 : vector<12x12xf32>
    %149 = math.exp %148 : vector<12x12xf32>
    %cst_62 = arith.constant dense<0.000000e+00> : vector<12xf32>
    %150 = vector.multi_reduction <add>, %149, %cst_62 [1] : vector<12x12xf32> to vector<12xf32>
    %151 = vector.shape_cast %150 : vector<12xf32> to vector<12x1xf32>
    %152 = tpu.reciprocal %151 {approx = true} : vector<12x1xf32> -> vector<12x1xf32>
    %153 = vector.broadcast %152 : vector<12x1xf32> to vector<12x12xf32>
    %154 = arith.mulf %149, %153 : vector<12x12xf32>
    %cst_63 = arith.constant dense<0.000000e+00> : vector<12x8xf32>
    %155 = tpu.matmul %154, %139, %cst_63 {dimension_numbers = #tpu.dot_dimension_numbers<[1], [0], [0], [1], [0, 0, 1, 1], [], []>} : vector<12x12xf32>, vector<12x8xf32>, vector<12x8xf32> -> vector<12x8xf32>
    %c12_64 = arith.constant 12 : index
    %c0_65 = arith.constant 0 : index
    %156 = vector.load %arg25[%c12_64, %c0_65] : memref<24x32xf32, #tpu.memory_space<vmem>>, vector<12x8xf32>
    tpu.vector_store %arg25[%c12_64, %c0_65], %155 {strides = array<i32>} : memref<24x32xf32, #tpu.memory_space<vmem>>, vector<12x8xf32>,
    %157 = vector.extract_strided_slice %52 {offsets = [12, 8], sizes = [12, 8], strides = [1, 1]} : vector<24x32xf32> to vector<12x8xf32>
    %158 = vector.extract_strided_slice %53 {offsets = [12, 8], sizes = [12, 8], strides = [1, 1]} : vector<24x32xf32> to vector<12x8xf32>
    %159 = vector.extract_strided_slice %54 {offsets = [12, 8], sizes = [12, 8], strides = [1, 1]} : vector<24x32xf32> to vector<12x8xf32>
    %cst_66 = arith.constant dense<0.000000e+00> : vector<12x12xf32>
    %160 = tpu.matmul %157, %158, %cst_66 {dimension_numbers = #tpu.dot_dimension_numbers<[1], [1], [0], [0], [0, 0, 1, 0], [], []>} : vector<12x8xf32>, vector<12x8xf32>, vector<12x12xf32> -> vector<12x12xf32>
    %cst_67 = arith.constant 0.353553385 : f32
    %161 = vector.broadcast %cst_67 : f32 to vector<12x12xf32>
    %162 = arith.mulf %160, %161 : vector<12x12xf32>
    %163 = vector.broadcast %136 : vector<1x12xf32> to vector<12x12xf32>
    %164 = arith.addf %162, %163 : vector<12x12xf32>
    %cst_68 = arith.constant dense<0xFF800000> : vector<12xf32>
    %165 = vector.multi_reduction <maximumf>, %164, %cst_68 [1] : vector<12x12xf32> to vector<12xf32>
    %166 = vector.shape_cast %165 : vector<12xf32> to vector<12x1xf32>
    %167 = vector.broadcast %166 : vector<12x1xf32> to vector<12x12xf32>
    %168 = arith.subf %164, %167 : vector<12x12xf32>
    %169 = math.exp %168 : vector<12x12xf32>
    %cst_69 = arith.constant dense<0.000000e+00> : vector<12xf32>
    %170 = vector.multi_reduction <add>, %169, %cst_69 [1] : vector<12x12xf32> to vector<12xf32>
    %171 = vector.shape_cast %170 : vector<12xf32> to vector<12x1xf32>
    %172 = tpu.reciprocal %171 {approx = true} : vector<12x1xf32> -> vector<12x1xf32>
    %173 = vector.broadcast %172 : vector<12x1xf32> to vector<12x12xf32>
    %174 = arith.mulf %169, %173 : vector<12x12xf32>
    %cst_70 = arith.constant dense<0.000000e+00> : vector<12x8xf32>
    %175 = tpu.matmul %174, %159, %cst_70 {dimension_numbers = #tpu.dot_dimension_numbers<[1], [0], [0], [1], [0, 0, 1, 1], [], []>} : vector<12x12xf32>, vector<12x8xf32>, vector<12x8xf32> -> vector<12x8xf32>
    %c12_71 = arith.constant 12 : index
    %c8_72 = arith.constant 8 : index
    %176 = vector.load %arg25[%c12_71, %c8_72] : memref<24x32xf32, #tpu.memory_space<vmem>>, vector<12x8xf32>
    tpu.vector_store %arg25[%c12_71, %c8_72], %175 {strides = array<i32>} : memref<24x32xf32, #tpu.memory_space<vmem>>, vector<12x8xf32>,
    %177 = vector.extract_strided_slice %52 {offsets = [12, 16], sizes = [12, 8], strides = [1, 1]} : vector<24x32xf32> to vector<12x8xf32>
    %178 = vector.extract_strided_slice %53 {offsets = [12, 16], sizes = [12, 8], strides = [1, 1]} : vector<24x32xf32> to vector<12x8xf32>
    %179 = vector.extract_strided_slice %54 {offsets = [12, 16], sizes = [12, 8], strides = [1, 1]} : vector<24x32xf32> to vector<12x8xf32>
    %cst_73 = arith.constant dense<0.000000e+00> : vector<12x12xf32>
    %180 = tpu.matmul %177, %178, %cst_73 {dimension_numbers = #tpu.dot_dimension_numbers<[1], [1], [0], [0], [0, 0, 1, 0], [], []>} : vector<12x8xf32>, vector<12x8xf32>, vector<12x12xf32> -> vector<12x12xf32>
    %cst_74 = arith.constant 0.353553385 : f32
    %181 = vector.broadcast %cst_74 : f32 to vector<12x12xf32>
    %182 = arith.mulf %180, %181 : vector<12x12xf32>
    %183 = vector.broadcast %136 : vector<1x12xf32> to vector<12x12xf32>
    %184 = arith.addf %182, %183 : vector<12x12xf32>
    %cst_75 = arith.constant dense<0xFF800000> : vector<12xf32>
    %185 = vector.multi_reduction <maximumf>, %184, %cst_75 [1] : vector<12x12xf32> to vector<12xf32>
    %186 = vector.shape_cast %185 : vector<12xf32> to vector<12x1xf32>
    %187 = vector.broadcast %186 : vector<12x1xf32> to vector<12x12xf32>
    %188 = arith.subf %184, %187 : vector<12x12xf32>
    %189 = math.exp %188 : vector<12x12xf32>
    %cst_76 = arith.constant dense<0.000000e+00> : vector<12xf32>
    %190 = vector.multi_reduction <add>, %189, %cst_76 [1] : vector<12x12xf32> to vector<12xf32>
    %191 = vector.shape_cast %190 : vector<12xf32> to vector<12x1xf32>
    %192 = tpu.reciprocal %191 {approx = true} : vector<12x1xf32> -> vector<12x1xf32>
    %193 = vector.broadcast %192 : vector<12x1xf32> to vector<12x12xf32>
    %194 = arith.mulf %189, %193 : vector<12x12xf32>
    %cst_77 = arith.constant dense<0.000000e+00> : vector<12x8xf32>
    %195 = tpu.matmul %194, %179, %cst_77 {dimension_numbers = #tpu.dot_dimension_numbers<[1], [0], [0], [1], [0, 0, 1, 1], [], []>} : vector<12x12xf32>, vector<12x8xf32>, vector<12x8xf32> -> vector<12x8xf32>
    %c12_78 = arith.constant 12 : index
    %c16_79 = arith.constant 16 : index
    %196 = vector.load %arg25[%c12_78, %c16_79] : memref<24x32xf32, #tpu.memory_space<vmem>>, vector<12x8xf32>
    tpu.vector_store %arg25[%c12_78, %c16_79], %195 {strides = array<i32>} : memref<24x32xf32, #tpu.memory_space<vmem>>, vector<12x8xf32>,
    %197 = vector.extract_strided_slice %52 {offsets = [12, 24], sizes = [12, 8], strides = [1, 1]} : vector<24x32xf32> to vector<12x8xf32>
    %198 = vector.extract_strided_slice %53 {offsets = [12, 24], sizes = [12, 8], strides = [1, 1]} : vector<24x32xf32> to vector<12x8xf32>
    %199 = vector.extract_strided_slice %54 {offsets = [12, 24], sizes = [12, 8], strides = [1, 1]} : vector<24x32xf32> to vector<12x8xf32>
    %cst_80 = arith.constant dense<0.000000e+00> : vector<12x12xf32>
    %200 = tpu.matmul %197, %198, %cst_80 {dimension_numbers = #tpu.dot_dimension_numbers<[1], [1], [0], [0], [0, 0, 1, 0], [], []>} : vector<12x8xf32>, vector<12x8xf32>, vector<12x12xf32> -> vector<12x12xf32>
    %cst_81 = arith.constant 0.353553385 : f32
    %201 = vector.broadcast %cst_81 : f32 to vector<12x12xf32>
    %202 = arith.mulf %200, %201 : vector<12x12xf32>
    %203 = vector.broadcast %136 : vector<1x12xf32> to vector<12x12xf32>
    %204 = arith.addf %202, %203 : vector<12x12xf32>
    %cst_82 = arith.constant dense<0xFF800000> : vector<12xf32>
    %205 = vector.multi_reduction <maximumf>, %204, %cst_82 [1] : vector<12x12xf32> to vector<12xf32>
    %206 = vector.shape_cast %205 : vector<12xf32> to vector<12x1xf32>
    %207 = vector.broadcast %206 : vector<12x1xf32> to vector<12x12xf32>
    %208 = arith.subf %204, %207 : vector<12x12xf32>
    %209 = math.exp %208 : vector<12x12xf32>
    %cst_83 = arith.constant dense<0.000000e+00> : vector<12xf32>
    %210 = vector.multi_reduction <add>, %209, %cst_83 [1] : vector<12x12xf32> to vector<12xf32>
    %211 = vector.shape_cast %210 : vector<12xf32> to vector<12x1xf32>
    %212 = tpu.reciprocal %211 {approx = true} : vector<12x1xf32> -> vector<12x1xf32>
    %213 = vector.broadcast %212 : vector<12x1xf32> to vector<12x12xf32>
    %214 = arith.mulf %209, %213 : vector<12x12xf32>
    %cst_84 = arith.constant dense<0.000000e+00> : vector<12x8xf32>
    %215 = tpu.matmul %214, %199, %cst_84 {dimension_numbers = #tpu.dot_dimension_numbers<[1], [0], [0], [1], [0, 0, 1, 1], [], []>} : vector<12x12xf32>, vector<12x8xf32>, vector<12x8xf32> -> vector<12x8xf32>
    %c12_85 = arith.constant 12 : index
    %c24_86 = arith.constant 24 : index
    %216 = vector.load %arg25[%c12_85, %c24_86] : memref<24x32xf32, #tpu.memory_space<vmem>>, vector<12x8xf32>
    tpu.vector_store %arg25[%c12_85, %c24_86], %215 {strides = array<i32>} : memref<24x32xf32, #tpu.memory_space<vmem>>, vector<12x8xf32>,
    %c0_87 = arith.constant 0 : index
    %c0_88 = arith.constant 0 : index
    %217 = vector.load %arg25[%c0_87, %c0_88] : memref<24x32xf32, #tpu.memory_space<vmem>>, vector<24x32xf32>
    %c0_89 = arith.constant 0 : index
    %c0_90 = arith.constant 0 : index
    %c0_91 = arith.constant 0 : index
    %218 = vector.load %arg9[%c0_89, %c0_90, %c0_91] : memref<2x32x32xf32, #tpu.memory_space<vmem>>, vector<1x32x32xf32>
    %219 = vector.shape_cast %218 : vector<1x32x32xf32> to vector<32x32xf32>
    %cst_92 = arith.constant dense<0.000000e+00> : vector<24x32xf32>
    %220 = tpu.matmul %217, %219, %cst_92 {dimension_numbers = #tpu.dot_dimension_numbers<[1], [0], [0], [1], [0, 0, 1, 1], [], []>} : vector<24x32xf32>, vector<32x32xf32>, vector<24x32xf32> -> vector<24x32xf32>
    %c0_93 = arith.constant 0 : index
    %c0_94 = arith.constant 0 : index
    %c0_95 = arith.constant 0 : index
    %221 = vector.load %arg10[%c0_93, %c0_94, %c0_95] : memref<2x1x32xf32, #tpu.memory_space<vmem>>, vector<1x1x32xf32>
    %222 = vector.shape_cast %221 : vector<1x1x32xf32> to vector<1x32xf32>
    %223 = vector.broadcast %222 : vector<1x32xf32> to vector<24x32xf32>
    %224 = arith.addf %220, %223 : vector<24x32xf32>
    %225 = arith.addf %224, %44 : vector<24x32xf32>
    %c0_96 = arith.constant 0 : index
    %c0_97 = arith.constant 0 : index
    %c0_98 = arith.constant 0 : index
    %226 = vector.load %arg11[%c0_96, %c0_97, %c0_98] : memref<2x1x32xf32, #tpu.memory_space<vmem>>, vector<1x1x32xf32>
    %227 = vector.shape_cast %226 : vector<1x1x32xf32> to vector<1x32xf32>
    %c0_99 = arith.constant 0 : index
    %c0_100 = arith.constant 0 : index
    %c0_101 = arith.constant 0 : index
    %228 = vector.load %arg12[%c0_99, %c0_100, %c0_101] : memref<2x1x32xf32, #tpu.memory_space<vmem>>, vector<1x1x32xf32>
    %229 = vector.shape_cast %228 : vector<1x1x32xf32> to vector<1x32xf32>
    %cst_102 = arith.constant dense<0.000000e+00> : vector<24xf32>
    %230 = vector.multi_reduction <add>, %225, %cst_102 [1] : vector<24x32xf32> to vector<24xf32>
    %231 = vector.shape_cast %230 : vector<24xf32> to vector<24x1xf32>
    %cst_103 = arith.constant 3.200000e+01 : f32
    %232 = vector.broadcast %cst_103 : f32 to vector<24x1xf32>
    %233 = arith.divf %231, %232 : vector<24x1xf32>
    %234 = vector.broadcast %233 : vector<24x1xf32> to vector<24x32xf32>
    %235 = arith.subf %225, %234 : vector<24x32xf32>
    %236 = arith.mulf %235, %235 : vector<24x32xf32>
    %cst_104 = arith.constant dense<0.000000e+00> : vector<24xf32>
    %237 = vector.multi_reduction <add>, %236, %cst_104 [1] : vector<24x32xf32> to vector<24xf32>
    %238 = vector.shape_cast %237 : vector<24xf32> to vector<24x1xf32>
    %cst_105 = arith.constant 3.200000e+01 : f32
    %239 = vector.broadcast %cst_105 : f32 to vector<24x1xf32>
    %240 = arith.divf %238, %239 : vector<24x1xf32>
    %241 = vector.broadcast %233 : vector<24x1xf32> to vector<24x32xf32>
    %242 = arith.subf %225, %241 : vector<24x32xf32>
    %cst_106 = arith.constant 9.99999996E-13 : f32
    %243 = vector.broadcast %cst_106 : f32 to vector<24x1xf32>
    %244 = arith.addf %240, %243 : vector<24x1xf32>
    %245 = math.rsqrt %244 : vector<24x1xf32>
    %246 = vector.broadcast %245 : vector<24x1xf32> to vector<24x32xf32>
    %247 = arith.mulf %242, %246 : vector<24x32xf32>
    %248 = vector.broadcast %227 : vector<1x32xf32> to vector<24x32xf32>
    %249 = arith.mulf %247, %248 : vector<24x32xf32>
    %250 = vector.broadcast %229 : vector<1x32xf32> to vector<24x32xf32>
    %251 = arith.addf %249, %250 : vector<24x32xf32>
    %c0_107 = arith.constant 0 : index
    %c0_108 = arith.constant 0 : index
    %c0_109 = arith.constant 0 : index
    %252 = vector.load %arg13[%c0_107, %c0_108, %c0_109] : memref<2x32x64xf32, #tpu.memory_space<vmem>>, vector<1x32x64xf32>
    %253 = vector.shape_cast %252 : vector<1x32x64xf32> to vector<32x64xf32>
    %cst_110 = arith.constant dense<0.000000e+00> : vector<24x64xf32>
    %254 = tpu.matmul %251, %253, %cst_110 {dimension_numbers = #tpu.dot_dimension_numbers<[1], [0], [0], [1], [0, 0, 1, 1], [], []>} : vector<24x32xf32>, vector<32x64xf32>, vector<24x64xf32> -> vector<24x64xf32>
    %c0_111 = arith.constant 0 : index
    %c0_112 = arith.constant 0 : index
    %c0_113 = arith.constant 0 : index
    %255 = vector.load %arg14[%c0_111, %c0_112, %c0_113] : memref<2x1x64xf32, #tpu.memory_space<vmem>>, vector<1x1x64xf32>
    %256 = vector.shape_cast %255 : vector<1x1x64xf32> to vector<1x64xf32>
    %257 = vector.broadcast %256 : vector<1x64xf32> to vector<24x64xf32>
    %258 = arith.addf %254, %257 : vector<24x64xf32>
    %cst_114 = arith.constant 5.000000e-01 : f32
    %259 = vector.broadcast %cst_114 : f32 to vector<24x64xf32>
    %260 = arith.mulf %259, %258 : vector<24x64xf32>
    %cst_115 = arith.constant 0.707106769 : f32
    %261 = vector.broadcast %cst_115 : f32 to vector<24x64xf32>
    %262 = arith.mulf %258, %261 : vector<24x64xf32>
    %263 = math.erf %262 : vector<24x64xf32>
    %cst_116 = arith.constant 1.000000e+00 : f32
    %264 = vector.broadcast %cst_116 : f32 to vector<24x64xf32>
    %265 = arith.addf %264, %263 : vector<24x64xf32>
    %266 = arith.mulf %260, %265 : vector<24x64xf32>
    %c0_117 = arith.constant 0 : index
    %c0_118 = arith.constant 0 : index
    %c0_119 = arith.constant 0 : index
    %267 = vector.load %arg15[%c0_117, %c0_118, %c0_119] : memref<2x64x32xf32, #tpu.memory_space<vmem>>, vector<1x64x32xf32>
    %268 = vector.shape_cast %267 : vector<1x64x32xf32> to vector<64x32xf32>
    %cst_120 = arith.constant dense<0.000000e+00> : vector<24x32xf32>
    %269 = tpu.matmul %266, %268, %cst_120 {dimension_numbers = #tpu.dot_dimension_numbers<[1], [0], [0], [1], [0, 0, 1, 1], [], []>} : vector<24x64xf32>, vector<64x32xf32>, vector<24x32xf32> -> vector<24x32xf32>
    %c0_121 = arith.constant 0 : index
    %c0_122 = arith.constant 0 : index
    %c0_123 = arith.constant 0 : index
    %270 = vector.load %arg16[%c0_121, %c0_122, %c0_123] : memref<2x1x32xf32, #tpu.memory_space<vmem>>, vector<1x1x32xf32>
    %271 = vector.shape_cast %270 : vector<1x1x32xf32> to vector<1x32xf32>
    %272 = vector.broadcast %271 : vector<1x32xf32> to vector<24x32xf32>
    %273 = arith.addf %269, %272 : vector<24x32xf32>
    %274 = arith.addf %273, %251 : vector<24x32xf32>
    %c0_124 = arith.constant 0 : index
    %c0_125 = arith.constant 0 : index
    %c0_126 = arith.constant 0 : index
    %275 = vector.load %arg17[%c0_124, %c0_125, %c0_126] : memref<2x1x32xf32, #tpu.memory_space<vmem>>, vector<1x1x32xf32>
    %276 = vector.shape_cast %275 : vector<1x1x32xf32> to vector<1x32xf32>
    %c0_127 = arith.constant 0 : index
    %c0_128 = arith.constant 0 : index
    %c0_129 = arith.constant 0 : index
    %277 = vector.load %arg18[%c0_127, %c0_128, %c0_129] : memref<2x1x32xf32, #tpu.memory_space<vmem>>, vector<1x1x32xf32>
    %278 = vector.shape_cast %277 : vector<1x1x32xf32> to vector<1x32xf32>
    %cst_130 = arith.constant dense<0.000000e+00> : vector<24xf32>
    %279 = vector.multi_reduction <add>, %274, %cst_130 [1] : vector<24x32xf32> to vector<24xf32>
    %280 = vector.shape_cast %279 : vector<24xf32> to vector<24x1xf32>
    %cst_131 = arith.constant 3.200000e+01 : f32
    %281 = vector.broadcast %cst_131 : f32 to vector<24x1xf32>
    %282 = arith.divf %280, %281 : vector<24x1xf32>
    %283 = vector.broadcast %282 : vector<24x1xf32> to vector<24x32xf32>
    %284 = arith.subf %274, %283 : vector<24x32xf32>
    %285 = arith.mulf %284, %284 : vector<24x32xf32>
    %cst_132 = arith.constant dense<0.000000e+00> : vector<24xf32>
    %286 = vector.multi_reduction <add>, %285, %cst_132 [1] : vector<24x32xf32> to vector<24xf32>
    %287 = vector.shape_cast %286 : vector<24xf32> to vector<24x1xf32>
    %cst_133 = arith.constant 3.200000e+01 : f32
    %288 = vector.broadcast %cst_133 : f32 to vector<24x1xf32>
    %289 = arith.divf %287, %288 : vector<24x1xf32>
    %290 = vector.broadcast %282 : vector<24x1xf32> to vector<24x32xf32>
    %291 = arith.subf %274, %290 : vector<24x32xf32>
    %cst_134 = arith.constant 9.99999996E-13 : f32
    %292 = vector.broadcast %cst_134 : f32 to vector<24x1xf32>
    %293 = arith.addf %289, %292 : vector<24x1xf32>
    %294 = math.rsqrt %293 : vector<24x1xf32>
    %295 = vector.broadcast %294 : vector<24x1xf32> to vector<24x32xf32>
    %296 = arith.mulf %291, %295 : vector<24x32xf32>
    %297 = vector.broadcast %276 : vector<1x32xf32> to vector<24x32xf32>
    %298 = arith.mulf %296, %297 : vector<24x32xf32>
    %299 = vector.broadcast %278 : vector<1x32xf32> to vector<24x32xf32>
    %300 = arith.addf %298, %299 : vector<24x32xf32>
    %c0_135 = arith.constant 0 : index
    %c0_136 = arith.constant 0 : index
    %301 = vector.load %arg24[%c0_135, %c0_136] : memref<24x32xf32, #tpu.memory_space<vmem>>, vector<24x32xf32>
    tpu.vector_store %arg24[%c0_135, %c0_136], %300 {strides = array<i32>} : memref<24x32xf32, #tpu.memory_space<vmem>>, vector<24x32xf32>,
    %302 = vector.extract_strided_slice %30 {offsets = [4, 0], sizes = [4, 32], strides = [1, 1]} : vector<8x32xf32> to vector<4x32xf32>
    %c1_137 = arith.constant 1 : index
    %c0_138 = arith.constant 0 : index
    %303 = vector.load %arg24[%c1_137, %c0_138] : memref<24x32xf32, #tpu.memory_space<vmem>>, vector<4x32xf32>
    tpu.vector_store %arg24[%c1_137, %c0_138], %302 {strides = array<i32>} : memref<24x32xf32, #tpu.memory_space<vmem>>, vector<4x32xf32>,
    %304 = vector.extract_strided_slice %30 {offsets = [4, 0], sizes = [4, 32], strides = [1, 1]} : vector<8x32xf32> to vector<4x32xf32>
    %c13_139 = arith.constant 13 : index
    %c0_140 = arith.constant 0 : index
    %305 = vector.load %arg24[%c13_139, %c0_140] : memref<24x32xf32, #tpu.memory_space<vmem>>, vector<4x32xf32>
    tpu.vector_store %arg24[%c13_139, %c0_140], %304 {strides = array<i32>} : memref<24x32xf32, #tpu.memory_space<vmem>>, vector<4x32xf32>,
    %c0_141 = arith.constant 0 : index
    %c0_142 = arith.constant 0 : index
    %306 = vector.load %arg24[%c0_141, %c0_142] : memref<24x32xf32, #tpu.memory_space<vmem>>, vector<24x32xf32>
    %c1_143 = arith.constant 1 : index
    %c0_144 = arith.constant 0 : index
    %c0_145 = arith.constant 0 : index
    %307 = vector.load %arg7[%c1_143, %c0_144, %c0_145] : memref<2x32x96xf32, #tpu.memory_space<vmem>>, vector<1x32x96xf32>
    %308 = vector.shape_cast %307 : vector<1x32x96xf32> to vector<32x96xf32>
    %cst_146 = arith.constant dense<0.000000e+00> : vector<24x96xf32>
    %309 = tpu.matmul %306, %308, %cst_146 {dimension_numbers = #tpu.dot_dimension_numbers<[1], [0], [0], [1], [0, 0, 1, 1], [], []>} : vector<24x32xf32>, vector<32x96xf32>, vector<24x96xf32> -> vector<24x96xf32>
    %c1_147 = arith.constant 1 : index
    %c0_148 = arith.constant 0 : index
    %c0_149 = arith.constant 0 : index
    %310 = vector.load %arg8[%c1_147, %c0_148, %c0_149] : memref<2x1x96xf32, #tpu.memory_space<vmem>>, vector<1x1x96xf32>
    %311 = vector.shape_cast %310 : vector<1x1x96xf32> to vector<1x96xf32>
    %312 = vector.broadcast %311 : vector<1x96xf32> to vector<24x96xf32>
    %313 = arith.addf %309, %312 : vector<24x96xf32>
    %314 = vector.extract_strided_slice %313 {offsets = [0, 0], sizes = [24, 32], strides = [1, 1]} : vector<24x96xf32> to vector<24x32xf32>
    %315 = vector.extract_strided_slice %313 {offsets = [0, 32], sizes = [24, 32], strides = [1, 1]} : vector<24x96xf32> to vector<24x32xf32>
    %316 = vector.extract_strided_slice %313 {offsets = [0, 64], sizes = [24, 32], strides = [1, 1]} : vector<24x96xf32> to vector<24x32xf32>
    %317 = vector.extract_strided_slice %43 {offsets = [0, 0], sizes = [1, 12], strides = [1, 1]} : vector<2x12xf32> to vector<1x12xf32>
    %318 = vector.extract_strided_slice %314 {offsets = [0, 0], sizes = [12, 8], strides = [1, 1]} : vector<24x32xf32> to vector<12x8xf32>
    %319 = vector.extract_strided_slice %315 {offsets = [0, 0], sizes = [12, 8], strides = [1, 1]} : vector<24x32xf32> to vector<12x8xf32>
    %320 = vector.extract_strided_slice %316 {offsets = [0, 0], sizes = [12, 8], strides = [1, 1]} : vector<24x32xf32> to vector<12x8xf32>
    %cst_150 = arith.constant dense<0.000000e+00> : vector<12x12xf32>
    %321 = tpu.matmul %318, %319, %cst_150 {dimension_numbers = #tpu.dot_dimension_numbers<[1], [1], [0], [0], [0, 0, 1, 0], [], []>} : vector<12x8xf32>, vector<12x8xf32>, vector<12x12xf32> -> vector<12x12xf32>
    %cst_151 = arith.constant 0.353553385 : f32
    %322 = vector.broadcast %cst_151 : f32 to vector<12x12xf32>
    %323 = arith.mulf %321, %322 : vector<12x12xf32>
    %324 = vector.broadcast %317 : vector<1x12xf32> to vector<12x12xf32>
    %325 = arith.addf %323, %324 : vector<12x12xf32>
    %cst_152 = arith.constant dense<0xFF800000> : vector<12xf32>
    %326 = vector.multi_reduction <maximumf>, %325, %cst_152 [1] : vector<12x12xf32> to vector<12xf32>
    %327 = vector.shape_cast %326 : vector<12xf32> to vector<12x1xf32>
    %328 = vector.broadcast %327 : vector<12x1xf32> to vector<12x12xf32>
    %329 = arith.subf %325, %328 : vector<12x12xf32>
    %330 = math.exp %329 : vector<12x12xf32>
    %cst_153 = arith.constant dense<0.000000e+00> : vector<12xf32>
    %331 = vector.multi_reduction <add>, %330, %cst_153 [1] : vector<12x12xf32> to vector<12xf32>
    %332 = vector.shape_cast %331 : vector<12xf32> to vector<12x1xf32>
    %333 = tpu.reciprocal %332 {approx = true} : vector<12x1xf32> -> vector<12x1xf32>
    %334 = vector.broadcast %333 : vector<12x1xf32> to vector<12x12xf32>
    %335 = arith.mulf %330, %334 : vector<12x12xf32>
    %cst_154 = arith.constant dense<0.000000e+00> : vector<12x8xf32>
    %336 = tpu.matmul %335, %320, %cst_154 {dimension_numbers = #tpu.dot_dimension_numbers<[1], [0], [0], [1], [0, 0, 1, 1], [], []>} : vector<12x12xf32>, vector<12x8xf32>, vector<12x8xf32> -> vector<12x8xf32>
    %c0_155 = arith.constant 0 : index
    %c0_156 = arith.constant 0 : index
    %337 = vector.load %arg25[%c0_155, %c0_156] : memref<24x32xf32, #tpu.memory_space<vmem>>, vector<12x8xf32>
    tpu.vector_store %arg25[%c0_155, %c0_156], %336 {strides = array<i32>} : memref<24x32xf32, #tpu.memory_space<vmem>>, vector<12x8xf32>,
    %338 = vector.extract_strided_slice %314 {offsets = [0, 8], sizes = [12, 8], strides = [1, 1]} : vector<24x32xf32> to vector<12x8xf32>
    %339 = vector.extract_strided_slice %315 {offsets = [0, 8], sizes = [12, 8], strides = [1, 1]} : vector<24x32xf32> to vector<12x8xf32>
    %340 = vector.extract_strided_slice %316 {offsets = [0, 8], sizes = [12, 8], strides = [1, 1]} : vector<24x32xf32> to vector<12x8xf32>
    %cst_157 = arith.constant dense<0.000000e+00> : vector<12x12xf32>
    %341 = tpu.matmul %338, %339, %cst_157 {dimension_numbers = #tpu.dot_dimension_numbers<[1], [1], [0], [0], [0, 0, 1, 0], [], []>} : vector<12x8xf32>, vector<12x8xf32>, vector<12x12xf32> -> vector<12x12xf32>
    %cst_158 = arith.constant 0.353553385 : f32
    %342 = vector.broadcast %cst_158 : f32 to vector<12x12xf32>
    %343 = arith.mulf %341, %342 : vector<12x12xf32>
    %344 = vector.broadcast %317 : vector<1x12xf32> to vector<12x12xf32>
    %345 = arith.addf %343, %344 : vector<12x12xf32>
    %cst_159 = arith.constant dense<0xFF800000> : vector<12xf32>
    %346 = vector.multi_reduction <maximumf>, %345, %cst_159 [1] : vector<12x12xf32> to vector<12xf32>
    %347 = vector.shape_cast %346 : vector<12xf32> to vector<12x1xf32>
    %348 = vector.broadcast %347 : vector<12x1xf32> to vector<12x12xf32>
    %349 = arith.subf %345, %348 : vector<12x12xf32>
    %350 = math.exp %349 : vector<12x12xf32>
    %cst_160 = arith.constant dense<0.000000e+00> : vector<12xf32>
    %351 = vector.multi_reduction <add>, %350, %cst_160 [1] : vector<12x12xf32> to vector<12xf32>
    %352 = vector.shape_cast %351 : vector<12xf32> to vector<12x1xf32>
    %353 = tpu.reciprocal %352 {approx = true} : vector<12x1xf32> -> vector<12x1xf32>
    %354 = vector.broadcast %353 : vector<12x1xf32> to vector<12x12xf32>
    %355 = arith.mulf %350, %354 : vector<12x12xf32>
    %cst_161 = arith.constant dense<0.000000e+00> : vector<12x8xf32>
    %356 = tpu.matmul %355, %340, %cst_161 {dimension_numbers = #tpu.dot_dimension_numbers<[1], [0], [0], [1], [0, 0, 1, 1], [], []>} : vector<12x12xf32>, vector<12x8xf32>, vector<12x8xf32> -> vector<12x8xf32>
    %c0_162 = arith.constant 0 : index
    %c8_163 = arith.constant 8 : index
    %357 = vector.load %arg25[%c0_162, %c8_163] : memref<24x32xf32, #tpu.memory_space<vmem>>, vector<12x8xf32>
    tpu.vector_store %arg25[%c0_162, %c8_163], %356 {strides = array<i32>} : memref<24x32xf32, #tpu.memory_space<vmem>>, vector<12x8xf32>,
    %358 = vector.extract_strided_slice %314 {offsets = [0, 16], sizes = [12, 8], strides = [1, 1]} : vector<24x32xf32> to vector<12x8xf32>
    %359 = vector.extract_strided_slice %315 {offsets = [0, 16], sizes = [12, 8], strides = [1, 1]} : vector<24x32xf32> to vector<12x8xf32>
    %360 = vector.extract_strided_slice %316 {offsets = [0, 16], sizes = [12, 8], strides = [1, 1]} : vector<24x32xf32> to vector<12x8xf32>
    %cst_164 = arith.constant dense<0.000000e+00> : vector<12x12xf32>
    %361 = tpu.matmul %358, %359, %cst_164 {dimension_numbers = #tpu.dot_dimension_numbers<[1], [1], [0], [0], [0, 0, 1, 0], [], []>} : vector<12x8xf32>, vector<12x8xf32>, vector<12x12xf32> -> vector<12x12xf32>
    %cst_165 = arith.constant 0.353553385 : f32
    %362 = vector.broadcast %cst_165 : f32 to vector<12x12xf32>
    %363 = arith.mulf %361, %362 : vector<12x12xf32>
    %364 = vector.broadcast %317 : vector<1x12xf32> to vector<12x12xf32>
    %365 = arith.addf %363, %364 : vector<12x12xf32>
    %cst_166 = arith.constant dense<0xFF800000> : vector<12xf32>
    %366 = vector.multi_reduction <maximumf>, %365, %cst_166 [1] : vector<12x12xf32> to vector<12xf32>
    %367 = vector.shape_cast %366 : vector<12xf32> to vector<12x1xf32>
    %368 = vector.broadcast %367 : vector<12x1xf32> to vector<12x12xf32>
    %369 = arith.subf %365, %368 : vector<12x12xf32>
    %370 = math.exp %369 : vector<12x12xf32>
    %cst_167 = arith.constant dense<0.000000e+00> : vector<12xf32>
    %371 = vector.multi_reduction <add>, %370, %cst_167 [1] : vector<12x12xf32> to vector<12xf32>
    %372 = vector.shape_cast %371 : vector<12xf32> to vector<12x1xf32>
    %373 = tpu.reciprocal %372 {approx = true} : vector<12x1xf32> -> vector<12x1xf32>
    %374 = vector.broadcast %373 : vector<12x1xf32> to vector<12x12xf32>
    %375 = arith.mulf %370, %374 : vector<12x12xf32>
    %cst_168 = arith.constant dense<0.000000e+00> : vector<12x8xf32>
    %376 = tpu.matmul %375, %360, %cst_168 {dimension_numbers = #tpu.dot_dimension_numbers<[1], [0], [0], [1], [0, 0, 1, 1], [], []>} : vector<12x12xf32>, vector<12x8xf32>, vector<12x8xf32> -> vector<12x8xf32>
    %c0_169 = arith.constant 0 : index
    %c16_170 = arith.constant 16 : index
    %377 = vector.load %arg25[%c0_169, %c16_170] : memref<24x32xf32, #tpu.memory_space<vmem>>, vector<12x8xf32>
    tpu.vector_store %arg25[%c0_169, %c16_170], %376 {strides = array<i32>} : memref<24x32xf32, #tpu.memory_space<vmem>>, vector<12x8xf32>,
    %378 = vector.extract_strided_slice %314 {offsets = [0, 24], sizes = [12, 8], strides = [1, 1]} : vector<24x32xf32> to vector<12x8xf32>
    %379 = vector.extract_strided_slice %315 {offsets = [0, 24], sizes = [12, 8], strides = [1, 1]} : vector<24x32xf32> to vector<12x8xf32>
    %380 = vector.extract_strided_slice %316 {offsets = [0, 24], sizes = [12, 8], strides = [1, 1]} : vector<24x32xf32> to vector<12x8xf32>
    %cst_171 = arith.constant dense<0.000000e+00> : vector<12x12xf32>
    %381 = tpu.matmul %378, %379, %cst_171 {dimension_numbers = #tpu.dot_dimension_numbers<[1], [1], [0], [0], [0, 0, 1, 0], [], []>} : vector<12x8xf32>, vector<12x8xf32>, vector<12x12xf32> -> vector<12x12xf32>
    %cst_172 = arith.constant 0.353553385 : f32
    %382 = vector.broadcast %cst_172 : f32 to vector<12x12xf32>
    %383 = arith.mulf %381, %382 : vector<12x12xf32>
    %384 = vector.broadcast %317 : vector<1x12xf32> to vector<12x12xf32>
    %385 = arith.addf %383, %384 : vector<12x12xf32>
    %cst_173 = arith.constant dense<0xFF800000> : vector<12xf32>
    %386 = vector.multi_reduction <maximumf>, %385, %cst_173 [1] : vector<12x12xf32> to vector<12xf32>
    %387 = vector.shape_cast %386 : vector<12xf32> to vector<12x1xf32>
    %388 = vector.broadcast %387 : vector<12x1xf32> to vector<12x12xf32>
    %389 = arith.subf %385, %388 : vector<12x12xf32>
    %390 = math.exp %389 : vector<12x12xf32>
    %cst_174 = arith.constant dense<0.000000e+00> : vector<12xf32>
    %391 = vector.multi_reduction <add>, %390, %cst_174 [1] : vector<12x12xf32> to vector<12xf32>
    %392 = vector.shape_cast %391 : vector<12xf32> to vector<12x1xf32>
    %393 = tpu.reciprocal %392 {approx = true} : vector<12x1xf32> -> vector<12x1xf32>
    %394 = vector.broadcast %393 : vector<12x1xf32> to vector<12x12xf32>
    %395 = arith.mulf %390, %394 : vector<12x12xf32>
    %cst_175 = arith.constant dense<0.000000e+00> : vector<12x8xf32>
    %396 = tpu.matmul %395, %380, %cst_175 {dimension_numbers = #tpu.dot_dimension_numbers<[1], [0], [0], [1], [0, 0, 1, 1], [], []>} : vector<12x12xf32>, vector<12x8xf32>, vector<12x8xf32> -> vector<12x8xf32>
    %c0_176 = arith.constant 0 : index
    %c24_177 = arith.constant 24 : index
    %397 = vector.load %arg25[%c0_176, %c24_177] : memref<24x32xf32, #tpu.memory_space<vmem>>, vector<12x8xf32>
    tpu.vector_store %arg25[%c0_176, %c24_177], %396 {strides = array<i32>} : memref<24x32xf32, #tpu.memory_space<vmem>>, vector<12x8xf32>,
    %398 = vector.extract_strided_slice %43 {offsets = [1, 0], sizes = [1, 12], strides = [1, 1]} : vector<2x12xf32> to vector<1x12xf32>
    %399 = vector.extract_strided_slice %314 {offsets = [12, 0], sizes = [12, 8], strides = [1, 1]} : vector<24x32xf32> to vector<12x8xf32>
    %400 = vector.extract_strided_slice %315 {offsets = [12, 0], sizes = [12, 8], strides = [1, 1]} : vector<24x32xf32> to vector<12x8xf32>
    %401 = vector.extract_strided_slice %316 {offsets = [12, 0], sizes = [12, 8], strides = [1, 1]} : vector<24x32xf32> to vector<12x8xf32>
    %cst_178 = arith.constant dense<0.000000e+00> : vector<12x12xf32>
    %402 = tpu.matmul %399, %400, %cst_178 {dimension_numbers = #tpu.dot_dimension_numbers<[1], [1], [0], [0], [0, 0, 1, 0], [], []>} : vector<12x8xf32>, vector<12x8xf32>, vector<12x12xf32> -> vector<12x12xf32>
    %cst_179 = arith.constant 0.353553385 : f32
    %403 = vector.broadcast %cst_179 : f32 to vector<12x12xf32>
    %404 = arith.mulf %402, %403 : vector<12x12xf32>
    %405 = vector.broadcast %398 : vector<1x12xf32> to vector<12x12xf32>
    %406 = arith.addf %404, %405 : vector<12x12xf32>
    %cst_180 = arith.constant dense<0xFF800000> : vector<12xf32>
    %407 = vector.multi_reduction <maximumf>, %406, %cst_180 [1] : vector<12x12xf32> to vector<12xf32>
    %408 = vector.shape_cast %407 : vector<12xf32> to vector<12x1xf32>
    %409 = vector.broadcast %408 : vector<12x1xf32> to vector<12x12xf32>
    %410 = arith.subf %406, %409 : vector<12x12xf32>
    %411 = math.exp %410 : vector<12x12xf32>
    %cst_181 = arith.constant dense<0.000000e+00> : vector<12xf32>
    %412 = vector.multi_reduction <add>, %411, %cst_181 [1] : vector<12x12xf32> to vector<12xf32>
    %413 = vector.shape_cast %412 : vector<12xf32> to vector<12x1xf32>
    %414 = tpu.reciprocal %413 {approx = true} : vector<12x1xf32> -> vector<12x1xf32>
    %415 = vector.broadcast %414 : vector<12x1xf32> to vector<12x12xf32>
    %416 = arith.mulf %411, %415 : vector<12x12xf32>
    %cst_182 = arith.constant dense<0.000000e+00> : vector<12x8xf32>
    %417 = tpu.matmul %416, %401, %cst_182 {dimension_numbers = #tpu.dot_dimension_numbers<[1], [0], [0], [1], [0, 0, 1, 1], [], []>} : vector<12x12xf32>, vector<12x8xf32>, vector<12x8xf32> -> vector<12x8xf32>
    %c12_183 = arith.constant 12 : index
    %c0_184 = arith.constant 0 : index
    %418 = vector.load %arg25[%c12_183, %c0_184] : memref<24x32xf32, #tpu.memory_space<vmem>>, vector<12x8xf32>
    tpu.vector_store %arg25[%c12_183, %c0_184], %417 {strides = array<i32>} : memref<24x32xf32, #tpu.memory_space<vmem>>, vector<12x8xf32>,
    %419 = vector.extract_strided_slice %314 {offsets = [12, 8], sizes = [12, 8], strides = [1, 1]} : vector<24x32xf32> to vector<12x8xf32>
    %420 = vector.extract_strided_slice %315 {offsets = [12, 8], sizes = [12, 8], strides = [1, 1]} : vector<24x32xf32> to vector<12x8xf32>
    %421 = vector.extract_strided_slice %316 {offsets = [12, 8], sizes = [12, 8], strides = [1, 1]} : vector<24x32xf32> to vector<12x8xf32>
    %cst_185 = arith.constant dense<0.000000e+00> : vector<12x12xf32>
    %422 = tpu.matmul %419, %420, %cst_185 {dimension_numbers = #tpu.dot_dimension_numbers<[1], [1], [0], [0], [0, 0, 1, 0], [], []>} : vector<12x8xf32>, vector<12x8xf32>, vector<12x12xf32> -> vector<12x12xf32>
    %cst_186 = arith.constant 0.353553385 : f32
    %423 = vector.broadcast %cst_186 : f32 to vector<12x12xf32>
    %424 = arith.mulf %422, %423 : vector<12x12xf32>
    %425 = vector.broadcast %398 : vector<1x12xf32> to vector<12x12xf32>
    %426 = arith.addf %424, %425 : vector<12x12xf32>
    %cst_187 = arith.constant dense<0xFF800000> : vector<12xf32>
    %427 = vector.multi_reduction <maximumf>, %426, %cst_187 [1] : vector<12x12xf32> to vector<12xf32>
    %428 = vector.shape_cast %427 : vector<12xf32> to vector<12x1xf32>
    %429 = vector.broadcast %428 : vector<12x1xf32> to vector<12x12xf32>
    %430 = arith.subf %426, %429 : vector<12x12xf32>
    %431 = math.exp %430 : vector<12x12xf32>
    %cst_188 = arith.constant dense<0.000000e+00> : vector<12xf32>
    %432 = vector.multi_reduction <add>, %431, %cst_188 [1] : vector<12x12xf32> to vector<12xf32>
    %433 = vector.shape_cast %432 : vector<12xf32> to vector<12x1xf32>
    %434 = tpu.reciprocal %433 {approx = true} : vector<12x1xf32> -> vector<12x1xf32>
    %435 = vector.broadcast %434 : vector<12x1xf32> to vector<12x12xf32>
    %436 = arith.mulf %431, %435 : vector<12x12xf32>
    %cst_189 = arith.constant dense<0.000000e+00> : vector<12x8xf32>
    %437 = tpu.matmul %436, %421, %cst_189 {dimension_numbers = #tpu.dot_dimension_numbers<[1], [0], [0], [1], [0, 0, 1, 1], [], []>} : vector<12x12xf32>, vector<12x8xf32>, vector<12x8xf32> -> vector<12x8xf32>
    %c12_190 = arith.constant 12 : index
    %c8_191 = arith.constant 8 : index
    %438 = vector.load %arg25[%c12_190, %c8_191] : memref<24x32xf32, #tpu.memory_space<vmem>>, vector<12x8xf32>
    tpu.vector_store %arg25[%c12_190, %c8_191], %437 {strides = array<i32>} : memref<24x32xf32, #tpu.memory_space<vmem>>, vector<12x8xf32>,
    %439 = vector.extract_strided_slice %314 {offsets = [12, 16], sizes = [12, 8], strides = [1, 1]} : vector<24x32xf32> to vector<12x8xf32>
    %440 = vector.extract_strided_slice %315 {offsets = [12, 16], sizes = [12, 8], strides = [1, 1]} : vector<24x32xf32> to vector<12x8xf32>
    %441 = vector.extract_strided_slice %316 {offsets = [12, 16], sizes = [12, 8], strides = [1, 1]} : vector<24x32xf32> to vector<12x8xf32>
    %cst_192 = arith.constant dense<0.000000e+00> : vector<12x12xf32>
    %442 = tpu.matmul %439, %440, %cst_192 {dimension_numbers = #tpu.dot_dimension_numbers<[1], [1], [0], [0], [0, 0, 1, 0], [], []>} : vector<12x8xf32>, vector<12x8xf32>, vector<12x12xf32> -> vector<12x12xf32>
    %cst_193 = arith.constant 0.353553385 : f32
    %443 = vector.broadcast %cst_193 : f32 to vector<12x12xf32>
    %444 = arith.mulf %442, %443 : vector<12x12xf32>
    %445 = vector.broadcast %398 : vector<1x12xf32> to vector<12x12xf32>
    %446 = arith.addf %444, %445 : vector<12x12xf32>
    %cst_194 = arith.constant dense<0xFF800000> : vector<12xf32>
    %447 = vector.multi_reduction <maximumf>, %446, %cst_194 [1] : vector<12x12xf32> to vector<12xf32>
    %448 = vector.shape_cast %447 : vector<12xf32> to vector<12x1xf32>
    %449 = vector.broadcast %448 : vector<12x1xf32> to vector<12x12xf32>
    %450 = arith.subf %446, %449 : vector<12x12xf32>
    %451 = math.exp %450 : vector<12x12xf32>
    %cst_195 = arith.constant dense<0.000000e+00> : vector<12xf32>
    %452 = vector.multi_reduction <add>, %451, %cst_195 [1] : vector<12x12xf32> to vector<12xf32>
    %453 = vector.shape_cast %452 : vector<12xf32> to vector<12x1xf32>
    %454 = tpu.reciprocal %453 {approx = true} : vector<12x1xf32> -> vector<12x1xf32>
    %455 = vector.broadcast %454 : vector<12x1xf32> to vector<12x12xf32>
    %456 = arith.mulf %451, %455 : vector<12x12xf32>
    %cst_196 = arith.constant dense<0.000000e+00> : vector<12x8xf32>
    %457 = tpu.matmul %456, %441, %cst_196 {dimension_numbers = #tpu.dot_dimension_numbers<[1], [0], [0], [1], [0, 0, 1, 1], [], []>} : vector<12x12xf32>, vector<12x8xf32>, vector<12x8xf32> -> vector<12x8xf32>
    %c12_197 = arith.constant 12 : index
    %c16_198 = arith.constant 16 : index
    %458 = vector.load %arg25[%c12_197, %c16_198] : memref<24x32xf32, #tpu.memory_space<vmem>>, vector<12x8xf32>
    tpu.vector_store %arg25[%c12_197, %c16_198], %457 {strides = array<i32>} : memref<24x32xf32, #tpu.memory_space<vmem>>, vector<12x8xf32>,
    %459 = vector.extract_strided_slice %314 {offsets = [12, 24], sizes = [12, 8], strides = [1, 1]} : vector<24x32xf32> to vector<12x8xf32>
    %460 = vector.extract_strided_slice %315 {offsets = [12, 24], sizes = [12, 8], strides = [1, 1]} : vector<24x32xf32> to vector<12x8xf32>
    %461 = vector.extract_strided_slice %316 {offsets = [12, 24], sizes = [12, 8], strides = [1, 1]} : vector<24x32xf32> to vector<12x8xf32>
    %cst_199 = arith.constant dense<0.000000e+00> : vector<12x12xf32>
    %462 = tpu.matmul %459, %460, %cst_199 {dimension_numbers = #tpu.dot_dimension_numbers<[1], [1], [0], [0], [0, 0, 1, 0], [], []>} : vector<12x8xf32>, vector<12x8xf32>, vector<12x12xf32> -> vector<12x12xf32>
    %cst_200 = arith.constant 0.353553385 : f32
    %463 = vector.broadcast %cst_200 : f32 to vector<12x12xf32>
    %464 = arith.mulf %462, %463 : vector<12x12xf32>
    %465 = vector.broadcast %398 : vector<1x12xf32> to vector<12x12xf32>
    %466 = arith.addf %464, %465 : vector<12x12xf32>
    %cst_201 = arith.constant dense<0xFF800000> : vector<12xf32>
    %467 = vector.multi_reduction <maximumf>, %466, %cst_201 [1] : vector<12x12xf32> to vector<12xf32>
    %468 = vector.shape_cast %467 : vector<12xf32> to vector<12x1xf32>
    %469 = vector.broadcast %468 : vector<12x1xf32> to vector<12x12xf32>
    %470 = arith.subf %466, %469 : vector<12x12xf32>
    %471 = math.exp %470 : vector<12x12xf32>
    %cst_202 = arith.constant dense<0.000000e+00> : vector<12xf32>
    %472 = vector.multi_reduction <add>, %471, %cst_202 [1] : vector<12x12xf32> to vector<12xf32>
    %473 = vector.shape_cast %472 : vector<12xf32> to vector<12x1xf32>
    %474 = tpu.reciprocal %473 {approx = true} : vector<12x1xf32> -> vector<12x1xf32>
    %475 = vector.broadcast %474 : vector<12x1xf32> to vector<12x12xf32>
    %476 = arith.mulf %471, %475 : vector<12x12xf32>
    %cst_203 = arith.constant dense<0.000000e+00> : vector<12x8xf32>
    %477 = tpu.matmul %476, %461, %cst_203 {dimension_numbers = #tpu.dot_dimension_numbers<[1], [0], [0], [1], [0, 0, 1, 1], [], []>} : vector<12x12xf32>, vector<12x8xf32>, vector<12x8xf32> -> vector<12x8xf32>
    %c12_204 = arith.constant 12 : index
    %c24_205 = arith.constant 24 : index
    %478 = vector.load %arg25[%c12_204, %c24_205] : memref<24x32xf32, #tpu.memory_space<vmem>>, vector<12x8xf32>
    tpu.vector_store %arg25[%c12_204, %c24_205], %477 {strides = array<i32>} : memref<24x32xf32, #tpu.memory_space<vmem>>, vector<12x8xf32>,
    %c0_206 = arith.constant 0 : index
    %c0_207 = arith.constant 0 : index
    %479 = vector.load %arg25[%c0_206, %c0_207] : memref<24x32xf32, #tpu.memory_space<vmem>>, vector<24x32xf32>
    %c1_208 = arith.constant 1 : index
    %c0_209 = arith.constant 0 : index
    %c0_210 = arith.constant 0 : index
    %480 = vector.load %arg9[%c1_208, %c0_209, %c0_210] : memref<2x32x32xf32, #tpu.memory_space<vmem>>, vector<1x32x32xf32>
    %481 = vector.shape_cast %480 : vector<1x32x32xf32> to vector<32x32xf32>
    %cst_211 = arith.constant dense<0.000000e+00> : vector<24x32xf32>
    %482 = tpu.matmul %479, %481, %cst_211 {dimension_numbers = #tpu.dot_dimension_numbers<[1], [0], [0], [1], [0, 0, 1, 1], [], []>} : vector<24x32xf32>, vector<32x32xf32>, vector<24x32xf32> -> vector<24x32xf32>
    %c1_212 = arith.constant 1 : index
    %c0_213 = arith.constant 0 : index
    %c0_214 = arith.constant 0 : index
    %483 = vector.load %arg10[%c1_212, %c0_213, %c0_214] : memref<2x1x32xf32, #tpu.memory_space<vmem>>, vector<1x1x32xf32>
    %484 = vector.shape_cast %483 : vector<1x1x32xf32> to vector<1x32xf32>
    %485 = vector.broadcast %484 : vector<1x32xf32> to vector<24x32xf32>
    %486 = arith.addf %482, %485 : vector<24x32xf32>
    %487 = arith.addf %486, %306 : vector<24x32xf32>
    %c1_215 = arith.constant 1 : index
    %c0_216 = arith.constant 0 : index
    %c0_217 = arith.constant 0 : index
    %488 = vector.load %arg11[%c1_215, %c0_216, %c0_217] : memref<2x1x32xf32, #tpu.memory_space<vmem>>, vector<1x1x32xf32>
    %489 = vector.shape_cast %488 : vector<1x1x32xf32> to vector<1x32xf32>
    %c1_218 = arith.constant 1 : index
    %c0_219 = arith.constant 0 : index
    %c0_220 = arith.constant 0 : index
    %490 = vector.load %arg12[%c1_218, %c0_219, %c0_220] : memref<2x1x32xf32, #tpu.memory_space<vmem>>, vector<1x1x32xf32>
    %491 = vector.shape_cast %490 : vector<1x1x32xf32> to vector<1x32xf32>
    %cst_221 = arith.constant dense<0.000000e+00> : vector<24xf32>
    %492 = vector.multi_reduction <add>, %487, %cst_221 [1] : vector<24x32xf32> to vector<24xf32>
    %493 = vector.shape_cast %492 : vector<24xf32> to vector<24x1xf32>
    %cst_222 = arith.constant 3.200000e+01 : f32
    %494 = vector.broadcast %cst_222 : f32 to vector<24x1xf32>
    %495 = arith.divf %493, %494 : vector<24x1xf32>
    %496 = vector.broadcast %495 : vector<24x1xf32> to vector<24x32xf32>
    %497 = arith.subf %487, %496 : vector<24x32xf32>
    %498 = arith.mulf %497, %497 : vector<24x32xf32>
    %cst_223 = arith.constant dense<0.000000e+00> : vector<24xf32>
    %499 = vector.multi_reduction <add>, %498, %cst_223 [1] : vector<24x32xf32> to vector<24xf32>
    %500 = vector.shape_cast %499 : vector<24xf32> to vector<24x1xf32>
    %cst_224 = arith.constant 3.200000e+01 : f32
    %501 = vector.broadcast %cst_224 : f32 to vector<24x1xf32>
    %502 = arith.divf %500, %501 : vector<24x1xf32>
    %503 = vector.broadcast %495 : vector<24x1xf32> to vector<24x32xf32>
    %504 = arith.subf %487, %503 : vector<24x32xf32>
    %cst_225 = arith.constant 9.99999996E-13 : f32
    %505 = vector.broadcast %cst_225 : f32 to vector<24x1xf32>
    %506 = arith.addf %502, %505 : vector<24x1xf32>
    %507 = math.rsqrt %506 : vector<24x1xf32>
    %508 = vector.broadcast %507 : vector<24x1xf32> to vector<24x32xf32>
    %509 = arith.mulf %504, %508 : vector<24x32xf32>
    %510 = vector.broadcast %489 : vector<1x32xf32> to vector<24x32xf32>
    %511 = arith.mulf %509, %510 : vector<24x32xf32>
    %512 = vector.broadcast %491 : vector<1x32xf32> to vector<24x32xf32>
    %513 = arith.addf %511, %512 : vector<24x32xf32>
    %c1_226 = arith.constant 1 : index
    %c0_227 = arith.constant 0 : index
    %c0_228 = arith.constant 0 : index
    %514 = vector.load %arg13[%c1_226, %c0_227, %c0_228] : memref<2x32x64xf32, #tpu.memory_space<vmem>>, vector<1x32x64xf32>
    %515 = vector.shape_cast %514 : vector<1x32x64xf32> to vector<32x64xf32>
    %cst_229 = arith.constant dense<0.000000e+00> : vector<24x64xf32>
    %516 = tpu.matmul %513, %515, %cst_229 {dimension_numbers = #tpu.dot_dimension_numbers<[1], [0], [0], [1], [0, 0, 1, 1], [], []>} : vector<24x32xf32>, vector<32x64xf32>, vector<24x64xf32> -> vector<24x64xf32>
    %c1_230 = arith.constant 1 : index
    %c0_231 = arith.constant 0 : index
    %c0_232 = arith.constant 0 : index
    %517 = vector.load %arg14[%c1_230, %c0_231, %c0_232] : memref<2x1x64xf32, #tpu.memory_space<vmem>>, vector<1x1x64xf32>
    %518 = vector.shape_cast %517 : vector<1x1x64xf32> to vector<1x64xf32>
    %519 = vector.broadcast %518 : vector<1x64xf32> to vector<24x64xf32>
    %520 = arith.addf %516, %519 : vector<24x64xf32>
    %cst_233 = arith.constant 5.000000e-01 : f32
    %521 = vector.broadcast %cst_233 : f32 to vector<24x64xf32>
    %522 = arith.mulf %521, %520 : vector<24x64xf32>
    %cst_234 = arith.constant 0.707106769 : f32
    %523 = vector.broadcast %cst_234 : f32 to vector<24x64xf32>
    %524 = arith.mulf %520, %523 : vector<24x64xf32>
    %525 = math.erf %524 : vector<24x64xf32>
    %cst_235 = arith.constant 1.000000e+00 : f32
    %526 = vector.broadcast %cst_235 : f32 to vector<24x64xf32>
    %527 = arith.addf %526, %525 : vector<24x64xf32>
    %528 = arith.mulf %522, %527 : vector<24x64xf32>
    %c1_236 = arith.constant 1 : index
    %c0_237 = arith.constant 0 : index
    %c0_238 = arith.constant 0 : index
    %529 = vector.load %arg15[%c1_236, %c0_237, %c0_238] : memref<2x64x32xf32, #tpu.memory_space<vmem>>, vector<1x64x32xf32>
    %530 = vector.shape_cast %529 : vector<1x64x32xf32> to vector<64x32xf32>
    %cst_239 = arith.constant dense<0.000000e+00> : vector<24x32xf32>
    %531 = tpu.matmul %528, %530, %cst_239 {dimension_numbers = #tpu.dot_dimension_numbers<[1], [0], [0], [1], [0, 0, 1, 1], [], []>} : vector<24x64xf32>, vector<64x32xf32>, vector<24x32xf32> -> vector<24x32xf32>
    %c1_240 = arith.constant 1 : index
    %c0_241 = arith.constant 0 : index
    %c0_242 = arith.constant 0 : index
    %532 = vector.load %arg16[%c1_240, %c0_241, %c0_242] : memref<2x1x32xf32, #tpu.memory_space<vmem>>, vector<1x1x32xf32>
    %533 = vector.shape_cast %532 : vector<1x1x32xf32> to vector<1x32xf32>
    %534 = vector.broadcast %533 : vector<1x32xf32> to vector<24x32xf32>
    %535 = arith.addf %531, %534 : vector<24x32xf32>
    %536 = arith.addf %535, %513 : vector<24x32xf32>
    %c1_243 = arith.constant 1 : index
    %c0_244 = arith.constant 0 : index
    %c0_245 = arith.constant 0 : index
    %537 = vector.load %arg17[%c1_243, %c0_244, %c0_245] : memref<2x1x32xf32, #tpu.memory_space<vmem>>, vector<1x1x32xf32>
    %538 = vector.shape_cast %537 : vector<1x1x32xf32> to vector<1x32xf32>
    %c1_246 = arith.constant 1 : index
    %c0_247 = arith.constant 0 : index
    %c0_248 = arith.constant 0 : index
    %539 = vector.load %arg18[%c1_246, %c0_247, %c0_248] : memref<2x1x32xf32, #tpu.memory_space<vmem>>, vector<1x1x32xf32>
    %540 = vector.shape_cast %539 : vector<1x1x32xf32> to vector<1x32xf32>
    %cst_249 = arith.constant dense<0.000000e+00> : vector<24xf32>
    %541 = vector.multi_reduction <add>, %536, %cst_249 [1] : vector<24x32xf32> to vector<24xf32>
    %542 = vector.shape_cast %541 : vector<24xf32> to vector<24x1xf32>
    %cst_250 = arith.constant 3.200000e+01 : f32
    %543 = vector.broadcast %cst_250 : f32 to vector<24x1xf32>
    %544 = arith.divf %542, %543 : vector<24x1xf32>
    %545 = vector.broadcast %544 : vector<24x1xf32> to vector<24x32xf32>
    %546 = arith.subf %536, %545 : vector<24x32xf32>
    %547 = arith.mulf %546, %546 : vector<24x32xf32>
    %cst_251 = arith.constant dense<0.000000e+00> : vector<24xf32>
    %548 = vector.multi_reduction <add>, %547, %cst_251 [1] : vector<24x32xf32> to vector<24xf32>
    %549 = vector.shape_cast %548 : vector<24xf32> to vector<24x1xf32>
    %cst_252 = arith.constant 3.200000e+01 : f32
    %550 = vector.broadcast %cst_252 : f32 to vector<24x1xf32>
    %551 = arith.divf %549, %550 : vector<24x1xf32>
    %552 = vector.broadcast %544 : vector<24x1xf32> to vector<24x32xf32>
    %553 = arith.subf %536, %552 : vector<24x32xf32>
    %cst_253 = arith.constant 9.99999996E-13 : f32
    %554 = vector.broadcast %cst_253 : f32 to vector<24x1xf32>
    %555 = arith.addf %551, %554 : vector<24x1xf32>
    %556 = math.rsqrt %555 : vector<24x1xf32>
    %557 = vector.broadcast %556 : vector<24x1xf32> to vector<24x32xf32>
    %558 = arith.mulf %553, %557 : vector<24x32xf32>
    %559 = vector.broadcast %538 : vector<1x32xf32> to vector<24x32xf32>
    %560 = arith.mulf %558, %559 : vector<24x32xf32>
    %561 = vector.broadcast %540 : vector<1x32xf32> to vector<24x32xf32>
    %562 = arith.addf %560, %561 : vector<24x32xf32>
    %c0_254 = arith.constant 0 : index
    %c0_255 = arith.constant 0 : index
    %563 = vector.load %arg24[%c0_254, %c0_255] : memref<24x32xf32, #tpu.memory_space<vmem>>, vector<24x32xf32>
    tpu.vector_store %arg24[%c0_254, %c0_255], %562 {strides = array<i32>} : memref<24x32xf32, #tpu.memory_space<vmem>>, vector<24x32xf32>,
    %c0_256 = arith.constant 0 : index
    %c0_257 = arith.constant 0 : index
    %564 = vector.load %arg24[%c0_256, %c0_257] : memref<24x32xf32, #tpu.memory_space<vmem>>, vector<24x32xf32>
    %c0_258 = arith.constant 0 : index
    %c0_259 = arith.constant 0 : index
    %565 = vector.load %arg19[%c0_258, %c0_259] : memref<1x32xf32, #tpu.memory_space<vmem>>, vector<1x32xf32>
    %c0_260 = arith.constant 0 : index
    %c0_261 = arith.constant 0 : index
    %566 = vector.load %arg20[%c0_260, %c0_261] : memref<1x32xf32, #tpu.memory_space<vmem>>, vector<1x32xf32>
    %cst_262 = arith.constant dense<0.000000e+00> : vector<24xf32>
    %567 = vector.multi_reduction <add>, %564, %cst_262 [1] : vector<24x32xf32> to vector<24xf32>
    %568 = vector.shape_cast %567 : vector<24xf32> to vector<24x1xf32>
    %cst_263 = arith.constant 3.200000e+01 : f32
    %569 = vector.broadcast %cst_263 : f32 to vector<24x1xf32>
    %570 = arith.divf %568, %569 : vector<24x1xf32>
    %571 = vector.broadcast %570 : vector<24x1xf32> to vector<24x32xf32>
    %572 = arith.subf %564, %571 : vector<24x32xf32>
    %573 = arith.mulf %572, %572 : vector<24x32xf32>
    %cst_264 = arith.constant dense<0.000000e+00> : vector<24xf32>
    %574 = vector.multi_reduction <add>, %573, %cst_264 [1] : vector<24x32xf32> to vector<24xf32>
    %575 = vector.shape_cast %574 : vector<24xf32> to vector<24x1xf32>
    %cst_265 = arith.constant 3.200000e+01 : f32
    %576 = vector.broadcast %cst_265 : f32 to vector<24x1xf32>
    %577 = arith.divf %575, %576 : vector<24x1xf32>
    %578 = vector.broadcast %570 : vector<24x1xf32> to vector<24x32xf32>
    %579 = arith.subf %564, %578 : vector<24x32xf32>
    %cst_266 = arith.constant 9.99999974E-6 : f32
    %580 = vector.broadcast %cst_266 : f32 to vector<24x1xf32>
    %581 = arith.addf %577, %580 : vector<24x1xf32>
    %582 = math.rsqrt %581 : vector<24x1xf32>
    %583 = vector.broadcast %582 : vector<24x1xf32> to vector<24x32xf32>
    %584 = arith.mulf %579, %583 : vector<24x32xf32>
    %585 = vector.broadcast %565 : vector<1x32xf32> to vector<24x32xf32>
    %586 = arith.mulf %584, %585 : vector<24x32xf32>
    %587 = vector.broadcast %566 : vector<1x32xf32> to vector<24x32xf32>
    %588 = arith.addf %586, %587 : vector<24x32xf32>
    %c0_267 = arith.constant 0 : index
    %c0_268 = arith.constant 0 : index
    %589 = vector.load %arg21[%c0_267, %c0_268] : memref<32x8xf32, #tpu.memory_space<vmem>>, vector<32x8xf32>
    %cst_269 = arith.constant dense<0.000000e+00> : vector<24x8xf32>
    %590 = tpu.matmul %588, %589, %cst_269 {dimension_numbers = #tpu.dot_dimension_numbers<[1], [0], [0], [1], [0, 0, 1, 1], [], []>} : vector<24x32xf32>, vector<32x8xf32>, vector<24x8xf32> -> vector<24x8xf32>
    %c0_270 = arith.constant 0 : index
    %c0_271 = arith.constant 0 : index
    %591 = vector.load %arg22[%c0_270, %c0_271] : memref<1x8xf32, #tpu.memory_space<vmem>>, vector<1x8xf32>
    %592 = vector.broadcast %591 : vector<1x8xf32> to vector<24x8xf32>
    %593 = arith.addf %590, %592 : vector<24x8xf32>
    %594 = vector.extract_strided_slice %593 {offsets = [0, 0], sizes = [1, 8], strides = [1, 1]} : vector<24x8xf32> to vector<1x8xf32>
    %c0_272 = arith.constant 0 : index
    %c0_273 = arith.constant 0 : index
    %595 = vector.load %arg23[%c0_272, %c0_273] : memref<2x8xf32, #tpu.memory_space<vmem>>, vector<1x8xf32>
    tpu.vector_store %arg23[%c0_272, %c0_273], %594 {strides = array<i32>} : memref<2x8xf32, #tpu.memory_space<vmem>>, vector<1x8xf32>,
    %596 = vector.extract_strided_slice %593 {offsets = [12, 0], sizes = [1, 8], strides = [1, 1]} : vector<24x8xf32> to vector<1x8xf32>
    %c1_274 = arith.constant 1 : index
    %c0_275 = arith.constant 0 : index
    %597 = vector.load %arg23[%c1_274, %c0_275] : memref<2x8xf32, #tpu.memory_space<vmem>>, vector<1x8xf32>
    tpu.vector_store %arg23[%c1_274, %c0_275], %596 {strides = array<i32>} : memref<2x8xf32, #tpu.memory_space<vmem>>, vector<1x8xf32>,
    return
  }
}

</mosaic_0001>

<llo_original>
// kernel: prompted_bert_forward.1
$region0: #{prompted_bert_forward.1}
  #allocation0 [shape = 'u32[]', space=smem, size = 0x4, offset = 0x4, fixed_abs, tag = 'smem constant byte address 0x4 - core index']
  #allocation1 [shape = 'u32[144,128]{1,0:T(1,128)}', space=vmem, size = 0x12000, scoped, tag = 'internal scratch']
  #allocation2 [shape = 'f32[24,32]{1,0:T(8,128)}', space=vmem, size = 0x3000, scoped, tag = 'scratch operand']
  #allocation3 [shape = 'f32[24,32]{1,0:T(8,128)}', space=vmem, size = 0x3000, scoped, tag = 'scratch operand']
  %s0 = inlined_call_operand.vmem [shape: f32[16,32], index: 0, kind: input, shape index: {}]
  %s1 = inlined_call_operand.vmem [shape: f32[2,12], index: 1, kind: input, shape index: {}]
  %s2 = inlined_call_operand.vmem [shape: f32[8,16], index: 2, kind: input, shape index: {}]
  %s3 = inlined_call_operand.vmem [shape: f32[1,32], index: 3, kind: input, shape index: {}]
  %s4 = inlined_call_operand.vmem [shape: f32[1,32], index: 4, kind: input, shape index: {}]
  %s5 = inlined_call_operand.vmem [shape: f32[16,32], index: 5, kind: input, shape index: {}]
  %s6 = inlined_call_operand.vmem [shape: f32[1,32], index: 6, kind: input, shape index: {}]
  %s7 = inlined_call_operand.vmem [shape: f32[2,32,96], index: 7, kind: input, shape index: {}]
  %s8 = inlined_call_operand.vmem [shape: f32[2,1,96], index: 8, kind: input, shape index: {}]
  %s9 = inlined_call_operand.vmem [shape: f32[2,32,32], index: 9, kind: input, shape index: {}]
  %s10 = inlined_call_operand.vmem [shape: f32[2,1,32], index: 10, kind: input, shape index: {}]
  %s11 = inlined_call_operand.vmem [shape: f32[2,1,32], index: 11, kind: input, shape index: {}]
  %s12 = inlined_call_operand.vmem [shape: f32[2,1,32], index: 12, kind: input, shape index: {}]
  %s13 = inlined_call_operand.vmem [shape: f32[2,32,64], index: 13, kind: input, shape index: {}]
  %s14 = inlined_call_operand.vmem [shape: f32[2,1,64], index: 14, kind: input, shape index: {}]
  %s15 = inlined_call_operand.vmem [shape: f32[2,64,32], index: 15, kind: input, shape index: {}]
  %s16 = inlined_call_operand.vmem [shape: f32[2,1,32], index: 16, kind: input, shape index: {}]
  %s17 = inlined_call_operand.vmem [shape: f32[2,1,32], index: 17, kind: input, shape index: {}]
  %s18 = inlined_call_operand.vmem [shape: f32[2,1,32], index: 18, kind: input, shape index: {}]
  %s19 = inlined_call_operand.vmem [shape: f32[1,32], index: 19, kind: input, shape index: {}]
  %s20 = inlined_call_operand.vmem [shape: f32[1,32], index: 20, kind: input, shape index: {}]
  %s21 = inlined_call_operand.vmem [shape: f32[32,8], index: 21, kind: input, shape index: {}]
  %s22 = inlined_call_operand.vmem [shape: f32[1,8], index: 22, kind: input, shape index: {}]
  %s23 = inlined_call_operand.hbm [shape: f32[2,8], index: 23, kind: output, shape index: {}]
  %s24 = sld [smem:[#allocation0]]
  $region102: #{prompted_bert_forward.1} parent=0
    _
  %s26 = ssub.s32 1, %s24
  %s27 = scalar_select 0, %s26, %s24
  $region1: #{prompted_bert_forward.1} parent=0
    #allocation4 [shape = 'u8[1024]{0}', space=vmem, size = 0x400, scoped, tag = 'output window, operand 0, single buffered']
    #allocation5 [shape = 's32[1]{0}', space=sflag, size = 0x4, scoped, tag = 'scoped memory for prompted_bert_forward.1']
    %28 = vsyncpa [#allocation5], 0
    // Predicated region
    $region2: #{prompted_bert_forward.1} parent=1 // pred_check
      _
    $region3: #{prompted_bert_forward.1} parent=1 // pred_check_branch
      %30 = sbr.rel (0) target = $region5
    $region4: #{prompted_bert_forward.1} parent=1 // pred_region
      _
    $region5: #{prompted_bert_forward.1} parent=1 // pred_fallthru
      _
    // Predicated region
    $region6: #{prompted_bert_forward.1} parent=1 // pred_check
      _
    $region7: #{prompted_bert_forward.1} parent=1 // pred_check_branch
      %32 = sbr.rel (0) target = $region9
    $region8: #{prompted_bert_forward.1} parent=1 // pred_region
      _
    $region9: #{prompted_bert_forward.1} parent=1 // pred_fallthru
      _
    // Predicated region
    $region10: #{prompted_bert_forward.1} parent=1 // pred_check
      _
    $region11: #{prompted_bert_forward.1} parent=1 // pred_check_branch
      %34 = sbr.rel (0) target = $region13
    $region12: #{prompted_bert_forward.1} parent=1 // pred_region
      _
    $region13: #{prompted_bert_forward.1} parent=1 // pred_fallthru
      _
    // Predicated region
    $region14: #{prompted_bert_forward.1} parent=1 // pred_check
      _
    $region15: #{prompted_bert_forward.1} parent=1 // pred_check_branch
      %36 = sbr.rel (0) target = $region17
    $region16: #{prompted_bert_forward.1} parent=1 // pred_region
      _
    $region17: #{prompted_bert_forward.1} parent=1 // pred_fallthru
      _
    // Predicated region
    $region18: #{prompted_bert_forward.1} parent=1 // pred_check
      _
    $region19: #{prompted_bert_forward.1} parent=1 // pred_check_branch
      %38 = sbr.rel (0) target = $region21
    $region20: #{prompted_bert_forward.1} parent=1 // pred_region
      _
    $region21: #{prompted_bert_forward.1} parent=1 // pred_fallthru
      _
    // Predicated region
    $region22: #{prompted_bert_forward.1} parent=1 // pred_check
      _
    $region23: #{prompted_bert_forward.1} parent=1 // pred_check_branch
      %40 = sbr.rel (0) target = $region25
    $region24: #{prompted_bert_forward.1} parent=1 // pred_region
      _
    $region25: #{prompted_bert_forward.1} parent=1 // pred_fallthru
      _
    // Predicated region
    $region26: #{prompted_bert_forward.1} parent=1 // pred_check
      _
    $region27: #{prompted_bert_forward.1} parent=1 // pred_check_branch
      %42 = sbr.rel (0) target = $region29
    $region28: #{prompted_bert_forward.1} parent=1 // pred_region
      _
    $region29: #{prompted_bert_forward.1} parent=1 // pred_fallthru
      _
    // Predicated region
    $region30: #{prompted_bert_forward.1} parent=1 // pred_check
      _
    $region31: #{prompted_bert_forward.1} parent=1 // pred_check_branch
      %44 = sbr.rel (0) target = $region33
    $region32: #{prompted_bert_forward.1} parent=1 // pred_region
      _
    $region33: #{prompted_bert_forward.1} parent=1 // pred_fallthru
      _
    // Predicated region
    $region34: #{prompted_bert_forward.1} parent=1 // pred_check
      _
    $region35: #{prompted_bert_forward.1} parent=1 // pred_check_branch
      %46 = sbr.rel (0) target = $region37
    $region36: #{prompted_bert_forward.1} parent=1 // pred_region
      _
    $region37: #{prompted_bert_forward.1} parent=1 // pred_fallthru
      _
    // Predicated region
    $region38: #{prompted_bert_forward.1} parent=1 // pred_check
      _
    $region39: #{prompted_bert_forward.1} parent=1 // pred_check_branch
      %48 = sbr.rel (0) target = $region41
    $region40: #{prompted_bert_forward.1} parent=1 // pred_region
      _
    $region41: #{prompted_bert_forward.1} parent=1 // pred_fallthru
      _
    // Predicated region
    $region42: #{prompted_bert_forward.1} parent=1 // pred_check
      _
    $region43: #{prompted_bert_forward.1} parent=1 // pred_check_branch
      %50 = sbr.rel (0) target = $region45
    $region44: #{prompted_bert_forward.1} parent=1 // pred_region
      _
    $region45: #{prompted_bert_forward.1} parent=1 // pred_fallthru
      _
    // Predicated region
    $region46: #{prompted_bert_forward.1} parent=1 // pred_check
      _
    $region47: #{prompted_bert_forward.1} parent=1 // pred_check_branch
      %52 = sbr.rel (0) target = $region49
    $region48: #{prompted_bert_forward.1} parent=1 // pred_region
      _
    $region49: #{prompted_bert_forward.1} parent=1 // pred_fallthru
      _
    // Predicated region
    $region50: #{prompted_bert_forward.1} parent=1 // pred_check
      _
    $region51: #{prompted_bert_forward.1} parent=1 // pred_check_branch
      %54 = sbr.rel (0) target = $region53
    $region52: #{prompted_bert_forward.1} parent=1 // pred_region
      _
    $region53: #{prompted_bert_forward.1} parent=1 // pred_fallthru
      _
    // Predicated region
    $region54: #{prompted_bert_forward.1} parent=1 // pred_check
      _
    $region55: #{prompted_bert_forward.1} parent=1 // pred_check_branch
      %56 = sbr.rel (0) target = $region57
    $region56: #{prompted_bert_forward.1} parent=1 // pred_region
      _
    $region57: #{prompted_bert_forward.1} parent=1 // pred_fallthru
      _
    // Predicated region
    $region58: #{prompted_bert_forward.1} parent=1 // pred_check
      _
    $region59: #{prompted_bert_forward.1} parent=1 // pred_check_branch
      %58 = sbr.rel (0) target = $region61
    $region60: #{prompted_bert_forward.1} parent=1 // pred_region
      _
    $region61: #{prompted_bert_forward.1} parent=1 // pred_fallthru
      _
    // Predicated region
    $region62: #{prompted_bert_forward.1} parent=1 // pred_check
      _
    $region63: #{prompted_bert_forward.1} parent=1 // pred_check_branch
      %60 = sbr.rel (0) target = $region65
    $region64: #{prompted_bert_forward.1} parent=1 // pred_region
      _
    $region65: #{prompted_bert_forward.1} parent=1 // pred_fallthru
      _
    // Predicated region
    $region66: #{prompted_bert_forward.1} parent=1 // pred_check
      _
    $region67: #{prompted_bert_forward.1} parent=1 // pred_check_branch
      %62 = sbr.rel (0) target = $region69
    $region68: #{prompted_bert_forward.1} parent=1 // pred_region
      _
    $region69: #{prompted_bert_forward.1} parent=1 // pred_fallthru
      _
    // Predicated region
    $region70: #{prompted_bert_forward.1} parent=1 // pred_check
      _
    $region71: #{prompted_bert_forward.1} parent=1 // pred_check_branch
      %64 = sbr.rel (0) target = $region73
    $region72: #{prompted_bert_forward.1} parent=1 // pred_region
      _
    $region73: #{prompted_bert_forward.1} parent=1 // pred_fallthru
      _
    // Predicated region
    $region74: #{prompted_bert_forward.1} parent=1 // pred_check
      _
    $region75: #{prompted_bert_forward.1} parent=1 // pred_check_branch
      %66 = sbr.rel (0) target = $region77
    $region76: #{prompted_bert_forward.1} parent=1 // pred_region
      _
    $region77: #{prompted_bert_forward.1} parent=1 // pred_fallthru
      _
    // Predicated region
    $region78: #{prompted_bert_forward.1} parent=1 // pred_check
      _
    $region79: #{prompted_bert_forward.1} parent=1 // pred_check_branch
      %68 = sbr.rel (0) target = $region81
    $region80: #{prompted_bert_forward.1} parent=1 // pred_region
      _
    $region81: #{prompted_bert_forward.1} parent=1 // pred_fallthru
      _
    // Predicated region
    $region82: #{prompted_bert_forward.1} parent=1 // pred_check
      _
    $region83: #{prompted_bert_forward.1} parent=1 // pred_check_branch
      %70 = sbr.rel (0) target = $region85
    $region84: #{prompted_bert_forward.1} parent=1 // pred_region
      _
    $region85: #{prompted_bert_forward.1} parent=1 // pred_fallthru
      _
    // Predicated region
    $region86: #{prompted_bert_forward.1} parent=1 // pred_check
      _
    $region87: #{prompted_bert_forward.1} parent=1 // pred_check_branch
      %72 = sbr.rel (0) target = $region89
    $region88: #{prompted_bert_forward.1} parent=1 // pred_region
      _
    $region89: #{prompted_bert_forward.1} parent=1 // pred_fallthru
      _
    // Predicated region
    $region90: #{prompted_bert_forward.1} parent=1 // pred_check
      _
    $region91: #{prompted_bert_forward.1} parent=1 // pred_check_branch
      %74 = sbr.rel (0) target = $region93
    $region92: #{prompted_bert_forward.1} parent=1 // pred_region
      _
    $region93: #{prompted_bert_forward.1} parent=1 // pred_fallthru
      _
    %v75 = vld [vmem:[%s0] sm:$0xff]
    %v76 = vld [vmem:[%s0 + $0x8] sm:$0xff]
    %v77 = vld [vmem:[%s3] sm:$0x1]
    %v78 = vld [vmem:[%s4] sm:$0x1]
    %vm79 = vcmask 261120
    %v80 = vsel %vm79, %v75, 0.0
    %81 = vadd.xlane.f32.xlu0 %v80
    %v82 = vpop.xlane.xlu0 %81
    %v83 = vsel %vm79, %v76, 0.0
    %84 = vadd.xlane.f32.xlu0 %v83
    %v85 = vpop.xlane.xlu0 %84
    %v86 = vrcp.pop 32.0
    %v87 = vmul.f32 %v82, %v86
    %v88 = vmul.f32 %v85, %v86
    %v89 = vsub.f32 %v75, %v87
    %v90 = vsub.f32 %v76, %v88
    %v91 = vmul.f32 %v89, %v89
    %v92 = vmul.f32 %v90, %v90
    %v93 = vsel %vm79, %v91, 0.0
    %94 = vadd.xlane.f32.xlu0 %v93
    %v95 = vpop.xlane.xlu0 %94
    %v96 = vsel %vm79, %v92, 0.0
    %97 = vadd.xlane.f32.xlu0 %v96
    %v98 = vpop.xlane.xlu0 %97
    %v99 = vmul.f32 %v95, %v86
    %v100 = vmul.f32 %v98, %v86
    %v101 = vadd.f32 %v99, 1e-12
    %v102 = vadd.f32 %v100, 1e-12
    %v103 = vrsqrt.pop %v101
    %v104 = vrsqrt.pop %v102
    %v105 = vmul.f32 %v89, %v103
    %v106 = vmul.f32 %v90, %v104
    %v108 = vlaneseq
    %v109 = vshrl.u32 %v108, 7
    %v110 = vsub.s32 0, %v109
    %v111 = vrot.slane %v77, %v110
    %v113 = vmul.f32 %v105, %v111
    %v114 = vmul.f32 %v106, %v111
    %v116 = vlaneseq
    %v117 = vshrl.u32 %v116, 7
    %v118 = vsub.s32 0, %v117
    %v119 = vrot.slane %v78, %v118
    %v121 = vadd.f32 %v113, %v119
    %v122 = vadd.f32 %v114, %v119
    %v123 = vld [vmem:[%s2] sm:$0xff]
    %v124 = vld [vmem:[%s5] sm:$0xff]
    %v125 = vld [vmem:[%s5 + $0x8] sm:$0xff]
    %v126 = vld [vmem:[%s6] sm:$0x1]
    %v128 = vlaneseq
    %v129 = vshrl.u32 %v128, 7
    %v130 = vsub.s32 0, %v129
    %v131 = vrot.slane %v126, %v130
    %vm133 = vcmask 130048
    %v135 = vsel %vm133, %v123, 0
    %137 = vmatprep.subr.mxu0 0.0
    %138 = vmatpush1.msra.mxu0 %v124
    %139 = vmatprep.subr.mxu0 0.0
    %140 = vmatpush1.msra.mxu0 %v125
    %141 = vmatprep.subr.mxu0 0.0
    %142 = vmatpush1.msra.mxu0 0.0
    %143 = vmatprep.subr.mxu0 0.0
    %144 = vmatpush1.msra.mxu0 0.0
    %145 = vmatprep.subr.mxu0 0.0
    %146 = vmatpush1.msra.mxu0 0.0
    %147 = vmatprep.subr.mxu0 0.0
    %148 = vmatpush1.msra.mxu0 0.0
    %149 = vmatprep.subr.mxu0 0.0
    %150 = vmatpush1.msra.mxu0 0.0
    %151 = vmatprep.subr.mxu0 0.0
    %152 = vmatpush1.msra.mxu0 0.0
    %153 = vmatprep.subr.mxu0 0.0
    %154 = vmatpush1.msra.mxu0 0.0
    %155 = vmatprep.subr.mxu0 0.0
    %156 = vmatpush1.msra.mxu0 0.0
    %157 = vmatprep.subr.mxu0 0.0
    %158 = vmatpush1.msra.mxu0 0.0
    %159 = vmatprep.subr.mxu0 0.0
    %160 = vmatpush1.msra.mxu0 0.0
    %161 = vmatprep.subr.mxu0 0.0
    %162 = vmatpush1.msra.mxu0 0.0
    %163 = vmatprep.subr.mxu0 0.0
    %164 = vmatpush1.msra.mxu0 0.0
    %165 = vmatprep.subr.mxu0 0.0
    %166 = vmatpush1.msra.mxu0 0.0
    %167 = vmatprep.subr.mxu0 0.0
    %168 = vmatpush1.msra.mxu0 0.0
    %169 = vmatprep.subr.mxu0 0.0
    %170 = vmatpush1.msra.mxu0 0.0
    %171 = vmatprep.subr.mxu0 0.0
    %172 = vmatpush1.msra.mxu0 0.0
    %173 = vmatprep.subr.mxu0 0.0
    %174 = vmatpush1.msra.mxu0 0.0
    %175 = vmatprep.subr.mxu0 0.0
    %176 = vmatpush1.msra.mxu0 0.0
    %177 = vmatprep.subr.mxu0 0.0
    %178 = vmatpush1.msra.mxu0 0.0
    %179 = vmatprep.subr.mxu0 0.0
    %180 = vmatpush1.msra.mxu0 0.0
    %181 = vmatprep.subr.mxu0 0.0
    %182 = vmatpush1.msra.mxu0 0.0
    %183 = vmatprep.subr.mxu0 0.0
    %184 = vmatpush1.msra.mxu0 0.0
    %185 = vmatprep.subr.mxu0 0.0
    %186 = vmatpush1.msra.mxu0 0.0
    %187 = vmatprep.subr.mxu0 0.0
    %188 = vmatpush1.msra.mxu0 0.0
    %189 = vmatprep.subr.mxu0 0.0
    %190 = vmatpush1.msra.mxu0 0.0
    %191 = vmatprep.subr.mxu0 0.0
    %192 = vmatpush1.msra.mxu0 0.0
    %193 = vmatprep.subr.mxu0 0.0
    %194 = vmatpush1.msra.mxu0 0.0
    %195 = vmatprep.subr.mxu0 0.0
    %196 = vmatpush1.msra.mxu0 0.0
    %197 = vmatprep.subr.mxu0 0.0
    %198 = vmatpush1.msra.mxu0 0.0
    %199 = vmatprep.subr.mxu0 0.0
    %200 = vmatpush1.msra.mxu0 0.0
    %201 = vmatprep.mubr.f32.mxu0 0.0
    %202 = vmatmul.mubr.f32.gmra.mrb[0].mxu0 %v135
    %v203 = vpop.f32.mrb[0].mxu0
    %v204 = vadd.f32 %v131, %v203
    %v205 = vpop.f32.mrb[0].mxu0
    %206 = vdwg.mxu0
    %vm207 = vcmask 253952
    %208 = vst.msk [vmem:[#allocation2] sm:$0x1] %vm207, %v121
    %vm209 = vcmask 257024
    %210 = vst.msk [vmem:[#allocation2 + $0x1] sm:$0xf] %vm209, %v204
    %vm211 = vcmask 261121
    %212 = vst.msk [vmem:[#allocation2 + $0x4] sm:$0xfe] %vm211, %v121
    %213 = vst.msk [vmem:[#allocation2 + $0xc] sm:$0x1] %vm207, %v122
    %214 = vst.msk [vmem:[#allocation2 + $0xd] sm:$0xf] %vm209, %v204
    %215 = vst.msk [vmem:[#allocation2 + $0x10] sm:$0xfe] %vm211, %v122
    %v216 = vld [vmem:[%s1] sm:$0x3]
    %v217 = vld [vmem:[#allocation2] sm:$0xff]
    %v218 = vld [vmem:[#allocation2 + $0x8] sm:$0xff]
    %v219 = vld [vmem:[#allocation2 + $0x10] sm:$0xff]
    %v220 = vld [vmem:[%s7] sm:$0xff]
    %v221 = vld [vmem:[%s7 + $0x8] sm:$0xff]
    %v222 = vld [vmem:[%s7 + $0x10] sm:$0xff]
    %v223 = vld [vmem:[%s7 + $0x18] sm:$0xff]
    %v224 = vld [vmem:[%s8] sm:$0x1]
    %v226 = vlaneseq
    %v227 = vshrl.u32 %v226, 7
    %v228 = vsub.s32 0, %v227
    %v229 = vrot.slane %v224, %v228
    %v232 = vsel %vm79, %v217, 0
    %v235 = vsel %vm79, %v218, 0
    %v238 = vsel %vm79, %v219, 0
    %240 = vmatprep.subr.mxu0 0.0
    %241 = vmatpush1.msra.mxu0 %v220
    %242 = vmatprep.subr.mxu0 0.0
    %243 = vmatpush1.msra.mxu0 %v221
    %244 = vmatprep.subr.mxu0 0.0
    %245 = vmatpush1.msra.mxu0 %v222
    %246 = vmatprep.subr.mxu0 0.0
    %247 = vmatpush1.msra.mxu0 %v223
    %248 = vmatprep.subr.mxu0 0.0
    %249 = vmatpush1.msra.mxu0 0.0
    %250 = vmatprep.subr.mxu0 0.0
    %251 = vmatpush1.msra.mxu0 0.0
    %252 = vmatprep.subr.mxu0 0.0
    %253 = vmatpush1.msra.mxu0 0.0
    %254 = vmatprep.subr.mxu0 0.0
    %255 = vmatpush1.msra.mxu0 0.0
    %256 = vmatprep.subr.mxu0 0.0
    %257 = vmatpush1.msra.mxu0 0.0
    %258 = vmatprep.subr.mxu0 0.0
    %259 = vmatpush1.msra.mxu0 0.0
    %260 = vmatprep.subr.mxu0 0.0
    %261 = vmatpush1.msra.mxu0 0.0
    %262 = vmatprep.subr.mxu0 0.0
    %263 = vmatpush1.msra.mxu0 0.0
    %264 = vmatprep.subr.mxu0 0.0
    %265 = vmatpush1.msra.mxu0 0.0
    %266 = vmatprep.subr.mxu0 0.0
    %267 = vmatpush1.msra.mxu0 0.0
    %268 = vmatprep.subr.mxu0 0.0
    %269 = vmatpush1.msra.mxu0 0.0
    %270 = vmatprep.subr.mxu0 0.0
    %271 = vmatpush1.msra.mxu0 0.0
    %272 = vmatprep.subr.mxu0 0.0
    %273 = vmatpush1.msra.mxu0 0.0
    %274 = vmatprep.subr.mxu0 0.0
    %275 = vmatpush1.msra.mxu0 0.0
    %276 = vmatprep.subr.mxu0 0.0
    %277 = vmatpush1.msra.mxu0 0.0
    %278 = vmatprep.subr.mxu0 0.0
    %279 = vmatpush1.msra.mxu0 0.0
    %280 = vmatprep.subr.mxu0 0.0
    %281 = vmatpush1.msra.mxu0 0.0
    %282 = vmatprep.subr.mxu0 0.0
    %283 = vmatpush1.msra.mxu0 0.0
    %284 = vmatprep.subr.mxu0 0.0
    %285 = vmatpush1.msra.mxu0 0.0
    %286 = vmatprep.subr.mxu0 0.0
    %287 = vmatpush1.msra.mxu0 0.0
    %288 = vmatprep.subr.mxu0 0.0
    %289 = vmatpush1.msra.mxu0 0.0
    %290 = vmatprep.subr.mxu0 0.0
    %291 = vmatpush1.msra.mxu0 0.0
    %292 = vmatprep.subr.mxu0 0.0
    %293 = vmatpush1.msra.mxu0 0.0
    %294 = vmatprep.subr.mxu0 0.0
    %295 = vmatpush1.msra.mxu0 0.0
    %296 = vmatprep.subr.mxu0 0.0
    %297 = vmatpush1.msra.mxu0 0.0
    %298 = vmatprep.subr.mxu0 0.0
    %299 = vmatpush1.msra.mxu0 0.0
    %300 = vmatprep.subr.mxu0 0.0
    %301 = vmatpush1.msra.mxu0 0.0
    %302 = vmatprep.subr.mxu0 0.0
    %303 = vmatpush1.msra.mxu0 0.0
    %304 = vmatprep.mubr.f32.mxu0 0.0
    %305 = vmatmul.mubr.f32.gmra.mrb[0].mxu0 %v232
    %v306 = vpop.f32.mrb[0].mxu0
    %v307 = vadd.f32 %v229, %v306
    %v308 = vpop.f32.mrb[0].mxu0
    %309 = vmatprep.mubr.f32.mxu0 0.0
    %310 = vmatmul.mubr.f32.gmra.mrb[0].mxu0 %v235
    %v311 = vpop.f32.mrb[0].mxu0
    %v312 = vadd.f32 %v229, %v311
    %v313 = vpop.f32.mrb[0].mxu0
    %314 = vmatprep.mubr.f32.mxu0 0.0
    %315 = vmatmul.mubr.f32.gmra.mrb[0].mxu0 %v238
    %v316 = vpop.f32.mrb[0].mxu0
    %v317 = vadd.f32 %v229, %v316
    %v318 = vpop.f32.mrb[0].mxu0
    %319 = vdwg.mxu0
    %322 = vrot.lane.b32.xlu0 %v307, 96
    %v323 = vpop.permute.xlu0 %322
    %324 = vrot.lane.b32.xlu0 %v312, 96
    %v325 = vpop.permute.xlu0 %324
    %vm326 = vcmask 64512
    %v327 = vsel %vm326, %v307, 0
    %v329 = vsel %vm326, %v312, 0
    %v331 = vsel %vm326, %v323, 0
    %v333 = vsel %vm326, %v325, 0
    %335 = vmatprep.subr.mxu0 0.0
    %336 = vmatpush1.xpose.msra.mxu0 %v331
    %337 = vmatprep.subr.mxu0 0.0
    %338 = vmatpush1.xpose.msra.mxu0 %v333
    %339 = vmatprep.subr.mxu0 0.0
    %340 = vmatpush1.xpose.msra.mxu0 0.0
    %341 = vmatprep.subr.mxu0 0.0
    %342 = vmatpush1.xpose.msra.mxu0 0.0
    %343 = vmatprep.subr.mxu0 0.0
    %344 = vmatpush1.xpose.msra.mxu0 0.0
    %345 = vmatprep.subr.mxu0 0.0
    %346 = vmatpush1.xpose.msra.mxu0 0.0
    %347 = vmatprep.subr.mxu0 0.0
    %348 = vmatpush1.xpose.msra.mxu0 0.0
    %349 = vmatprep.subr.mxu0 0.0
    %350 = vmatpush1.xpose.msra.mxu0 0.0
    %351 = vmatprep.subr.mxu0 0.0
    %352 = vmatpush1.xpose.msra.mxu0 0.0
    %353 = vmatprep.subr.mxu0 0.0
    %354 = vmatpush1.xpose.msra.mxu0 0.0
    %355 = vmatprep.subr.mxu0 0.0
    %356 = vmatpush1.xpose.msra.mxu0 0.0
    %357 = vmatprep.subr.mxu0 0.0
    %358 = vmatpush1.xpose.msra.mxu0 0.0
    %359 = vmatprep.subr.mxu0 0.0
    %360 = vmatpush1.xpose.msra.mxu0 0.0
    %361 = vmatprep.subr.mxu0 0.0
    %362 = vmatpush1.xpose.msra.mxu0 0.0
    %363 = vmatprep.subr.mxu0 0.0
    %364 = vmatpush1.xpose.msra.mxu0 0.0
    %365 = vmatprep.subr.mxu0 0.0
    %366 = vmatpush1.xpose.msra.mxu0 0.0
    %367 = vmatprep.subr.mxu0 0.0
    %368 = vmatpush1.xpose.msra.mxu0 0.0
    %369 = vmatprep.subr.mxu0 0.0
    %370 = vmatpush1.xpose.msra.mxu0 0.0
    %371 = vmatprep.subr.mxu0 0.0
    %372 = vmatpush1.xpose.msra.mxu0 0.0
    %373 = vmatprep.subr.mxu0 0.0
    %374 = vmatpush1.xpose.msra.mxu0 0.0
    %375 = vmatprep.subr.mxu0 0.0
    %376 = vmatpush1.xpose.msra.mxu0 0.0
    %377 = vmatprep.subr.mxu0 0.0
    %378 = vmatpush1.xpose.msra.mxu0 0.0
    %379 = vmatprep.subr.mxu0 0.0
    %380 = vmatpush1.xpose.msra.mxu0 0.0
    %381 = vmatprep.subr.mxu0 0.0
    %382 = vmatpush1.xpose.msra.mxu0 0.0
    %383 = vmatprep.subr.mxu0 0.0
    %384 = vmatpush1.xpose.msra.mxu0 0.0
    %385 = vmatprep.subr.mxu0 0.0
    %386 = vmatpush1.xpose.msra.mxu0 0.0
    %387 = vmatprep.subr.mxu0 0.0
    %388 = vmatpush1.xpose.msra.mxu0 0.0
    %389 = vmatprep.subr.mxu0 0.0
    %390 = vmatpush1.xpose.msra.mxu0 0.0
    %391 = vmatprep.subr.mxu0 0.0
    %392 = vmatpush1.xpose.msra.mxu0 0.0
    %393 = vmatprep.subr.mxu0 0.0
    %394 = vmatpush1.xpose.msra.mxu0 0.0
    %395 = vmatprep.subr.mxu0 0.0
    %396 = vmatpush1.xpose.msra.mxu0 0.0
    %397 = vmatprep.subr.mxu0 0.0
    %398 = vmatpush1.xpose.msra.mxu0 0.0
    %399 = vmatprep.mubr.f32.mxu0 0.0
    %400 = vmatmul.mubr.f32.gmra.mrb[0].mxu0 %v327
    %v401 = vpop.f32.mrb[0].mxu0
    %v402 = vadd.f32 0.0, %v401
    %v403 = vpop.f32.mrb[0].mxu0
    %404 = vmatprep.mubr.f32.mxu0 0.0
    %405 = vmatmul.mubr.f32.gmra.mrb[0].mxu0 %v329
    %v406 = vpop.f32.mrb[0].mxu0
    %v407 = vadd.f32 0.0, %v406
    %v408 = vpop.f32.mrb[0].mxu0
    %409 = vdwg.mxu0
    %v410 = vmul.f32 %v402, 0.35355338
    %v411 = vmul.f32 %v407, 0.35355338
    %v412 = vlaneseq
    %v413 = vshrl.u32 %v412, 7
    %v414 = vsub.s32 0, %v413
    %v415 = vrot.slane %v216, %v414
    %v416 = vadd.f32 %v410, %v415
    %v417 = vadd.f32 %v411, %v415
    %vm418 = vcmask 97280
    %v419 = vsel %vm418, %v416, -inf
    %420 = vmax.xlane.f32.xlu0 %v419
    %v421 = vpop.xlane.xlu0 %420
    %vm422 = vcmask 93184
    %v423 = vsel %vm422, %v417, -inf
    %424 = vmax.xlane.f32.xlu0 %v423
    %v425 = vpop.xlane.xlu0 %424
    %v426 = vsub.f32 %v416, %v421
    %v427 = vsub.f32 %v417, %v425
    %v428 = vmul.f32 %v426, 1.442695
    %v429 = vpow.pop %v428
    %v430 = vmul.f32 %v427, 1.442695
    %v431 = vpow.pop %v430
    %v432 = vsel %vm418, %v429, 0.0
    %433 = vadd.xlane.f32.xlu0 %v432
    %v434 = vpop.xlane.xlu0 %433
    %v435 = vsel %vm422, %v431, 0.0
    %436 = vadd.xlane.f32.xlu0 %v435
    %v437 = vpop.xlane.xlu0 %436
    %v438 = vrcp.pop %v434
    %v439 = vrcp.pop %v437
    %v440 = vmul.f32 %v429, %v438
    %v441 = vmul.f32 %v431, %v439
    %442 = vrot.lane.b32.xlu0 %v307, 64
    %v443 = vpop.permute.xlu0 %442
    %444 = vrot.lane.b32.xlu0 %v312, 64
    %v445 = vpop.permute.xlu0 %444
    %v448 = vsel %vm418, %v440, 0
    %v451 = vsel %vm418, %v441, 0
    %vm453 = vcmask 1043456
    %v454 = vsel %vm453, %v445, 0
    %456 = vmatprep.subr.mxu0 0.0
    %457 = vmatpush1.msra.mxu0 %v443
    %458 = vmatprep.subr.mxu0 0.0
    %459 = vmatpush1.msra.mxu0 %v454
    %460 = vmatprep.subr.mxu0 0.0
    %461 = vmatpush1.msra.mxu0 0.0
    %462 = vmatprep.subr.mxu0 0.0
    %463 = vmatpush1.msra.mxu0 0.0
    %464 = vmatprep.subr.mxu0 0.0
    %465 = vmatpush1.msra.mxu0 0.0
    %466 = vmatprep.subr.mxu0 0.0
    %467 = vmatpush1.msra.mxu0 0.0
    %468 = vmatprep.subr.mxu0 0.0
    %469 = vmatpush1.msra.mxu0 0.0
    %470 = vmatprep.subr.mxu0 0.0
    %471 = vmatpush1.msra.mxu0 0.0
    %472 = vmatprep.subr.mxu0 0.0
    %473 = vmatpush1.msra.mxu0 0.0
    %474 = vmatprep.subr.mxu0 0.0
    %475 = vmatpush1.msra.mxu0 0.0
    %476 = vmatprep.subr.mxu0 0.0
    %477 = vmatpush1.msra.mxu0 0.0
    %478 = vmatprep.subr.mxu0 0.0
    %479 = vmatpush1.msra.mxu0 0.0
    %480 = vmatprep.subr.mxu0 0.0
    %481 = vmatpush1.msra.mxu0 0.0
    %482 = vmatprep.subr.mxu0 0.0
    %483 = vmatpush1.msra.mxu0 0.0
    %484 = vmatprep.subr.mxu0 0.0
    %485 = vmatpush1.msra.mxu0 0.0
    %486 = vmatprep.subr.mxu0 0.0
    %487 = vmatpush1.msra.mxu0 0.0
    %488 = vmatprep.subr.mxu0 0.0
    %489 = vmatpush1.msra.mxu0 0.0
    %490 = vmatprep.subr.mxu0 0.0
    %491 = vmatpush1.msra.mxu0 0.0
    %492 = vmatprep.subr.mxu0 0.0
    %493 = vmatpush1.msra.mxu0 0.0
    %494 = vmatprep.subr.mxu0 0.0
    %495 = vmatpush1.msra.mxu0 0.0
    %496 = vmatprep.subr.mxu0 0.0
    %497 = vmatpush1.msra.mxu0 0.0
    %498 = vmatprep.subr.mxu0 0.0
    %499 = vmatpush1.msra.mxu0 0.0
    %500 = vmatprep.subr.mxu0 0.0
    %501 = vmatpush1.msra.mxu0 0.0
    %502 = vmatprep.subr.mxu0 0.0
    %503 = vmatpush1.msra.mxu0 0.0
    %504 = vmatprep.subr.mxu0 0.0
    %505 = vmatpush1.msra.mxu0 0.0
    %506 = vmatprep.subr.mxu0 0.0
    %507 = vmatpush1.msra.mxu0 0.0
    %508 = vmatprep.subr.mxu0 0.0
    %509 = vmatpush1.msra.mxu0 0.0
    %510 = vmatprep.subr.mxu0 0.0
    %511 = vmatpush1.msra.mxu0 0.0
    %512 = vmatprep.subr.mxu0 0.0
    %513 = vmatpush1.msra.mxu0 0.0
    %514 = vmatprep.subr.mxu0 0.0
    %515 = vmatpush1.msra.mxu0 0.0
    %516 = vmatprep.subr.mxu0 0.0
    %517 = vmatpush1.msra.mxu0 0.0
    %518 = vmatprep.subr.mxu0 0.0
    %519 = vmatpush1.msra.mxu0 0.0
    %520 = vmatprep.mubr.f32.mxu0 0.0
    %521 = vmatmul.mubr.f32.gmra.mrb[0].mxu0 %v448
    %v522 = vpop.f32.mrb[0].mxu0
    %v523 = vadd.f32 0.0, %v522
    %v524 = vpop.f32.mrb[0].mxu0
    %525 = vmatprep.mubr.f32.mxu0 0.0
    %526 = vmatmul.mubr.f32.gmra.mrb[0].mxu0 %v451
    %v527 = vpop.f32.mrb[0].mxu0
    %v528 = vadd.f32 0.0, %v527
    %v529 = vpop.f32.mrb[0].mxu0
    %530 = vdwg.mxu0
    %531 = vst.msk [vmem:[#allocation3] sm:$0xff] %vm326, %v523
    %vm532 = vcmask 60416
    %533 = vst.msk [vmem:[#allocation3 + $0x8] sm:$0xf] %vm532, %v528
    %534 = vrot.lane.b32.xlu0 %v307, 120
    %v535 = vpop.permute.xlu0 %534
    %536 = vrot.lane.b32.xlu0 %v312, 120
    %v537 = vpop.permute.xlu0 %536
    %538 = vrot.lane.b32.xlu0 %v307, 88
    %v539 = vpop.permute.xlu0 %538
    %540 = vrot.lane.b32.xlu0 %v312, 88
    %v541 = vpop.permute.xlu0 %540
    %v542 = vsel %vm326, %v535, 0
    %v544 = vsel %vm326, %v537, 0
    %v546 = vsel %vm326, %v539, 0
    %v548 = vsel %vm326, %v541, 0
    %550 = vmatprep.subr.mxu0 0.0
    %551 = vmatpush1.xpose.msra.mxu0 %v546
    %552 = vmatprep.subr.mxu0 0.0
    %553 = vmatpush1.xpose.msra.mxu0 %v548
    %554 = vmatprep.subr.mxu0 0.0
    %555 = vmatpush1.xpose.msra.mxu0 0.0
    %556 = vmatprep.subr.mxu0 0.0
    %557 = vmatpush1.xpose.msra.mxu0 0.0
    %558 = vmatprep.subr.mxu0 0.0
    %559 = vmatpush1.xpose.msra.mxu0 0.0
    %560 = vmatprep.subr.mxu0 0.0
    %561 = vmatpush1.xpose.msra.mxu0 0.0
    %562 = vmatprep.subr.mxu0 0.0
    %563 = vmatpush1.xpose.msra.mxu0 0.0
    %564 = vmatprep.subr.mxu0 0.0
    %565 = vmatpush1.xpose.msra.mxu0 0.0
    %566 = vmatprep.subr.mxu0 0.0
    %567 = vmatpush1.xpose.msra.mxu0 0.0
    %568 = vmatprep.subr.mxu0 0.0
    %569 = vmatpush1.xpose.msra.mxu0 0.0
    %570 = vmatprep.subr.mxu0 0.0
    %571 = vmatpush1.xpose.msra.mxu0 0.0
    %572 = vmatprep.subr.mxu0 0.0
    %573 = vmatpush1.xpose.msra.mxu0 0.0
    %574 = vmatprep.subr.mxu0 0.0
    %575 = vmatpush1.xpose.msra.mxu0 0.0
    %576 = vmatprep.subr.mxu0 0.0
    %577 = vmatpush1.xpose.msra.mxu0 0.0
    %578 = vmatprep.subr.mxu0 0.0
    %579 = vmatpush1.xpose.msra.mxu0 0.0
    %580 = vmatprep.subr.mxu0 0.0
    %581 = vmatpush1.xpose.msra.mxu0 0.0
    %582 = vmatprep.subr.mxu0 0.0
    %583 = vmatpush1.xpose.msra.mxu0 0.0
    %584 = vmatprep.subr.mxu0 0.0
    %585 = vmatpush1.xpose.msra.mxu0 0.0
    %586 = vmatprep.subr.mxu0 0.0
    %587 = vmatpush1.xpose.msra.mxu0 0.0
    %588 = vmatprep.subr.mxu0 0.0
    %589 = vmatpush1.xpose.msra.mxu0 0.0
    %590 = vmatprep.subr.mxu0 0.0
    %591 = vmatpush1.xpose.msra.mxu0 0.0
    %592 = vmatprep.subr.mxu0 0.0
    %593 = vmatpush1.xpose.msra.mxu0 0.0
    %594 = vmatprep.subr.mxu0 0.0
    %595 = vmatpush1.xpose.msra.mxu0 0.0
    %596 = vmatprep.subr.mxu0 0.0
    %597 = vmatpush1.xpose.msra.mxu0 0.0
    %598 = vmatprep.subr.mxu0 0.0
    %599 = vmatpush1.xpose.msra.mxu0 0.0
    %600 = vmatprep.subr.mxu0 0.0
    %601 = vmatpush1.xpose.msra.mxu0 0.0
    %602 = vmatprep.subr.mxu0 0.0
    %603 = vmatpush1.xpose.msra.mxu0 0.0
    %604 = vmatprep.subr.mxu0 0.0
    %605 = vmatpush1.xpose.msra.mxu0 0.0
    %606 = vmatprep.subr.mxu0 0.0
    %607 = vmatpush1.xpose.msra.mxu0 0.0
    %608 = vmatprep.subr.mxu0 0.0
    %609 = vmatpush1.xpose.msra.mxu0 0.0
    %610 = vmatprep.subr.mxu0 0.0
    %611 = vmatpush1.xpose.msra.mxu0 0.0
    %612 = vmatprep.subr.mxu0 0.0
    %613 = vmatpush1.xpose.msra.mxu0 0.0
    %614 = vmatprep.mubr.f32.mxu0 0.0
    %615 = vmatmul.mubr.f32.gmra.mrb[0].mxu0 %v542
    %v616 = vpop.f32.mrb[0].mxu0
    %v617 = vadd.f32 0.0, %v616
    %v618 = vpop.f32.mrb[0].mxu0
    %619 = vmatprep.mubr.f32.mxu0 0.0
    %620 = vmatmul.mubr.f32.gmra.mrb[0].mxu0 %v544
    %v621 = vpop.f32.mrb[0].mxu0
    %v622 = vadd.f32 0.0, %v621
    %v623 = vpop.f32.mrb[0].mxu0
    %624 = vdwg.mxu0
    %v625 = vmul.f32 %v617, 0.35355338
    %v626 = vmul.f32 %v622, 0.35355338
    %v627 = vadd.f32 %v625, %v415
    %v628 = vadd.f32 %v626, %v415
    %v629 = vsel %vm418, %v627, -inf
    %630 = vmax.xlane.f32.xlu0 %v629
    %v631 = vpop.xlane.xlu0 %630
    %v632 = vsel %vm422, %v628, -inf
    %633 = vmax.xlane.f32.xlu0 %v632
    %v634 = vpop.xlane.xlu0 %633
    %v635 = vsub.f32 %v627, %v631
    %v636 = vsub.f32 %v628, %v634
    %v637 = vmul.f32 %v635, 1.442695
    %v638 = vpow.pop %v637
    %v639 = vmul.f32 %v636, 1.442695
    %v640 = vpow.pop %v639
    %v641 = vsel %vm418, %v638, 0.0
    %642 = vadd.xlane.f32.xlu0 %v641
    %v643 = vpop.xlane.xlu0 %642
    %v644 = vsel %vm422, %v640, 0.0
    %645 = vadd.xlane.f32.xlu0 %v644
    %v646 = vpop.xlane.xlu0 %645
    %v647 = vrcp.pop %v643
    %v648 = vrcp.pop %v646
    %v649 = vmul.f32 %v638, %v647
    %v650 = vmul.f32 %v640, %v648
    %651 = vrot.lane.b32.xlu0 %v307, 56
    %v652 = vpop.permute.xlu0 %651
    %653 = vrot.lane.b32.xlu0 %v312, 56
    %v654 = vpop.permute.xlu0 %653
    %v657 = vsel %vm418, %v649, 0
    %v660 = vsel %vm418, %v650, 0
    %v662 = vsel %vm453, %v654, 0
    %664 = vmatprep.subr.mxu0 0.0
    %665 = vmatpush1.msra.mxu0 %v652
    %666 = vmatprep.subr.mxu0 0.0
    %667 = vmatpush1.msra.mxu0 %v662
    %668 = vmatprep.subr.mxu0 0.0
    %669 = vmatpush1.msra.mxu0 0.0
    %670 = vmatprep.subr.mxu0 0.0
    %671 = vmatpush1.msra.mxu0 0.0
    %672 = vmatprep.subr.mxu0 0.0
    %673 = vmatpush1.msra.mxu0 0.0
    %674 = vmatprep.subr.mxu0 0.0
    %675 = vmatpush1.msra.mxu0 0.0
    %676 = vmatprep.subr.mxu0 0.0
    %677 = vmatpush1.msra.mxu0 0.0
    %678 = vmatprep.subr.mxu0 0.0
    %679 = vmatpush1.msra.mxu0 0.0
    %680 = vmatprep.subr.mxu0 0.0
    %681 = vmatpush1.msra.mxu0 0.0
    %682 = vmatprep.subr.mxu0 0.0
    %683 = vmatpush1.msra.mxu0 0.0
    %684 = vmatprep.subr.mxu0 0.0
    %685 = vmatpush1.msra.mxu0 0.0
    %686 = vmatprep.subr.mxu0 0.0
    %687 = vmatpush1.msra.mxu0 0.0
    %688 = vmatprep.subr.mxu0 0.0
    %689 = vmatpush1.msra.mxu0 0.0
    %690 = vmatprep.subr.mxu0 0.0
    %691 = vmatpush1.msra.mxu0 0.0
    %692 = vmatprep.subr.mxu0 0.0
    %693 = vmatpush1.msra.mxu0 0.0
    %694 = vmatprep.subr.mxu0 0.0
    %695 = vmatpush1.msra.mxu0 0.0
    %696 = vmatprep.subr.mxu0 0.0
    %697 = vmatpush1.msra.mxu0 0.0
    %698 = vmatprep.subr.mxu0 0.0
    %699 = vmatpush1.msra.mxu0 0.0
    %700 = vmatprep.subr.mxu0 0.0
    %701 = vmatpush1.msra.mxu0 0.0
    %702 = vmatprep.subr.mxu0 0.0
    %703 = vmatpush1.msra.mxu0 0.0
    %704 = vmatprep.subr.mxu0 0.0
    %705 = vmatpush1.msra.mxu0 0.0
    %706 = vmatprep.subr.mxu0 0.0
    %707 = vmatpush1.msra.mxu0 0.0
    %708 = vmatprep.subr.mxu0 0.0
    %709 = vmatpush1.msra.mxu0 0.0
    %710 = vmatprep.subr.mxu0 0.0
    %711 = vmatpush1.msra.mxu0 0.0
    %712 = vmatprep.subr.mxu0 0.0
    %713 = vmatpush1.msra.mxu0 0.0
    %714 = vmatprep.subr.mxu0 0.0
    %715 = vmatpush1.msra.mxu0 0.0
    %716 = vmatprep.subr.mxu0 0.0
    %717 = vmatpush1.msra.mxu0 0.0
    %718 = vmatprep.subr.mxu0 0.0
    %719 = vmatpush1.msra.mxu0 0.0
    %720 = vmatprep.subr.mxu0 0.0
    %721 = vmatpush1.msra.mxu0 0.0
    %722 = vmatprep.subr.mxu0 0.0
    %723 = vmatpush1.msra.mxu0 0.0
    %724 = vmatprep.subr.mxu0 0.0
    %725 = vmatpush1.msra.mxu0 0.0
    %726 = vmatprep.subr.mxu0 0.0
    %727 = vmatpush1.msra.mxu0 0.0
    %728 = vmatprep.mubr.f32.mxu0 0.0
    %729 = vmatmul.mubr.f32.gmra.mrb[0].mxu0 %v657
    %v730 = vpop.f32.mrb[0].mxu0
    %v731 = vadd.f32 0.0, %v730
    %v732 = vpop.f32.mrb[0].mxu0
    %733 = vmatprep.mubr.f32.mxu0 0.0
    %734 = vmatmul.mubr.f32.gmra.mrb[0].mxu0 %v660
    %v735 = vpop.f32.mrb[0].mxu0
    %v736 = vadd.f32 0.0, %v735
    %v737 = vpop.f32.mrb[0].mxu0
    %738 = vdwg.mxu0
    %741 = vrot.lane.b32.xlu0 %v731, 8
    %v742 = vpop.permute.xlu0 %741
    %743 = vrot.lane.b32.xlu0 %v736, 8
    %v744 = vpop.permute.xlu0 %743
    %vm747 = vcmask 130112
    %748 = vst.msk [vmem:[#allocation3] sm:$0xff] %vm747, %v742
    %vm749 = vcmask 126016
    %750 = vst.msk [vmem:[#allocation3 + $0x8] sm:$0xf] %vm749, %v744
    %751 = vrot.lane.b32.xlu0 %v307, 112
    %v752 = vpop.permute.xlu0 %751
    %753 = vrot.lane.b32.xlu0 %v312, 112
    %v754 = vpop.permute.xlu0 %753
    %755 = vrot.lane.b32.xlu0 %v307, 80
    %v756 = vpop.permute.xlu0 %755
    %757 = vrot.lane.b32.xlu0 %v312, 80
    %v758 = vpop.permute.xlu0 %757
    %v759 = vsel %vm326, %v752, 0
    %v761 = vsel %vm326, %v754, 0
    %v763 = vsel %vm326, %v756, 0
    %v765 = vsel %vm326, %v758, 0
    %767 = vmatprep.subr.mxu0 0.0
    %768 = vmatpush1.xpose.msra.mxu0 %v763
    %769 = vmatprep.subr.mxu0 0.0
    %770 = vmatpush1.xpose.msra.mxu0 %v765
    %771 = vmatprep.subr.mxu0 0.0
    %772 = vmatpush1.xpose.msra.mxu0 0.0
    %773 = vmatprep.subr.mxu0 0.0
    %774 = vmatpush1.xpose.msra.mxu0 0.0
    %775 = vmatprep.subr.mxu0 0.0
    %776 = vmatpush1.xpose.msra.mxu0 0.0
    %777 = vmatprep.subr.mxu0 0.0
    %778 = vmatpush1.xpose.msra.mxu0 0.0
    %779 = vmatprep.subr.mxu0 0.0
    %780 = vmatpush1.xpose.msra.mxu0 0.0
    %781 = vmatprep.subr.mxu0 0.0
    %782 = vmatpush1.xpose.msra.mxu0 0.0
    %783 = vmatprep.subr.mxu0 0.0
    %784 = vmatpush1.xpose.msra.mxu0 0.0
    %785 = vmatprep.subr.mxu0 0.0
    %786 = vmatpush1.xpose.msra.mxu0 0.0
    %787 = vmatprep.subr.mxu0 0.0
    %788 = vmatpush1.xpose.msra.mxu0 0.0
    %789 = vmatprep.subr.mxu0 0.0
    %790 = vmatpush1.xpose.msra.mxu0 0.0
    %791 = vmatprep.subr.mxu0 0.0
    %792 = vmatpush1.xpose.msra.mxu0 0.0
    %793 = vmatprep.subr.mxu0 0.0
    %794 = vmatpush1.xpose.msra.mxu0 0.0
    %795 = vmatprep.subr.mxu0 0.0
    %796 = vmatpush1.xpose.msra.mxu0 0.0
    %797 = vmatprep.subr.mxu0 0.0
    %798 = vmatpush1.xpose.msra.mxu0 0.0
    %799 = vmatprep.subr.mxu0 0.0
    %800 = vmatpush1.xpose.msra.mxu0 0.0
    %801 = vmatprep.subr.mxu0 0.0
    %802 = vmatpush1.xpose.msra.mxu0 0.0
    %803 = vmatprep.subr.mxu0 0.0
    %804 = vmatpush1.xpose.msra.mxu0 0.0
    %805 = vmatprep.subr.mxu0 0.0
    %806 = vmatpush1.xpose.msra.mxu0 0.0
    %807 = vmatprep.subr.mxu0 0.0
    %808 = vmatpush1.xpose.msra.mxu0 0.0
    %809 = vmatprep.subr.mxu0 0.0
    %810 = vmatpush1.xpose.msra.mxu0 0.0
    %811 = vmatprep.subr.mxu0 0.0
    %812 = vmatpush1.xpose.msra.mxu0 0.0
    %813 = vmatprep.subr.mxu0 0.0
    %814 = vmatpush1.xpose.msra.mxu0 0.0
    %815 = vmatprep.subr.mxu0 0.0
    %816 = vmatpush1.xpose.msra.mxu0 0.0
    %817 = vmatprep.subr.mxu0 0.0
    %818 = vmatpush1.xpose.msra.mxu0 0.0
    %819 = vmatprep.subr.mxu0 0.0
    %820 = vmatpush1.xpose.msra.mxu0 0.0
    %821 = vmatprep.subr.mxu0 0.0
    %822 = vmatpush1.xpose.msra.mxu0 0.0
    %823 = vmatprep.subr.mxu0 0.0
    %824 = vmatpush1.xpose.msra.mxu0 0.0
    %825 = vmatprep.subr.mxu0 0.0
    %826 = vmatpush1.xpose.msra.mxu0 0.0
    %827 = vmatprep.subr.mxu0 0.0
    %828 = vmatpush1.xpose.msra.mxu0 0.0
    %829 = vmatprep.subr.mxu0 0.0
    %830 = vmatpush1.xpose.msra.mxu0 0.0
    %831 = vmatprep.mubr.f32.mxu0 0.0
    %832 = vmatmul.mubr.f32.gmra.mrb[0].mxu0 %v759
    %v833 = vpop.f32.mrb[0].mxu0
    %v834 = vadd.f32 0.0, %v833
    %v835 = vpop.f32.mrb[0].mxu0
    %836 = vmatprep.mubr.f32.mxu0 0.0
    %837 = vmatmul.mubr.f32.gmra.mrb[0].mxu0 %v761
    %v838 = vpop.f32.mrb[0].mxu0
    %v839 = vadd.f32 0.0, %v838
    %v840 = vpop.f32.mrb[0].mxu0
    %841 = vdwg.mxu0
    %v842 = vmul.f32 %v834, 0.35355338
    %v843 = vmul.f32 %v839, 0.35355338
    %v844 = vadd.f32 %v842, %v415
    %v845 = vadd.f32 %v843, %v415
    %v846 = vsel %vm418, %v844, -inf
    %847 = vmax.xlane.f32.xlu0 %v846
    %v848 = vpop.xlane.xlu0 %847
    %v849 = vsel %vm422, %v845, -inf
    %850 = vmax.xlane.f32.xlu0 %v849
    %v851 = vpop.xlane.xlu0 %850
    %v852 = vsub.f32 %v844, %v848
    %v853 = vsub.f32 %v845, %v851
    %v854 = vmul.f32 %v852, 1.442695
    %v855 = vpow.pop %v854
    %v856 = vmul.f32 %v853, 1.442695
    %v857 = vpow.pop %v856
    %v858 = vsel %vm418, %v855, 0.0
    %859 = vadd.xlane.f32.xlu0 %v858
    %v860 = vpop.xlane.xlu0 %859
    %v861 = vsel %vm422, %v857, 0.0
    %862 = vadd.xlane.f32.xlu0 %v861
    %v863 = vpop.xlane.xlu0 %862
    %v864 = vrcp.pop %v860
    %v865 = vrcp.pop %v863
    %v866 = vmul.f32 %v855, %v864
    %v867 = vmul.f32 %v857, %v865
    %868 = vrot.lane.b32.xlu0 %v307, 48
    %v869 = vpop.permute.xlu0 %868
    %870 = vrot.lane.b32.xlu0 %v312, 48
    %v871 = vpop.permute.xlu0 %870
    %v874 = vsel %vm418, %v866, 0
    %v877 = vsel %vm418, %v867, 0
    %v879 = vsel %vm453, %v871, 0
    %881 = vmatprep.subr.mxu0 0.0
    %882 = vmatpush1.msra.mxu0 %v869
    %883 = vmatprep.subr.mxu0 0.0
    %884 = vmatpush1.msra.mxu0 %v879
    %885 = vmatprep.subr.mxu0 0.0
    %886 = vmatpush1.msra.mxu0 0.0
    %887 = vmatprep.subr.mxu0 0.0
    %888 = vmatpush1.msra.mxu0 0.0
    %889 = vmatprep.subr.mxu0 0.0
    %890 = vmatpush1.msra.mxu0 0.0
    %891 = vmatprep.subr.mxu0 0.0
    %892 = vmatpush1.msra.mxu0 0.0
    %893 = vmatprep.subr.mxu0 0.0
    %894 = vmatpush1.msra.mxu0 0.0
    %895 = vmatprep.subr.mxu0 0.0
    %896 = vmatpush1.msra.mxu0 0.0
    %897 = vmatprep.subr.mxu0 0.0
    %898 = vmatpush1.msra.mxu0 0.0
    %899 = vmatprep.subr.mxu0 0.0
    %900 = vmatpush1.msra.mxu0 0.0
    %901 = vmatprep.subr.mxu0 0.0
    %902 = vmatpush1.msra.mxu0 0.0
    %903 = vmatprep.subr.mxu0 0.0
    %904 = vmatpush1.msra.mxu0 0.0
    %905 = vmatprep.subr.mxu0 0.0
    %906 = vmatpush1.msra.mxu0 0.0
    %907 = vmatprep.subr.mxu0 0.0
    %908 = vmatpush1.msra.mxu0 0.0
    %909 = vmatprep.subr.mxu0 0.0
    %910 = vmatpush1.msra.mxu0 0.0
    %911 = vmatprep.subr.mxu0 0.0
    %912 = vmatpush1.msra.mxu0 0.0
    %913 = vmatprep.subr.mxu0 0.0
    %914 = vmatpush1.msra.mxu0 0.0
    %915 = vmatprep.subr.mxu0 0.0
    %916 = vmatpush1.msra.mxu0 0.0
    %917 = vmatprep.subr.mxu0 0.0
    %918 = vmatpush1.msra.mxu0 0.0
    %919 = vmatprep.subr.mxu0 0.0
    %920 = vmatpush1.msra.mxu0 0.0
    %921 = vmatprep.subr.mxu0 0.0
    %922 = vmatpush1.msra.mxu0 0.0
    %923 = vmatprep.subr.mxu0 0.0
    %924 = vmatpush1.msra.mxu0 0.0
    %925 = vmatprep.subr.mxu0 0.0
    %926 = vmatpush1.msra.mxu0 0.0
    %927 = vmatprep.subr.mxu0 0.0
    %928 = vmatpush1.msra.mxu0 0.0
    %929 = vmatprep.subr.mxu0 0.0
    %930 = vmatpush1.msra.mxu0 0.0
    %931 = vmatprep.subr.mxu0 0.0
    %932 = vmatpush1.msra.mxu0 0.0
    %933 = vmatprep.subr.mxu0 0.0
    %934 = vmatpush1.msra.mxu0 0.0
    %935 = vmatprep.subr.mxu0 0.0
    %936 = vmatpush1.msra.mxu0 0.0
    %937 = vmatprep.subr.mxu0 0.0
    %938 = vmatpush1.msra.mxu0 0.0
    %939 = vmatprep.subr.mxu0 0.0
    %940 = vmatpush1.msra.mxu0 0.0
    %941 = vmatprep.subr.mxu0 0.0
    %942 = vmatpush1.msra.mxu0 0.0
    %943 = vmatprep.subr.mxu0 0.0
    %944 = vmatpush1.msra.mxu0 0.0
    %945 = vmatprep.mubr.f32.mxu0 0.0
    %946 = vmatmul.mubr.f32.gmra.mrb[0].mxu0 %v874
    %v947 = vpop.f32.mrb[0].mxu0
    %v948 = vadd.f32 0.0, %v947
    %v949 = vpop.f32.mrb[0].mxu0
    %950 = vmatprep.mubr.f32.mxu0 0.0
    %951 = vmatmul.mubr.f32.gmra.mrb[0].mxu0 %v877
    %v952 = vpop.f32.mrb[0].mxu0
    %v953 = vadd.f32 0.0, %v952
    %v954 = vpop.f32.mrb[0].mxu0
    %955 = vdwg.mxu0
    %958 = vrot.lane.b32.xlu0 %v948, 16
    %v959 = vpop.permute.xlu0 %958
    %960 = vrot.lane.b32.xlu0 %v953, 16
    %v961 = vpop.permute.xlu0 %960
    %vm964 = vcmask 195712
    %965 = vst.msk [vmem:[#allocation3] sm:$0xff] %vm964, %v959
    %vm966 = vcmask 191616
    %967 = vst.msk [vmem:[#allocation3 + $0x8] sm:$0xf] %vm966, %v961
    %968 = vrot.lane.b32.xlu0 %v307, 104
    %v969 = vpop.permute.xlu0 %968
    %970 = vrot.lane.b32.xlu0 %v312, 104
    %v971 = vpop.permute.xlu0 %970
    %972 = vrot.lane.b32.xlu0 %v307, 72
    %v973 = vpop.permute.xlu0 %972
    %974 = vrot.lane.b32.xlu0 %v312, 72
    %v975 = vpop.permute.xlu0 %974
    %v976 = vsel %vm326, %v969, 0
    %v978 = vsel %vm326, %v971, 0
    %v980 = vsel %vm326, %v973, 0
    %v982 = vsel %vm326, %v975, 0
    %984 = vmatprep.subr.mxu0 0.0
    %985 = vmatpush1.xpose.msra.mxu0 %v980
    %986 = vmatprep.subr.mxu0 0.0
    %987 = vmatpush1.xpose.msra.mxu0 %v982
    %988 = vmatprep.subr.mxu0 0.0
    %989 = vmatpush1.xpose.msra.mxu0 0.0
    %990 = vmatprep.subr.mxu0 0.0
    %991 = vmatpush1.xpose.msra.mxu0 0.0
    %992 = vmatprep.subr.mxu0 0.0
    %993 = vmatpush1.xpose.msra.mxu0 0.0
    %994 = vmatprep.subr.mxu0 0.0
    %995 = vmatpush1.xpose.msra.mxu0 0.0
    %996 = vmatprep.subr.mxu0 0.0
    %997 = vmatpush1.xpose.msra.mxu0 0.0
    %998 = vmatprep.subr.mxu0 0.0
    %999 = vmatpush1.xpose.msra.mxu0 0.0
    %1000 = vmatprep.subr.mxu0 0.0
    %1001 = vmatpush1.xpose.msra.mxu0 0.0
    %1002 = vmatprep.subr.mxu0 0.0
    %1003 = vmatpush1.xpose.msra.mxu0 0.0
    %1004 = vmatprep.subr.mxu0 0.0
    %1005 = vmatpush1.xpose.msra.mxu0 0.0
    %1006 = vmatprep.subr.mxu0 0.0
    %1007 = vmatpush1.xpose.msra.mxu0 0.0
    %1008 = vmatprep.subr.mxu0 0.0
    %1009 = vmatpush1.xpose.msra.mxu0 0.0
    %1010 = vmatprep.subr.mxu0 0.0
    %1011 = vmatpush1.xpose.msra.mxu0 0.0
    %1012 = vmatprep.subr.mxu0 0.0
    %1013 = vmatpush1.xpose.msra.mxu0 0.0
    %1014 = vmatprep.subr.mxu0 0.0
    %1015 = vmatpush1.xpose.msra.mxu0 0.0
    %1016 = vmatprep.subr.mxu0 0.0
    %1017 = vmatpush1.xpose.msra.mxu0 0.0
    %1018 = vmatprep.subr.mxu0 0.0
    %1019 = vmatpush1.xpose.msra.mxu0 0.0
    %1020 = vmatprep.subr.mxu0 0.0
    %1021 = vmatpush1.xpose.msra.mxu0 0.0
    %1022 = vmatprep.subr.mxu0 0.0
    %1023 = vmatpush1.xpose.msra.mxu0 0.0
    %1024 = vmatprep.subr.mxu0 0.0
    %1025 = vmatpush1.xpose.msra.mxu0 0.0
    %1026 = vmatprep.subr.mxu0 0.0
    %1027 = vmatpush1.xpose.msra.mxu0 0.0
    %1028 = vmatprep.subr.mxu0 0.0
    %1029 = vmatpush1.xpose.msra.mxu0 0.0
    %1030 = vmatprep.subr.mxu0 0.0
    %1031 = vmatpush1.xpose.msra.mxu0 0.0
    %1032 = vmatprep.subr.mxu0 0.0
    %1033 = vmatpush1.xpose.msra.mxu0 0.0
    %1034 = vmatprep.subr.mxu0 0.0
    %1035 = vmatpush1.xpose.msra.mxu0 0.0
    %1036 = vmatprep.subr.mxu0 0.0
    %1037 = vmatpush1.xpose.msra.mxu0 0.0
    %1038 = vmatprep.subr.mxu0 0.0
    %1039 = vmatpush1.xpose.msra.mxu0 0.0
    %1040 = vmatprep.subr.mxu0 0.0
    %1041 = vmatpush1.xpose.msra.mxu0 0.0
    %1042 = vmatprep.subr.mxu0 0.0
    %1043 = vmatpush1.xpose.msra.mxu0 0.0
    %1044 = vmatprep.subr.mxu0 0.0
    %1045 = vmatpush1.xpose.msra.mxu0 0.0
    %1046 = vmatprep.subr.mxu0 0.0
    %1047 = vmatpush1.xpose.msra.mxu0 0.0
    %1048 = vmatprep.mubr.f32.mxu0 0.0
    %1049 = vmatmul.mubr.f32.gmra.mrb[0].mxu0 %v976
    %v1050 = vpop.f32.mrb[0].mxu0
    %v1051 = vadd.f32 0.0, %v1050
    %v1052 = vpop.f32.mrb[0].mxu0
    %1053 = vmatprep.mubr.f32.mxu0 0.0
    %1054 = vmatmul.mubr.f32.gmra.mrb[0].mxu0 %v978
    %v1055 = vpop.f32.mrb[0].mxu0
    %v1056 = vadd.f32 0.0, %v1055
    %v1057 = vpop.f32.mrb[0].mxu0
    %1058 = vdwg.mxu0
    %v1059 = vmul.f32 %v1051, 0.35355338
    %v1060 = vmul.f32 %v1056, 0.35355338
    %v1061 = vadd.f32 %v1059, %v415
    %v1062 = vadd.f32 %v1060, %v415
    %v1063 = vsel %vm418, %v1061, -inf
    %1064 = vmax.xlane.f32.xlu0 %v1063
    %v1065 = vpop.xlane.xlu0 %1064
    %v1066 = vsel %vm422, %v1062, -inf
    %1067 = vmax.xlane.f32.xlu0 %v1066
    %v1068 = vpop.xlane.xlu0 %1067
    %v1069 = vsub.f32 %v1061, %v1065
    %v1070 = vsub.f32 %v1062, %v1068
    %v1071 = vmul.f32 %v1069, 1.442695
    %v1072 = vpow.pop %v1071
    %v1073 = vmul.f32 %v1070, 1.442695
    %v1074 = vpow.pop %v1073
    %v1075 = vsel %vm418, %v1072, 0.0
    %1076 = vadd.xlane.f32.xlu0 %v1075
    %v1077 = vpop.xlane.xlu0 %1076
    %v1078 = vsel %vm422, %v1074, 0.0
    %1079 = vadd.xlane.f32.xlu0 %v1078
    %v1080 = vpop.xlane.xlu0 %1079
    %v1081 = vrcp.pop %v1077
    %v1082 = vrcp.pop %v1080
    %v1083 = vmul.f32 %v1072, %v1081
    %v1084 = vmul.f32 %v1074, %v1082
    %1085 = vrot.lane.b32.xlu0 %v307, 40
    %v1086 = vpop.permute.xlu0 %1085
    %1087 = vrot.lane.b32.xlu0 %v312, 40
    %v1088 = vpop.permute.xlu0 %1087
    %v1091 = vsel %vm418, %v1083, 0
    %v1094 = vsel %vm418, %v1084, 0
    %v1096 = vsel %vm453, %v1088, 0
    %1098 = vmatprep.subr.mxu0 0.0
    %1099 = vmatpush1.msra.mxu0 %v1086
    %1100 = vmatprep.subr.mxu0 0.0
    %1101 = vmatpush1.msra.mxu0 %v1096
    %1102 = vmatprep.subr.mxu0 0.0
    %1103 = vmatpush1.msra.mxu0 0.0
    %1104 = vmatprep.subr.mxu0 0.0
    %1105 = vmatpush1.msra.mxu0 0.0
    %1106 = vmatprep.subr.mxu0 0.0
    %1107 = vmatpush1.msra.mxu0 0.0
    %1108 = vmatprep.subr.mxu0 0.0
    %1109 = vmatpush1.msra.mxu0 0.0
    %1110 = vmatprep.subr.mxu0 0.0
    %1111 = vmatpush1.msra.mxu0 0.0
    %1112 = vmatprep.subr.mxu0 0.0
    %1113 = vmatpush1.msra.mxu0 0.0
    %1114 = vmatprep.subr.mxu0 0.0
    %1115 = vmatpush1.msra.mxu0 0.0
    %1116 = vmatprep.subr.mxu0 0.0
    %1117 = vmatpush1.msra.mxu0 0.0
    %1118 = vmatprep.subr.mxu0 0.0
    %1119 = vmatpush1.msra.mxu0 0.0
    %1120 = vmatprep.subr.mxu0 0.0
    %1121 = vmatpush1.msra.mxu0 0.0
    %1122 = vmatprep.subr.mxu0 0.0
    %1123 = vmatpush1.msra.mxu0 0.0
    %1124 = vmatprep.subr.mxu0 0.0
    %1125 = vmatpush1.msra.mxu0 0.0
    %1126 = vmatprep.subr.mxu0 0.0
    %1127 = vmatpush1.msra.mxu0 0.0
    %1128 = vmatprep.subr.mxu0 0.0
    %1129 = vmatpush1.msra.mxu0 0.0
    %1130 = vmatprep.subr.mxu0 0.0
    %1131 = vmatpush1.msra.mxu0 0.0
    %1132 = vmatprep.subr.mxu0 0.0
    %1133 = vmatpush1.msra.mxu0 0.0
    %1134 = vmatprep.subr.mxu0 0.0
    %1135 = vmatpush1.msra.mxu0 0.0
    %1136 = vmatprep.subr.mxu0 0.0
    %1137 = vmatpush1.msra.mxu0 0.0
    %1138 = vmatprep.subr.mxu0 0.0
    %1139 = vmatpush1.msra.mxu0 0.0
    %1140 = vmatprep.subr.mxu0 0.0
    %1141 = vmatpush1.msra.mxu0 0.0
    %1142 = vmatprep.subr.mxu0 0.0
    %1143 = vmatpush1.msra.mxu0 0.0
    %1144 = vmatprep.subr.mxu0 0.0
    %1145 = vmatpush1.msra.mxu0 0.0
    %1146 = vmatprep.subr.mxu0 0.0
    %1147 = vmatpush1.msra.mxu0 0.0
    %1148 = vmatprep.subr.mxu0 0.0
    %1149 = vmatpush1.msra.mxu0 0.0
    %1150 = vmatprep.subr.mxu0 0.0
    %1151 = vmatpush1.msra.mxu0 0.0
    %1152 = vmatprep.subr.mxu0 0.0
    %1153 = vmatpush1.msra.mxu0 0.0
    %1154 = vmatprep.subr.mxu0 0.0
    %1155 = vmatpush1.msra.mxu0 0.0
    %1156 = vmatprep.subr.mxu0 0.0
    %1157 = vmatpush1.msra.mxu0 0.0
    %1158 = vmatprep.subr.mxu0 0.0
    %1159 = vmatpush1.msra.mxu0 0.0
    %1160 = vmatprep.subr.mxu0 0.0
    %1161 = vmatpush1.msra.mxu0 0.0
    %1162 = vmatprep.mubr.f32.mxu0 0.0
    %1163 = vmatmul.mubr.f32.gmra.mrb[0].mxu0 %v1091
    %v1164 = vpop.f32.mrb[0].mxu0
    %v1165 = vadd.f32 0.0, %v1164
    %v1166 = vpop.f32.mrb[0].mxu0
    %1167 = vmatprep.mubr.f32.mxu0 0.0
    %1168 = vmatmul.mubr.f32.gmra.mrb[0].mxu0 %v1094
    %v1169 = vpop.f32.mrb[0].mxu0
    %v1170 = vadd.f32 0.0, %v1169
    %v1171 = vpop.f32.mrb[0].mxu0
    %1172 = vdwg.mxu0
    %1175 = vrot.lane.b32.xlu0 %v1165, 24
    %v1176 = vpop.permute.xlu0 %1175
    %1177 = vrot.lane.b32.xlu0 %v1170, 24
    %v1178 = vpop.permute.xlu0 %1177
    %vm1181 = vcmask 261312
    %1182 = vst.msk [vmem:[#allocation3] sm:$0xff] %vm1181, %v1176
    %vm1183 = vcmask 257216
    %1184 = vst.msk [vmem:[#allocation3 + $0x8] sm:$0xf] %vm1183, %v1178
    %v1186 = vrot.slane %v312, 4
    %v1187 = vrot.slane %v317, 4
    %v1188 = vsel %vm453, %v1186, %v1187
    %1189 = vrot.lane.b32.xlu0 %v1188, 96
    %v1190 = vpop.permute.xlu0 %1189
    %1191 = vrot.lane.b32.xlu0 %v1187, 96
    %v1192 = vpop.permute.xlu0 %1191
    %v1193 = vsel %vm326, %v1188, 0
    %v1195 = vsel %vm326, %v1187, 0
    %v1197 = vsel %vm326, %v1190, 0
    %v1199 = vsel %vm326, %v1192, 0
    %1201 = vmatprep.subr.mxu0 0.0
    %1202 = vmatpush1.xpose.msra.mxu0 %v1197
    %1203 = vmatprep.subr.mxu0 0.0
    %1204 = vmatpush1.xpose.msra.mxu0 %v1199
    %1205 = vmatprep.subr.mxu0 0.0
    %1206 = vmatpush1.xpose.msra.mxu0 0.0
    %1207 = vmatprep.subr.mxu0 0.0
    %1208 = vmatpush1.xpose.msra.mxu0 0.0
    %1209 = vmatprep.subr.mxu0 0.0
    %1210 = vmatpush1.xpose.msra.mxu0 0.0
    %1211 = vmatprep.subr.mxu0 0.0
    %1212 = vmatpush1.xpose.msra.mxu0 0.0
    %1213 = vmatprep.subr.mxu0 0.0
    %1214 = vmatpush1.xpose.msra.mxu0 0.0
    %1215 = vmatprep.subr.mxu0 0.0
    %1216 = vmatpush1.xpose.msra.mxu0 0.0
    %1217 = vmatprep.subr.mxu0 0.0
    %1218 = vmatpush1.xpose.msra.mxu0 0.0
    %1219 = vmatprep.subr.mxu0 0.0
    %1220 = vmatpush1.xpose.msra.mxu0 0.0
    %1221 = vmatprep.subr.mxu0 0.0
    %1222 = vmatpush1.xpose.msra.mxu0 0.0
    %1223 = vmatprep.subr.mxu0 0.0
    %1224 = vmatpush1.xpose.msra.mxu0 0.0
    %1225 = vmatprep.subr.mxu0 0.0
    %1226 = vmatpush1.xpose.msra.mxu0 0.0
    %1227 = vmatprep.subr.mxu0 0.0
    %1228 = vmatpush1.xpose.msra.mxu0 0.0
    %1229 = vmatprep.subr.mxu0 0.0
    %1230 = vmatpush1.xpose.msra.mxu0 0.0
    %1231 = vmatprep.subr.mxu0 0.0
    %1232 = vmatpush1.xpose.msra.mxu0 0.0
    %1233 = vmatprep.subr.mxu0 0.0
    %1234 = vmatpush1.xpose.msra.mxu0 0.0
    %1235 = vmatprep.subr.mxu0 0.0
    %1236 = vmatpush1.xpose.msra.mxu0 0.0
    %1237 = vmatprep.subr.mxu0 0.0
    %1238 = vmatpush1.xpose.msra.mxu0 0.0
    %1239 = vmatprep.subr.mxu0 0.0
    %1240 = vmatpush1.xpose.msra.mxu0 0.0
    %1241 = vmatprep.subr.mxu0 0.0
    %1242 = vmatpush1.xpose.msra.mxu0 0.0
    %1243 = vmatprep.subr.mxu0 0.0
    %1244 = vmatpush1.xpose.msra.mxu0 0.0
    %1245 = vmatprep.subr.mxu0 0.0
    %1246 = vmatpush1.xpose.msra.mxu0 0.0
    %1247 = vmatprep.subr.mxu0 0.0
    %1248 = vmatpush1.xpose.msra.mxu0 0.0
    %1249 = vmatprep.subr.mxu0 0.0
    %1250 = vmatpush1.xpose.msra.mxu0 0.0
    %1251 = vmatprep.subr.mxu0 0.0
    %1252 = vmatpush1.xpose.msra.mxu0 0.0
    %1253 = vmatprep.subr.mxu0 0.0
    %1254 = vmatpush1.xpose.msra.mxu0 0.0
    %1255 = vmatprep.subr.mxu0 0.0
    %1256 = vmatpush1.xpose.msra.mxu0 0.0
    %1257 = vmatprep.subr.mxu0 0.0
    %1258 = vmatpush1.xpose.msra.mxu0 0.0
    %1259 = vmatprep.subr.mxu0 0.0
    %1260 = vmatpush1.xpose.msra.mxu0 0.0
    %1261 = vmatprep.subr.mxu0 0.0
    %1262 = vmatpush1.xpose.msra.mxu0 0.0
    %1263 = vmatprep.subr.mxu0 0.0
    %1264 = vmatpush1.xpose.msra.mxu0 0.0
    %1265 = vmatprep.mubr.f32.mxu0 0.0
    %1266 = vmatmul.mubr.f32.gmra.mrb[0].mxu0 %v1193
    %v1267 = vpop.f32.mrb[0].mxu0
    %v1268 = vadd.f32 0.0, %v1267
    %v1269 = vpop.f32.mrb[0].mxu0
    %1270 = vmatprep.mubr.f32.mxu0 0.0
    %1271 = vmatmul.mubr.f32.gmra.mrb[0].mxu0 %v1195
    %v1272 = vpop.f32.mrb[0].mxu0
    %v1273 = vadd.f32 0.0, %v1272
    %v1274 = vpop.f32.mrb[0].mxu0
    %1275 = vdwg.mxu0
    %v1276 = vmul.f32 %v1268, 0.35355338
    %v1277 = vmul.f32 %v1273, 0.35355338
    %v1278 = vlaneseq
    %v1279 = vshrl.u32 %v1278, 7
    %v1280 = vsub.s32 1, %v1279
    %v1281 = vrot.slane %v216, %v1280
    %v1282 = vadd.f32 %v1276, %v1281
    %v1283 = vadd.f32 %v1277, %v1281
    %v1284 = vsel %vm418, %v1282, -inf
    %1285 = vmax.xlane.f32.xlu0 %v1284
    %v1286 = vpop.xlane.xlu0 %1285
    %v1287 = vsel %vm422, %v1283, -inf
    %1288 = vmax.xlane.f32.xlu0 %v1287
    %v1289 = vpop.xlane.xlu0 %1288
    %v1290 = vsub.f32 %v1282, %v1286
    %v1291 = vsub.f32 %v1283, %v1289
    %v1292 = vmul.f32 %v1290, 1.442695
    %v1293 = vpow.pop %v1292
    %v1294 = vmul.f32 %v1291, 1.442695
    %v1295 = vpow.pop %v1294
    %v1296 = vsel %vm418, %v1293, 0.0
    %1297 = vadd.xlane.f32.xlu0 %v1296
    %v1298 = vpop.xlane.xlu0 %1297
    %v1299 = vsel %vm422, %v1295, 0.0
    %1300 = vadd.xlane.f32.xlu0 %v1299
    %v1301 = vpop.xlane.xlu0 %1300
    %v1302 = vrcp.pop %v1298
    %v1303 = vrcp.pop %v1301
    %v1304 = vmul.f32 %v1293, %v1302
    %v1305 = vmul.f32 %v1295, %v1303
    %1306 = vrot.lane.b32.xlu0 %v1188, 64
    %v1307 = vpop.permute.xlu0 %1306
    %1308 = vrot.lane.b32.xlu0 %v1187, 64
    %v1309 = vpop.permute.xlu0 %1308
    %v1312 = vsel %vm418, %v1304, 0
    %v1315 = vsel %vm418, %v1305, 0
    %v1317 = vsel %vm453, %v1309, 0
    %1319 = vmatprep.subr.mxu0 0.0
    %1320 = vmatpush1.msra.mxu0 %v1307
    %1321 = vmatprep.subr.mxu0 0.0
    %1322 = vmatpush1.msra.mxu0 %v1317
    %1323 = vmatprep.subr.mxu0 0.0
    %1324 = vmatpush1.msra.mxu0 0.0
    %1325 = vmatprep.subr.mxu0 0.0
    %1326 = vmatpush1.msra.mxu0 0.0
    %1327 = vmatprep.subr.mxu0 0.0
    %1328 = vmatpush1.msra.mxu0 0.0
    %1329 = vmatprep.subr.mxu0 0.0
    %1330 = vmatpush1.msra.mxu0 0.0
    %1331 = vmatprep.subr.mxu0 0.0
    %1332 = vmatpush1.msra.mxu0 0.0
    %1333 = vmatprep.subr.mxu0 0.0
    %1334 = vmatpush1.msra.mxu0 0.0
    %1335 = vmatprep.subr.mxu0 0.0
    %1336 = vmatpush1.msra.mxu0 0.0
    %1337 = vmatprep.subr.mxu0 0.0
    %1338 = vmatpush1.msra.mxu0 0.0
    %1339 = vmatprep.subr.mxu0 0.0
    %1340 = vmatpush1.msra.mxu0 0.0
    %1341 = vmatprep.subr.mxu0 0.0
    %1342 = vmatpush1.msra.mxu0 0.0
    %1343 = vmatprep.subr.mxu0 0.0
    %1344 = vmatpush1.msra.mxu0 0.0
    %1345 = vmatprep.subr.mxu0 0.0
    %1346 = vmatpush1.msra.mxu0 0.0
    %1347 = vmatprep.subr.mxu0 0.0
    %1348 = vmatpush1.msra.mxu0 0.0
    %1349 = vmatprep.subr.mxu0 0.0
    %1350 = vmatpush1.msra.mxu0 0.0
    %1351 = vmatprep.subr.mxu0 0.0
    %1352 = vmatpush1.msra.mxu0 0.0
    %1353 = vmatprep.subr.mxu0 0.0
    %1354 = vmatpush1.msra.mxu0 0.0
    %1355 = vmatprep.subr.mxu0 0.0
    %1356 = vmatpush1.msra.mxu0 0.0
    %1357 = vmatprep.subr.mxu0 0.0
    %1358 = vmatpush1.msra.mxu0 0.0
    %1359 = vmatprep.subr.mxu0 0.0
    %1360 = vmatpush1.msra.mxu0 0.0
    %1361 = vmatprep.subr.mxu0 0.0
    %1362 = vmatpush1.msra.mxu0 0.0
    %1363 = vmatprep.subr.mxu0 0.0
    %1364 = vmatpush1.msra.mxu0 0.0
    %1365 = vmatprep.subr.mxu0 0.0
    %1366 = vmatpush1.msra.mxu0 0.0
    %1367 = vmatprep.subr.mxu0 0.0
    %1368 = vmatpush1.msra.mxu0 0.0
    %1369 = vmatprep.subr.mxu0 0.0
    %1370 = vmatpush1.msra.mxu0 0.0
    %1371 = vmatprep.subr.mxu0 0.0
    %1372 = vmatpush1.msra.mxu0 0.0
    %1373 = vmatprep.subr.mxu0 0.0
    %1374 = vmatpush1.msra.mxu0 0.0
    %1375 = vmatprep.subr.mxu0 0.0
    %1376 = vmatpush1.msra.mxu0 0.0
    %1377 = vmatprep.subr.mxu0 0.0
    %1378 = vmatpush1.msra.mxu0 0.0
    %1379 = vmatprep.subr.mxu0 0.0
    %1380 = vmatpush1.msra.mxu0 0.0
    %1381 = vmatprep.subr.mxu0 0.0
    %1382 = vmatpush1.msra.mxu0 0.0
    %1383 = vmatprep.mubr.f32.mxu0 0.0
    %1384 = vmatmul.mubr.f32.gmra.mrb[0].mxu0 %v1312
    %v1385 = vpop.f32.mrb[0].mxu0
    %v1386 = vadd.f32 0.0, %v1385
    %v1387 = vpop.f32.mrb[0].mxu0
    %1388 = vmatprep.mubr.f32.mxu0 0.0
    %1389 = vmatmul.mubr.f32.gmra.mrb[0].mxu0 %v1315
    %v1390 = vpop.f32.mrb[0].mxu0
    %v1391 = vadd.f32 0.0, %v1390
    %v1392 = vpop.f32.mrb[0].mxu0
    %1393 = vdwg.mxu0
    %1394 = vst.msk [vmem:[#allocation3 + $0xc] sm:$0xff] %vm326, %v1386
    %1395 = vst.msk [vmem:[#allocation3 + $0x14] sm:$0xf] %vm532, %v1391
    %1396 = vrot.lane.b32.xlu0 %v1188, 120
    %v1397 = vpop.permute.xlu0 %1396
    %1398 = vrot.lane.b32.xlu0 %v1187, 120
    %v1399 = vpop.permute.xlu0 %1398
    %1400 = vrot.lane.b32.xlu0 %v1188, 88
    %v1401 = vpop.permute.xlu0 %1400
    %1402 = vrot.lane.b32.xlu0 %v1187, 88
    %v1403 = vpop.permute.xlu0 %1402
    %v1404 = vsel %vm326, %v1397, 0
    %v1406 = vsel %vm326, %v1399, 0
    %v1408 = vsel %vm326, %v1401, 0
    %v1410 = vsel %vm326, %v1403, 0
    %1412 = vmatprep.subr.mxu0 0.0
    %1413 = vmatpush1.xpose.msra.mxu0 %v1408
    %1414 = vmatprep.subr.mxu0 0.0
    %1415 = vmatpush1.xpose.msra.mxu0 %v1410
    %1416 = vmatprep.subr.mxu0 0.0
    %1417 = vmatpush1.xpose.msra.mxu0 0.0
    %1418 = vmatprep.subr.mxu0 0.0
    %1419 = vmatpush1.xpose.msra.mxu0 0.0
    %1420 = vmatprep.subr.mxu0 0.0
    %1421 = vmatpush1.xpose.msra.mxu0 0.0
    %1422 = vmatprep.subr.mxu0 0.0
    %1423 = vmatpush1.xpose.msra.mxu0 0.0
    %1424 = vmatprep.subr.mxu0 0.0
    %1425 = vmatpush1.xpose.msra.mxu0 0.0
    %1426 = vmatprep.subr.mxu0 0.0
    %1427 = vmatpush1.xpose.msra.mxu0 0.0
    %1428 = vmatprep.subr.mxu0 0.0
    %1429 = vmatpush1.xpose.msra.mxu0 0.0
    %1430 = vmatprep.subr.mxu0 0.0
    %1431 = vmatpush1.xpose.msra.mxu0 0.0
    %1432 = vmatprep.subr.mxu0 0.0
    %1433 = vmatpush1.xpose.msra.mxu0 0.0
    %1434 = vmatprep.subr.mxu0 0.0
    %1435 = vmatpush1.xpose.msra.mxu0 0.0
    %1436 = vmatprep.subr.mxu0 0.0
    %1437 = vmatpush1.xpose.msra.mxu0 0.0
    %1438 = vmatprep.subr.mxu0 0.0
    %1439 = vmatpush1.xpose.msra.mxu0 0.0
    %1440 = vmatprep.subr.mxu0 0.0
    %1441 = vmatpush1.xpose.msra.mxu0 0.0
    %1442 = vmatprep.subr.mxu0 0.0
    %1443 = vmatpush1.xpose.msra.mxu0 0.0
    %1444 = vmatprep.subr.mxu0 0.0
    %1445 = vmatpush1.xpose.msra.mxu0 0.0
    %1446 = vmatprep.subr.mxu0 0.0
    %1447 = vmatpush1.xpose.msra.mxu0 0.0
    %1448 = vmatprep.subr.mxu0 0.0
    %1449 = vmatpush1.xpose.msra.mxu0 0.0
    %1450 = vmatprep.subr.mxu0 0.0
    %1451 = vmatpush1.xpose.msra.mxu0 0.0
    %1452 = vmatprep.subr.mxu0 0.0
    %1453 = vmatpush1.xpose.msra.mxu0 0.0
    %1454 = vmatprep.subr.mxu0 0.0
    %1455 = vmatpush1.xpose.msra.mxu0 0.0
    %1456 = vmatprep.subr.mxu0 0.0
    %1457 = vmatpush1.xpose.msra.mxu0 0.0
    %1458 = vmatprep.subr.mxu0 0.0
    %1459 = vmatpush1.xpose.msra.mxu0 0.0
    %1460 = vmatprep.subr.mxu0 0.0
    %1461 = vmatpush1.xpose.msra.mxu0 0.0
    %1462 = vmatprep.subr.mxu0 0.0
    %1463 = vmatpush1.xpose.msra.mxu0 0.0
    %1464 = vmatprep.subr.mxu0 0.0
    %1465 = vmatpush1.xpose.msra.mxu0 0.0
    %1466 = vmatprep.subr.mxu0 0.0
    %1467 = vmatpush1.xpose.msra.mxu0 0.0
    %1468 = vmatprep.subr.mxu0 0.0
    %1469 = vmatpush1.xpose.msra.mxu0 0.0
    %1470 = vmatprep.subr.mxu0 0.0
    %1471 = vmatpush1.xpose.msra.mxu0 0.0
    %1472 = vmatprep.subr.mxu0 0.0
    %1473 = vmatpush1.xpose.msra.mxu0 0.0
    %1474 = vmatprep.subr.mxu0 0.0
    %1475 = vmatpush1.xpose.msra.mxu0 0.0
    %1476 = vmatprep.mubr.f32.mxu0 0.0
    %1477 = vmatmul.mubr.f32.gmra.mrb[0].mxu0 %v1404
    %v1478 = vpop.f32.mrb[0].mxu0
    %v1479 = vadd.f32 0.0, %v1478
    %v1480 = vpop.f32.mrb[0].mxu0
    %1481 = vmatprep.mubr.f32.mxu0 0.0
    %1482 = vmatmul.mubr.f32.gmra.mrb[0].mxu0 %v1406
    %v1483 = vpop.f32.mrb[0].mxu0
    %v1484 = vadd.f32 0.0, %v1483
    %v1485 = vpop.f32.mrb[0].mxu0
    %1486 = vdwg.mxu0
    %v1487 = vmul.f32 %v1479, 0.35355338
    %v1488 = vmul.f32 %v1484, 0.35355338
    %v1489 = vadd.f32 %v1487, %v1281
    %v1490 = vadd.f32 %v1488, %v1281
    %v1491 = vsel %vm418, %v1489, -inf
    %1492 = vmax.xlane.f32.xlu0 %v1491
    %v1493 = vpop.xlane.xlu0 %1492
    %v1494 = vsel %vm422, %v1490, -inf
    %1495 = vmax.xlane.f32.xlu0 %v1494
    %v1496 = vpop.xlane.xlu0 %1495
    %v1497 = vsub.f32 %v1489, %v1493
    %v1498 = vsub.f32 %v1490, %v1496
    %v1499 = vmul.f32 %v1497, 1.442695
    %v1500 = vpow.pop %v1499
    %v1501 = vmul.f32 %v1498, 1.442695
    %v1502 = vpow.pop %v1501
    %v1503 = vsel %vm418, %v1500, 0.0
    %1504 = vadd.xlane.f32.xlu0 %v1503
    %v1505 = vpop.xlane.xlu0 %1504
    %v1506 = vsel %vm422, %v1502, 0.0
    %1507 = vadd.xlane.f32.xlu0 %v1506
    %v1508 = vpop.xlane.xlu0 %1507
    %v1509 = vrcp.pop %v1505
    %v1510 = vrcp.pop %v1508
    %v1511 = vmul.f32 %v1500, %v1509
    %v1512 = vmul.f32 %v1502, %v1510
    %1513 = vrot.lane.b32.xlu0 %v1188, 56
    %v1514 = vpop.permute.xlu0 %1513
    %1515 = vrot.lane.b32.xlu0 %v1187, 56
    %v1516 = vpop.permute.xlu0 %1515
    %v1519 = vsel %vm418, %v1511, 0
    %v1522 = vsel %vm418, %v1512, 0
    %v1524 = vsel %vm453, %v1516, 0
    %1526 = vmatprep.subr.mxu0 0.0
    %1527 = vmatpush1.msra.mxu0 %v1514
    %1528 = vmatprep.subr.mxu0 0.0
    %1529 = vmatpush1.msra.mxu0 %v1524
    %1530 = vmatprep.subr.mxu0 0.0
    %1531 = vmatpush1.msra.mxu0 0.0
    %1532 = vmatprep.subr.mxu0 0.0
    %1533 = vmatpush1.msra.mxu0 0.0
    %1534 = vmatprep.subr.mxu0 0.0
    %1535 = vmatpush1.msra.mxu0 0.0
    %1536 = vmatprep.subr.mxu0 0.0
    %1537 = vmatpush1.msra.mxu0 0.0
    %1538 = vmatprep.subr.mxu0 0.0
    %1539 = vmatpush1.msra.mxu0 0.0
    %1540 = vmatprep.subr.mxu0 0.0
    %1541 = vmatpush1.msra.mxu0 0.0
    %1542 = vmatprep.subr.mxu0 0.0
    %1543 = vmatpush1.msra.mxu0 0.0
    %1544 = vmatprep.subr.mxu0 0.0
    %1545 = vmatpush1.msra.mxu0 0.0
    %1546 = vmatprep.subr.mxu0 0.0
    %1547 = vmatpush1.msra.mxu0 0.0
    %1548 = vmatprep.subr.mxu0 0.0
    %1549 = vmatpush1.msra.mxu0 0.0
    %1550 = vmatprep.subr.mxu0 0.0
    %1551 = vmatpush1.msra.mxu0 0.0
    %1552 = vmatprep.subr.mxu0 0.0
    %1553 = vmatpush1.msra.mxu0 0.0
    %1554 = vmatprep.subr.mxu0 0.0
    %1555 = vmatpush1.msra.mxu0 0.0
    %1556 = vmatprep.subr.mxu0 0.0
    %1557 = vmatpush1.msra.mxu0 0.0
    %1558 = vmatprep.subr.mxu0 0.0
    %1559 = vmatpush1.msra.mxu0 0.0
    %1560 = vmatprep.subr.mxu0 0.0
    %1561 = vmatpush1.msra.mxu0 0.0
    %1562 = vmatprep.subr.mxu0 0.0
    %1563 = vmatpush1.msra.mxu0 0.0
    %1564 = vmatprep.subr.mxu0 0.0
    %1565 = vmatpush1.msra.mxu0 0.0
    %1566 = vmatprep.subr.mxu0 0.0
    %1567 = vmatpush1.msra.mxu0 0.0
    %1568 = vmatprep.subr.mxu0 0.0
    %1569 = vmatpush1.msra.mxu0 0.0
    %1570 = vmatprep.subr.mxu0 0.0
    %1571 = vmatpush1.msra.mxu0 0.0
    %1572 = vmatprep.subr.mxu0 0.0
    %1573 = vmatpush1.msra.mxu0 0.0
    %1574 = vmatprep.subr.mxu0 0.0
    %1575 = vmatpush1.msra.mxu0 0.0
    %1576 = vmatprep.subr.mxu0 0.0
    %1577 = vmatpush1.msra.mxu0 0.0
    %1578 = vmatprep.subr.mxu0 0.0
    %1579 = vmatpush1.msra.mxu0 0.0
    %1580 = vmatprep.subr.mxu0 0.0
    %1581 = vmatpush1.msra.mxu0 0.0
    %1582 = vmatprep.subr.mxu0 0.0
    %1583 = vmatpush1.msra.mxu0 0.0
    %1584 = vmatprep.subr.mxu0 0.0
    %1585 = vmatpush1.msra.mxu0 0.0
    %1586 = vmatprep.subr.mxu0 0.0
    %1587 = vmatpush1.msra.mxu0 0.0
    %1588 = vmatprep.subr.mxu0 0.0
    %1589 = vmatpush1.msra.mxu0 0.0
    %1590 = vmatprep.mubr.f32.mxu0 0.0
    %1591 = vmatmul.mubr.f32.gmra.mrb[0].mxu0 %v1519
    %v1592 = vpop.f32.mrb[0].mxu0
    %v1593 = vadd.f32 0.0, %v1592
    %v1594 = vpop.f32.mrb[0].mxu0
    %1595 = vmatprep.mubr.f32.mxu0 0.0
    %1596 = vmatmul.mubr.f32.gmra.mrb[0].mxu0 %v1522
    %v1597 = vpop.f32.mrb[0].mxu0
    %v1598 = vadd.f32 0.0, %v1597
    %v1599 = vpop.f32.mrb[0].mxu0
    %1600 = vdwg.mxu0
    %1603 = vrot.lane.b32.xlu0 %v1593, 8
    %v1604 = vpop.permute.xlu0 %1603
    %1605 = vrot.lane.b32.xlu0 %v1598, 8
    %v1606 = vpop.permute.xlu0 %1605
    %1609 = vst.msk [vmem:[#allocation3 + $0xc] sm:$0xff] %vm747, %v1604
    %1610 = vst.msk [vmem:[#allocation3 + $0x14] sm:$0xf] %vm749, %v1606
    %1611 = vrot.lane.b32.xlu0 %v1188, 112
    %v1612 = vpop.permute.xlu0 %1611
    %1613 = vrot.lane.b32.xlu0 %v1187, 112
    %v1614 = vpop.permute.xlu0 %1613
    %1615 = vrot.lane.b32.xlu0 %v1188, 80
    %v1616 = vpop.permute.xlu0 %1615
    %1617 = vrot.lane.b32.xlu0 %v1187, 80
    %v1618 = vpop.permute.xlu0 %1617
    %v1619 = vsel %vm326, %v1612, 0
    %v1621 = vsel %vm326, %v1614, 0
    %v1623 = vsel %vm326, %v1616, 0
    %v1625 = vsel %vm326, %v1618, 0
    %1627 = vmatprep.subr.mxu0 0.0
    %1628 = vmatpush1.xpose.msra.mxu0 %v1623
    %1629 = vmatprep.subr.mxu0 0.0
    %1630 = vmatpush1.xpose.msra.mxu0 %v1625
    %1631 = vmatprep.subr.mxu0 0.0
    %1632 = vmatpush1.xpose.msra.mxu0 0.0
    %1633 = vmatprep.subr.mxu0 0.0
    %1634 = vmatpush1.xpose.msra.mxu0 0.0
    %1635 = vmatprep.subr.mxu0 0.0
    %1636 = vmatpush1.xpose.msra.mxu0 0.0
    %1637 = vmatprep.subr.mxu0 0.0
    %1638 = vmatpush1.xpose.msra.mxu0 0.0
    %1639 = vmatprep.subr.mxu0 0.0
    %1640 = vmatpush1.xpose.msra.mxu0 0.0
    %1641 = vmatprep.subr.mxu0 0.0
    %1642 = vmatpush1.xpose.msra.mxu0 0.0
    %1643 = vmatprep.subr.mxu0 0.0
    %1644 = vmatpush1.xpose.msra.mxu0 0.0
    %1645 = vmatprep.subr.mxu0 0.0
    %1646 = vmatpush1.xpose.msra.mxu0 0.0
    %1647 = vmatprep.subr.mxu0 0.0
    %1648 = vmatpush1.xpose.msra.mxu0 0.0
    %1649 = vmatprep.subr.mxu0 0.0
    %1650 = vmatpush1.xpose.msra.mxu0 0.0
    %1651 = vmatprep.subr.mxu0 0.0
    %1652 = vmatpush1.xpose.msra.mxu0 0.0
    %1653 = vmatprep.subr.mxu0 0.0
    %1654 = vmatpush1.xpose.msra.mxu0 0.0
    %1655 = vmatprep.subr.mxu0 0.0
    %1656 = vmatpush1.xpose.msra.mxu0 0.0
    %1657 = vmatprep.subr.mxu0 0.0
    %1658 = vmatpush1.xpose.msra.mxu0 0.0
    %1659 = vmatprep.subr.mxu0 0.0
    %1660 = vmatpush1.xpose.msra.mxu0 0.0
    %1661 = vmatprep.subr.mxu0 0.0
    %1662 = vmatpush1.xpose.msra.mxu0 0.0
    %1663 = vmatprep.subr.mxu0 0.0
    %1664 = vmatpush1.xpose.msra.mxu0 0.0
    %1665 = vmatprep.subr.mxu0 0.0
    %1666 = vmatpush1.xpose.msra.mxu0 0.0
    %1667 = vmatprep.subr.mxu0 0.0
    %1668 = vmatpush1.xpose.msra.mxu0 0.0
    %1669 = vmatprep.subr.mxu0 0.0
    %1670 = vmatpush1.xpose.msra.mxu0 0.0
    %1671 = vmatprep.subr.mxu0 0.0
    %1672 = vmatpush1.xpose.msra.mxu0 0.0
    %1673 = vmatprep.subr.mxu0 0.0
    %1674 = vmatpush1.xpose.msra.mxu0 0.0
    %1675 = vmatprep.subr.mxu0 0.0
    %1676 = vmatpush1.xpose.msra.mxu0 0.0
    %1677 = vmatprep.subr.mxu0 0.0
    %1678 = vmatpush1.xpose.msra.mxu0 0.0
    %1679 = vmatprep.subr.mxu0 0.0
    %1680 = vmatpush1.xpose.msra.mxu0 0.0
    %1681 = vmatprep.subr.mxu0 0.0
    %1682 = vmatpush1.xpose.msra.mxu0 0.0
    %1683 = vmatprep.subr.mxu0 0.0
    %1684 = vmatpush1.xpose.msra.mxu0 0.0
    %1685 = vmatprep.subr.mxu0 0.0
    %1686 = vmatpush1.xpose.msra.mxu0 0.0
    %1687 = vmatprep.subr.mxu0 0.0
    %1688 = vmatpush1.xpose.msra.mxu0 0.0
    %1689 = vmatprep.subr.mxu0 0.0
    %1690 = vmatpush1.xpose.msra.mxu0 0.0
    %1691 = vmatprep.mubr.f32.mxu0 0.0
    %1692 = vmatmul.mubr.f32.gmra.mrb[0].mxu0 %v1619
    %v1693 = vpop.f32.mrb[0].mxu0
    %v1694 = vadd.f32 0.0, %v1693
    %v1695 = vpop.f32.mrb[0].mxu0
    %1696 = vmatprep.mubr.f32.mxu0 0.0
    %1697 = vmatmul.mubr.f32.gmra.mrb[0].mxu0 %v1621
    %v1698 = vpop.f32.mrb[0].mxu0
    %v1699 = vadd.f32 0.0, %v1698
    %v1700 = vpop.f32.mrb[0].mxu0
    %1701 = vdwg.mxu0
    %v1702 = vmul.f32 %v1694, 0.35355338
    %v1703 = vmul.f32 %v1699, 0.35355338
    %v1704 = vadd.f32 %v1702, %v1281
    %v1705 = vadd.f32 %v1703, %v1281
    %v1706 = vsel %vm418, %v1704, -inf
    %1707 = vmax.xlane.f32.xlu0 %v1706
    %v1708 = vpop.xlane.xlu0 %1707
    %v1709 = vsel %vm422, %v1705, -inf
    %1710 = vmax.xlane.f32.xlu0 %v1709
    %v1711 = vpop.xlane.xlu0 %1710
    %v1712 = vsub.f32 %v1704, %v1708
    %v1713 = vsub.f32 %v1705, %v1711
    %v1714 = vmul.f32 %v1712, 1.442695
    %v1715 = vpow.pop %v1714
    %v1716 = vmul.f32 %v1713, 1.442695
    %v1717 = vpow.pop %v1716
    %v1718 = vsel %vm418, %v1715, 0.0
    %1719 = vadd.xlane.f32.xlu0 %v1718
    %v1720 = vpop.xlane.xlu0 %1719
    %v1721 = vsel %vm422, %v1717, 0.0
    %1722 = vadd.xlane.f32.xlu0 %v1721
    %v1723 = vpop.xlane.xlu0 %1722
    %v1724 = vrcp.pop %v1720
    %v1725 = vrcp.pop %v1723
    %v1726 = vmul.f32 %v1715, %v1724
    %v1727 = vmul.f32 %v1717, %v1725
    %1728 = vrot.lane.b32.xlu0 %v1188, 48
    %v1729 = vpop.permute.xlu0 %1728
    %1730 = vrot.lane.b32.xlu0 %v1187, 48
    %v1731 = vpop.permute.xlu0 %1730
    %v1734 = vsel %vm418, %v1726, 0
    %v1737 = vsel %vm418, %v1727, 0
    %v1739 = vsel %vm453, %v1731, 0
    %1741 = vmatprep.subr.mxu0 0.0
    %1742 = vmatpush1.msra.mxu0 %v1729
    %1743 = vmatprep.subr.mxu0 0.0
    %1744 = vmatpush1.msra.mxu0 %v1739
    %1745 = vmatprep.subr.mxu0 0.0
    %1746 = vmatpush1.msra.mxu0 0.0
    %1747 = vmatprep.subr.mxu0 0.0
    %1748 = vmatpush1.msra.mxu0 0.0
    %1749 = vmatprep.subr.mxu0 0.0
    %1750 = vmatpush1.msra.mxu0 0.0
    %1751 = vmatprep.subr.mxu0 0.0
    %1752 = vmatpush1.msra.mxu0 0.0
    %1753 = vmatprep.subr.mxu0 0.0
    %1754 = vmatpush1.msra.mxu0 0.0
    %1755 = vmatprep.subr.mxu0 0.0
    %1756 = vmatpush1.msra.mxu0 0.0
    %1757 = vmatprep.subr.mxu0 0.0
    %1758 = vmatpush1.msra.mxu0 0.0
    %1759 = vmatprep.subr.mxu0 0.0
    %1760 = vmatpush1.msra.mxu0 0.0
    %1761 = vmatprep.subr.mxu0 0.0
    %1762 = vmatpush1.msra.mxu0 0.0
    %1763 = vmatprep.subr.mxu0 0.0
    %1764 = vmatpush1.msra.mxu0 0.0
    %1765 = vmatprep.subr.mxu0 0.0
    %1766 = vmatpush1.msra.mxu0 0.0
    %1767 = vmatprep.subr.mxu0 0.0
    %1768 = vmatpush1.msra.mxu0 0.0
    %1769 = vmatprep.subr.mxu0 0.0
    %1770 = vmatpush1.msra.mxu0 0.0
    %1771 = vmatprep.subr.mxu0 0.0
    %1772 = vmatpush1.msra.mxu0 0.0
    %1773 = vmatprep.subr.mxu0 0.0
    %1774 = vmatpush1.msra.mxu0 0.0
    %1775 = vmatprep.subr.mxu0 0.0
    %1776 = vmatpush1.msra.mxu0 0.0
    %1777 = vmatprep.subr.mxu0 0.0
    %1778 = vmatpush1.msra.mxu0 0.0
    %1779 = vmatprep.subr.mxu0 0.0
    %1780 = vmatpush1.msra.mxu0 0.0
    %1781 = vmatprep.subr.mxu0 0.0
    %1782 = vmatpush1.msra.mxu0 0.0
    %1783 = vmatprep.subr.mxu0 0.0
    %1784 = vmatpush1.msra.mxu0 0.0
    %1785 = vmatprep.subr.mxu0 0.0
    %1786 = vmatpush1.msra.mxu0 0.0
    %1787 = vmatprep.subr.mxu0 0.0
    %1788 = vmatpush1.msra.mxu0 0.0
    %1789 = vmatprep.subr.mxu0 0.0
    %1790 = vmatpush1.msra.mxu0 0.0
    %1791 = vmatprep.subr.mxu0 0.0
    %1792 = vmatpush1.msra.mxu0 0.0
    %1793 = vmatprep.subr.mxu0 0.0
    %1794 = vmatpush1.msra.mxu0 0.0
    %1795 = vmatprep.subr.mxu0 0.0
    %1796 = vmatpush1.msra.mxu0 0.0
    %1797 = vmatprep.subr.mxu0 0.0
    %1798 = vmatpush1.msra.mxu0 0.0
    %1799 = vmatprep.subr.mxu0 0.0
    %1800 = vmatpush1.msra.mxu0 0.0
    %1801 = vmatprep.subr.mxu0 0.0
    %1802 = vmatpush1.msra.mxu0 0.0
    %1803 = vmatprep.subr.mxu0 0.0
    %1804 = vmatpush1.msra.mxu0 0.0
    %1805 = vmatprep.mubr.f32.mxu0 0.0
    %1806 = vmatmul.mubr.f32.gmra.mrb[0].mxu0 %v1734
    %v1807 = vpop.f32.mrb[0].mxu0
    %v1808 = vadd.f32 0.0, %v1807
    %v1809 = vpop.f32.mrb[0].mxu0
    %1810 = vmatprep.mubr.f32.mxu0 0.0
    %1811 = vmatmul.mubr.f32.gmra.mrb[0].mxu0 %v1737
    %v1812 = vpop.f32.mrb[0].mxu0
    %v1813 = vadd.f32 0.0, %v1812
    %v1814 = vpop.f32.mrb[0].mxu0
    %1815 = vdwg.mxu0
    %1818 = vrot.lane.b32.xlu0 %v1808, 16
    %v1819 = vpop.permute.xlu0 %1818
    %1820 = vrot.lane.b32.xlu0 %v1813, 16
    %v1821 = vpop.permute.xlu0 %1820
    %1824 = vst.msk [vmem:[#allocation3 + $0xc] sm:$0xff] %vm964, %v1819
    %1825 = vst.msk [vmem:[#allocation3 + $0x14] sm:$0xf] %vm966, %v1821
    %1826 = vrot.lane.b32.xlu0 %v1188, 104
    %v1827 = vpop.permute.xlu0 %1826
    %1828 = vrot.lane.b32.xlu0 %v1187, 104
    %v1829 = vpop.permute.xlu0 %1828
    %1830 = vrot.lane.b32.xlu0 %v1188, 72
    %v1831 = vpop.permute.xlu0 %1830
    %1832 = vrot.lane.b32.xlu0 %v1187, 72
    %v1833 = vpop.permute.xlu0 %1832
    %v1834 = vsel %vm326, %v1827, 0
    %v1836 = vsel %vm326, %v1829, 0
    %v1838 = vsel %vm326, %v1831, 0
    %v1840 = vsel %vm326, %v1833, 0
    %1842 = vmatprep.subr.mxu0 0.0
    %1843 = vmatpush1.xpose.msra.mxu0 %v1838
    %1844 = vmatprep.subr.mxu0 0.0
    %1845 = vmatpush1.xpose.msra.mxu0 %v1840
    %1846 = vmatprep.subr.mxu0 0.0
    %1847 = vmatpush1.xpose.msra.mxu0 0.0
    %1848 = vmatprep.subr.mxu0 0.0
    %1849 = vmatpush1.xpose.msra.mxu0 0.0
    %1850 = vmatprep.subr.mxu0 0.0
    %1851 = vmatpush1.xpose.msra.mxu0 0.0
    %1852 = vmatprep.subr.mxu0 0.0
    %1853 = vmatpush1.xpose.msra.mxu0 0.0
    %1854 = vmatprep.subr.mxu0 0.0
    %1855 = vmatpush1.xpose.msra.mxu0 0.0
    %1856 = vmatprep.subr.mxu0 0.0
    %1857 = vmatpush1.xpose.msra.mxu0 0.0
    %1858 = vmatprep.subr.mxu0 0.0
    %1859 = vmatpush1.xpose.msra.mxu0 0.0
    %1860 = vmatprep.subr.mxu0 0.0
    %1861 = vmatpush1.xpose.msra.mxu0 0.0
    %1862 = vmatprep.subr.mxu0 0.0
    %1863 = vmatpush1.xpose.msra.mxu0 0.0
    %1864 = vmatprep.subr.mxu0 0.0
    %1865 = vmatpush1.xpose.msra.mxu0 0.0
    %1866 = vmatprep.subr.mxu0 0.0
    %1867 = vmatpush1.xpose.msra.mxu0 0.0
    %1868 = vmatprep.subr.mxu0 0.0
    %1869 = vmatpush1.xpose.msra.mxu0 0.0
    %1870 = vmatprep.subr.mxu0 0.0
    %1871 = vmatpush1.xpose.msra.mxu0 0.0
    %1872 = vmatprep.subr.mxu0 0.0
    %1873 = vmatpush1.xpose.msra.mxu0 0.0
    %1874 = vmatprep.subr.mxu0 0.0
    %1875 = vmatpush1.xpose.msra.mxu0 0.0
    %1876 = vmatprep.subr.mxu0 0.0
    %1877 = vmatpush1.xpose.msra.mxu0 0.0
    %1878 = vmatprep.subr.mxu0 0.0
    %1879 = vmatpush1.xpose.msra.mxu0 0.0
    %1880 = vmatprep.subr.mxu0 0.0
    %1881 = vmatpush1.xpose.msra.mxu0 0.0
    %1882 = vmatprep.subr.mxu0 0.0
    %1883 = vmatpush1.xpose.msra.mxu0 0.0
    %1884 = vmatprep.subr.mxu0 0.0
    %1885 = vmatpush1.xpose.msra.mxu0 0.0
    %1886 = vmatprep.subr.mxu0 0.0
    %1887 = vmatpush1.xpose.msra.mxu0 0.0
    %1888 = vmatprep.subr.mxu0 0.0
    %1889 = vmatpush1.xpose.msra.mxu0 0.0
    %1890 = vmatprep.subr.mxu0 0.0
    %1891 = vmatpush1.xpose.msra.mxu0 0.0
    %1892 = vmatprep.subr.mxu0 0.0
    %1893 = vmatpush1.xpose.msra.mxu0 0.0
    %1894 = vmatprep.subr.mxu0 0.0
    %1895 = vmatpush1.xpose.msra.mxu0 0.0
    %1896 = vmatprep.subr.mxu0 0.0
    %1897 = vmatpush1.xpose.msra.mxu0 0.0
    %1898 = vmatprep.subr.mxu0 0.0
    %1899 = vmatpush1.xpose.msra.mxu0 0.0
    %1900 = vmatprep.subr.mxu0 0.0
    %1901 = vmatpush1.xpose.msra.mxu0 0.0
    %1902 = vmatprep.subr.mxu0 0.0
    %1903 = vmatpush1.xpose.msra.mxu0 0.0
    %1904 = vmatprep.subr.mxu0 0.0
    %1905 = vmatpush1.xpose.msra.mxu0 0.0
    %1906 = vmatprep.mubr.f32.mxu0 0.0
    %1907 = vmatmul.mubr.f32.gmra.mrb[0].mxu0 %v1834
    %v1908 = vpop.f32.mrb[0].mxu0
    %v1909 = vadd.f32 0.0, %v1908
    %v1910 = vpop.f32.mrb[0].mxu0
    %1911 = vmatprep.mubr.f32.mxu0 0.0
    %1912 = vmatmul.mubr.f32.gmra.mrb[0].mxu0 %v1836
    %v1913 = vpop.f32.mrb[0].mxu0
    %v1914 = vadd.f32 0.0, %v1913
    %v1915 = vpop.f32.mrb[0].mxu0
    %1916 = vdwg.mxu0
    %v1917 = vmul.f32 %v1909, 0.35355338
    %v1918 = vmul.f32 %v1914, 0.35355338
    %v1919 = vadd.f32 %v1917, %v1281
    %v1920 = vadd.f32 %v1918, %v1281
    %v1921 = vsel %vm418, %v1919, -inf
    %1922 = vmax.xlane.f32.xlu0 %v1921
    %v1923 = vpop.xlane.xlu0 %1922
    %v1924 = vsel %vm422, %v1920, -inf
    %1925 = vmax.xlane.f32.xlu0 %v1924
    %v1926 = vpop.xlane.xlu0 %1925
    %v1927 = vsub.f32 %v1919, %v1923
    %v1928 = vsub.f32 %v1920, %v1926
    %v1929 = vmul.f32 %v1927, 1.442695
    %v1930 = vpow.pop %v1929
    %v1931 = vmul.f32 %v1928, 1.442695
    %v1932 = vpow.pop %v1931
    %v1933 = vsel %vm418, %v1930, 0.0
    %1934 = vadd.xlane.f32.xlu0 %v1933
    %v1935 = vpop.xlane.xlu0 %1934
    %v1936 = vsel %vm422, %v1932, 0.0
    %1937 = vadd.xlane.f32.xlu0 %v1936
    %v1938 = vpop.xlane.xlu0 %1937
    %v1939 = vrcp.pop %v1935
    %v1940 = vrcp.pop %v1938
    %v1941 = vmul.f32 %v1930, %v1939
    %v1942 = vmul.f32 %v1932, %v1940
    %1943 = vrot.lane.b32.xlu0 %v1188, 40
    %v1944 = vpop.permute.xlu0 %1943
    %1945 = vrot.lane.b32.xlu0 %v1187, 40
    %v1946 = vpop.permute.xlu0 %1945
    %v1949 = vsel %vm418, %v1941, 0
    %v1952 = vsel %vm418, %v1942, 0
    %v1954 = vsel %vm453, %v1946, 0
    %1956 = vmatprep.subr.mxu0 0.0
    %1957 = vmatpush1.msra.mxu0 %v1944
    %1958 = vmatprep.subr.mxu0 0.0
    %1959 = vmatpush1.msra.mxu0 %v1954
    %1960 = vmatprep.subr.mxu0 0.0
    %1961 = vmatpush1.msra.mxu0 0.0
    %1962 = vmatprep.subr.mxu0 0.0
    %1963 = vmatpush1.msra.mxu0 0.0
    %1964 = vmatprep.subr.mxu0 0.0
    %1965 = vmatpush1.msra.mxu0 0.0
    %1966 = vmatprep.subr.mxu0 0.0
    %1967 = vmatpush1.msra.mxu0 0.0
    %1968 = vmatprep.subr.mxu0 0.0
    %1969 = vmatpush1.msra.mxu0 0.0
    %1970 = vmatprep.subr.mxu0 0.0
    %1971 = vmatpush1.msra.mxu0 0.0
    %1972 = vmatprep.subr.mxu0 0.0
    %1973 = vmatpush1.msra.mxu0 0.0
    %1974 = vmatprep.subr.mxu0 0.0
    %1975 = vmatpush1.msra.mxu0 0.0
    %1976 = vmatprep.subr.mxu0 0.0
    %1977 = vmatpush1.msra.mxu0 0.0
    %1978 = vmatprep.subr.mxu0 0.0
    %1979 = vmatpush1.msra.mxu0 0.0
    %1980 = vmatprep.subr.mxu0 0.0
    %1981 = vmatpush1.msra.mxu0 0.0
    %1982 = vmatprep.subr.mxu0 0.0
    %1983 = vmatpush1.msra.mxu0 0.0
    %1984 = vmatprep.subr.mxu0 0.0
    %1985 = vmatpush1.msra.mxu0 0.0
    %1986 = vmatprep.subr.mxu0 0.0
    %1987 = vmatpush1.msra.mxu0 0.0
    %1988 = vmatprep.subr.mxu0 0.0
    %1989 = vmatpush1.msra.mxu0 0.0
    %1990 = vmatprep.subr.mxu0 0.0
    %1991 = vmatpush1.msra.mxu0 0.0
    %1992 = vmatprep.subr.mxu0 0.0
    %1993 = vmatpush1.msra.mxu0 0.0
    %1994 = vmatprep.subr.mxu0 0.0
    %1995 = vmatpush1.msra.mxu0 0.0
    %1996 = vmatprep.subr.mxu0 0.0
    %1997 = vmatpush1.msra.mxu0 0.0
    %1998 = vmatprep.subr.mxu0 0.0
    %1999 = vmatpush1.msra.mxu0 0.0
    %2000 = vmatprep.subr.mxu0 0.0
    %2001 = vmatpush1.msra.mxu0 0.0
    %2002 = vmatprep.subr.mxu0 0.0
    %2003 = vmatpush1.msra.mxu0 0.0
    %2004 = vmatprep.subr.mxu0 0.0
    %2005 = vmatpush1.msra.mxu0 0.0
    %2006 = vmatprep.subr.mxu0 0.0
    %2007 = vmatpush1.msra.mxu0 0.0
    %2008 = vmatprep.subr.mxu0 0.0
    %2009 = vmatpush1.msra.mxu0 0.0
    %2010 = vmatprep.subr.mxu0 0.0
    %2011 = vmatpush1.msra.mxu0 0.0
    %2012 = vmatprep.subr.mxu0 0.0
    %2013 = vmatpush1.msra.mxu0 0.0
    %2014 = vmatprep.subr.mxu0 0.0
    %2015 = vmatpush1.msra.mxu0 0.0
    %2016 = vmatprep.subr.mxu0 0.0
    %2017 = vmatpush1.msra.mxu0 0.0
    %2018 = vmatprep.subr.mxu0 0.0
    %2019 = vmatpush1.msra.mxu0 0.0
    %2020 = vmatprep.mubr.f32.mxu0 0.0
    %2021 = vmatmul.mubr.f32.gmra.mrb[0].mxu0 %v1949
    %v2022 = vpop.f32.mrb[0].mxu0
    %v2023 = vadd.f32 0.0, %v2022
    %v2024 = vpop.f32.mrb[0].mxu0
    %2025 = vmatprep.mubr.f32.mxu0 0.0
    %2026 = vmatmul.mubr.f32.gmra.mrb[0].mxu0 %v1952
    %v2027 = vpop.f32.mrb[0].mxu0
    %v2028 = vadd.f32 0.0, %v2027
    %v2029 = vpop.f32.mrb[0].mxu0
    %2030 = vdwg.mxu0
    %2033 = vrot.lane.b32.xlu0 %v2023, 24
    %v2034 = vpop.permute.xlu0 %2033
    %2035 = vrot.lane.b32.xlu0 %v2028, 24
    %v2036 = vpop.permute.xlu0 %2035
    %2039 = vst.msk [vmem:[#allocation3 + $0xc] sm:$0xff] %vm1181, %v2034
    %2040 = vst.msk [vmem:[#allocation3 + $0x14] sm:$0xf] %vm1183, %v2036
    %v2041 = vld [vmem:[#allocation3] sm:$0xff]
    %v2042 = vld [vmem:[#allocation3 + $0x8] sm:$0xff]
    %v2043 = vld [vmem:[#allocation3 + $0x10] sm:$0xff]
    %v2044 = vld [vmem:[%s9] sm:$0xff]
    %v2045 = vld [vmem:[%s9 + $0x8] sm:$0xff]
    %v2046 = vld [vmem:[%s9 + $0x10] sm:$0xff]
    %v2047 = vld [vmem:[%s9 + $0x18] sm:$0xff]
    %v2048 = vld [vmem:[%s10] sm:$0x1]
    %v2050 = vlaneseq
    %v2051 = vshrl.u32 %v2050, 7
    %v2052 = vsub.s32 0, %v2051
    %v2053 = vrot.slane %v2048, %v2052
    %v2056 = vsel %vm79, %v2041, 0
    %v2059 = vsel %vm79, %v2042, 0
    %v2062 = vsel %vm79, %v2043, 0
    %2064 = vmatprep.subr.mxu0 0.0
    %2065 = vmatpush1.msra.mxu0 %v2044
    %2066 = vmatprep.subr.mxu0 0.0
    %2067 = vmatpush1.msra.mxu0 %v2045
    %2068 = vmatprep.subr.mxu0 0.0
    %2069 = vmatpush1.msra.mxu0 %v2046
    %2070 = vmatprep.subr.mxu0 0.0
    %2071 = vmatpush1.msra.mxu0 %v2047
    %2072 = vmatprep.subr.mxu0 0.0
    %2073 = vmatpush1.msra.mxu0 0.0
    %2074 = vmatprep.subr.mxu0 0.0
    %2075 = vmatpush1.msra.mxu0 0.0
    %2076 = vmatprep.subr.mxu0 0.0
    %2077 = vmatpush1.msra.mxu0 0.0
    %2078 = vmatprep.subr.mxu0 0.0
    %2079 = vmatpush1.msra.mxu0 0.0
    %2080 = vmatprep.subr.mxu0 0.0
    %2081 = vmatpush1.msra.mxu0 0.0
    %2082 = vmatprep.subr.mxu0 0.0
    %2083 = vmatpush1.msra.mxu0 0.0
    %2084 = vmatprep.subr.mxu0 0.0
    %2085 = vmatpush1.msra.mxu0 0.0
    %2086 = vmatprep.subr.mxu0 0.0
    %2087 = vmatpush1.msra.mxu0 0.0
    %2088 = vmatprep.subr.mxu0 0.0
    %2089 = vmatpush1.msra.mxu0 0.0
    %2090 = vmatprep.subr.mxu0 0.0
    %2091 = vmatpush1.msra.mxu0 0.0
    %2092 = vmatprep.subr.mxu0 0.0
    %2093 = vmatpush1.msra.mxu0 0.0
    %2094 = vmatprep.subr.mxu0 0.0
    %2095 = vmatpush1.msra.mxu0 0.0
    %2096 = vmatprep.subr.mxu0 0.0
    %2097 = vmatpush1.msra.mxu0 0.0
    %2098 = vmatprep.subr.mxu0 0.0
    %2099 = vmatpush1.msra.mxu0 0.0
    %2100 = vmatprep.subr.mxu0 0.0
    %2101 = vmatpush1.msra.mxu0 0.0
    %2102 = vmatprep.subr.mxu0 0.0
    %2103 = vmatpush1.msra.mxu0 0.0
    %2104 = vmatprep.subr.mxu0 0.0
    %2105 = vmatpush1.msra.mxu0 0.0
    %2106 = vmatprep.subr.mxu0 0.0
    %2107 = vmatpush1.msra.mxu0 0.0
    %2108 = vmatprep.subr.mxu0 0.0
    %2109 = vmatpush1.msra.mxu0 0.0
    %2110 = vmatprep.subr.mxu0 0.0
    %2111 = vmatpush1.msra.mxu0 0.0
    %2112 = vmatprep.subr.mxu0 0.0
    %2113 = vmatpush1.msra.mxu0 0.0
    %2114 = vmatprep.subr.mxu0 0.0
    %2115 = vmatpush1.msra.mxu0 0.0
    %2116 = vmatprep.subr.mxu0 0.0
    %2117 = vmatpush1.msra.mxu0 0.0
    %2118 = vmatprep.subr.mxu0 0.0
    %2119 = vmatpush1.msra.mxu0 0.0
    %2120 = vmatprep.subr.mxu0 0.0
    %2121 = vmatpush1.msra.mxu0 0.0
    %2122 = vmatprep.subr.mxu0 0.0
    %2123 = vmatpush1.msra.mxu0 0.0
    %2124 = vmatprep.subr.mxu0 0.0
    %2125 = vmatpush1.msra.mxu0 0.0
    %2126 = vmatprep.subr.mxu0 0.0
    %2127 = vmatpush1.msra.mxu0 0.0
    %2128 = vmatprep.mubr.f32.mxu0 0.0
    %2129 = vmatmul.mubr.f32.gmra.mrb[0].mxu0 %v2056
    %v2130 = vpop.f32.mrb[0].mxu0
    %v2131 = vadd.f32 %v2053, %v2130
    %v2132 = vpop.f32.mrb[0].mxu0
    %2133 = vmatprep.mubr.f32.mxu0 0.0
    %2134 = vmatmul.mubr.f32.gmra.mrb[0].mxu0 %v2059
    %v2135 = vpop.f32.mrb[0].mxu0
    %v2136 = vadd.f32 %v2053, %v2135
    %v2137 = vpop.f32.mrb[0].mxu0
    %2138 = vmatprep.mubr.f32.mxu0 0.0
    %2139 = vmatmul.mubr.f32.gmra.mrb[0].mxu0 %v2062
    %v2140 = vpop.f32.mrb[0].mxu0
    %v2141 = vadd.f32 %v2053, %v2140
    %v2142 = vpop.f32.mrb[0].mxu0
    %2143 = vdwg.mxu0
    %v2144 = vadd.f32 %v2131, %v217
    %v2145 = vadd.f32 %v2136, %v218
    %v2146 = vadd.f32 %v2141, %v219
    %v2147 = vld [vmem:[%s11] sm:$0x1]
    %v2148 = vld [vmem:[%s12] sm:$0x1]
    %v2149 = vsel %vm79, %v2144, 0.0
    %2150 = vadd.xlane.f32.xlu0 %v2149
    %v2151 = vpop.xlane.xlu0 %2150
    %v2152 = vsel %vm79, %v2145, 0.0
    %2153 = vadd.xlane.f32.xlu0 %v2152
    %v2154 = vpop.xlane.xlu0 %2153
    %v2155 = vsel %vm79, %v2146, 0.0
    %2156 = vadd.xlane.f32.xlu0 %v2155
    %v2157 = vpop.xlane.xlu0 %2156
    %v2158 = vmul.f32 %v2151, %v86
    %v2159 = vmul.f32 %v2154, %v86
    %v2160 = vmul.f32 %v2157, %v86
    %v2161 = vsub.f32 %v2144, %v2158
    %v2162 = vsub.f32 %v2145, %v2159
    %v2163 = vsub.f32 %v2146, %v2160
    %v2164 = vmul.f32 %v2161, %v2161
    %v2165 = vmul.f32 %v2162, %v2162
    %v2166 = vmul.f32 %v2163, %v2163
    %v2167 = vsel %vm79, %v2164, 0.0
    %2168 = vadd.xlane.f32.xlu0 %v2167
    %v2169 = vpop.xlane.xlu0 %2168
    %v2170 = vsel %vm79, %v2165, 0.0
    %2171 = vadd.xlane.f32.xlu0 %v2170
    %v2172 = vpop.xlane.xlu0 %2171
    %v2173 = vsel %vm79, %v2166, 0.0
    %2174 = vadd.xlane.f32.xlu0 %v2173
    %v2175 = vpop.xlane.xlu0 %2174
    %v2176 = vmul.f32 %v2169, %v86
    %v2177 = vmul.f32 %v2172, %v86
    %v2178 = vmul.f32 %v2175, %v86
    %v2179 = vadd.f32 %v2176, 1e-12
    %v2180 = vadd.f32 %v2177, 1e-12
    %v2181 = vadd.f32 %v2178, 1e-12
    %v2182 = vrsqrt.pop %v2179
    %v2183 = vrsqrt.pop %v2180
    %v2184 = vrsqrt.pop %v2181
    %v2185 = vmul.f32 %v2161, %v2182
    %v2186 = vmul.f32 %v2162, %v2183
    %v2187 = vmul.f32 %v2163, %v2184
    %v2189 = vlaneseq
    %v2190 = vshrl.u32 %v2189, 7
    %v2191 = vsub.s32 0, %v2190
    %v2192 = vrot.slane %v2147, %v2191
    %v2194 = vmul.f32 %v2185, %v2192
    %v2195 = vmul.f32 %v2186, %v2192
    %v2196 = vmul.f32 %v2187, %v2192
    %v2198 = vlaneseq
    %v2199 = vshrl.u32 %v2198, 7
    %v2200 = vsub.s32 0, %v2199
    %v2201 = vrot.slane %v2148, %v2200
    %v2203 = vadd.f32 %v2194, %v2201
    %v2204 = vadd.f32 %v2195, %v2201
    %v2205 = vadd.f32 %v2196, %v2201
    %v2206 = vld [vmem:[%s13] sm:$0xff]
    %v2207 = vld [vmem:[%s13 + $0x8] sm:$0xff]
    %v2208 = vld [vmem:[%s13 + $0x10] sm:$0xff]
    %v2209 = vld [vmem:[%s13 + $0x18] sm:$0xff]
    %v2210 = vld [vmem:[%s14] sm:$0x1]
    %v2212 = vlaneseq
    %v2213 = vshrl.u32 %v2212, 7
    %v2214 = vsub.s32 0, %v2213
    %v2215 = vrot.slane %v2210, %v2214
    %v2218 = vsel %vm79, %v2203, 0
    %v2221 = vsel %vm79, %v2204, 0
    %v2224 = vsel %vm79, %v2205, 0
    %2226 = vmatprep.subr.mxu0 0.0
    %2227 = vmatpush1.msra.mxu0 %v2206
    %2228 = vmatprep.subr.mxu0 0.0
    %2229 = vmatpush1.msra.mxu0 %v2207
    %2230 = vmatprep.subr.mxu0 0.0
    %2231 = vmatpush1.msra.mxu0 %v2208
    %2232 = vmatprep.subr.mxu0 0.0
    %2233 = vmatpush1.msra.mxu0 %v2209
    %2234 = vmatprep.subr.mxu0 0.0
    %2235 = vmatpush1.msra.mxu0 0.0
    %2236 = vmatprep.subr.mxu0 0.0
    %2237 = vmatpush1.msra.mxu0 0.0
    %2238 = vmatprep.subr.mxu0 0.0
    %2239 = vmatpush1.msra.mxu0 0.0
    %2240 = vmatprep.subr.mxu0 0.0
    %2241 = vmatpush1.msra.mxu0 0.0
    %2242 = vmatprep.subr.mxu0 0.0
    %2243 = vmatpush1.msra.mxu0 0.0
    %2244 = vmatprep.subr.mxu0 0.0
    %2245 = vmatpush1.msra.mxu0 0.0
    %2246 = vmatprep.subr.mxu0 0.0
    %2247 = vmatpush1.msra.mxu0 0.0
    %2248 = vmatprep.subr.mxu0 0.0
    %2249 = vmatpush1.msra.mxu0 0.0
    %2250 = vmatprep.subr.mxu0 0.0
    %2251 = vmatpush1.msra.mxu0 0.0
    %2252 = vmatprep.subr.mxu0 0.0
    %2253 = vmatpush1.msra.mxu0 0.0
    %2254 = vmatprep.subr.mxu0 0.0
    %2255 = vmatpush1.msra.mxu0 0.0
    %2256 = vmatprep.subr.mxu0 0.0
    %2257 = vmatpush1.msra.mxu0 0.0
    %2258 = vmatprep.subr.mxu0 0.0
    %2259 = vmatpush1.msra.mxu0 0.0
    %2260 = vmatprep.subr.mxu0 0.0
    %2261 = vmatpush1.msra.mxu0 0.0
    %2262 = vmatprep.subr.mxu0 0.0
    %2263 = vmatpush1.msra.mxu0 0.0
    %2264 = vmatprep.subr.mxu0 0.0
    %2265 = vmatpush1.msra.mxu0 0.0
    %2266 = vmatprep.subr.mxu0 0.0
    %2267 = vmatpush1.msra.mxu0 0.0
    %2268 = vmatprep.subr.mxu0 0.0
    %2269 = vmatpush1.msra.mxu0 0.0
    %2270 = vmatprep.subr.mxu0 0.0
    %2271 = vmatpush1.msra.mxu0 0.0
    %2272 = vmatprep.subr.mxu0 0.0
    %2273 = vmatpush1.msra.mxu0 0.0
    %2274 = vmatprep.subr.mxu0 0.0
    %2275 = vmatpush1.msra.mxu0 0.0
    %2276 = vmatprep.subr.mxu0 0.0
    %2277 = vmatpush1.msra.mxu0 0.0
    %2278 = vmatprep.subr.mxu0 0.0
    %2279 = vmatpush1.msra.mxu0 0.0
    %2280 = vmatprep.subr.mxu0 0.0
    %2281 = vmatpush1.msra.mxu0 0.0
    %2282 = vmatprep.subr.mxu0 0.0
    %2283 = vmatpush1.msra.mxu0 0.0
    %2284 = vmatprep.subr.mxu0 0.0
    %2285 = vmatpush1.msra.mxu0 0.0
    %2286 = vmatprep.subr.mxu0 0.0
    %2287 = vmatpush1.msra.mxu0 0.0
    %2288 = vmatprep.subr.mxu0 0.0
    %2289 = vmatpush1.msra.mxu0 0.0
    %2290 = vmatprep.mubr.f32.mxu0 0.0
    %2291 = vmatmul.mubr.f32.gmra.mrb[0].mxu0 %v2218
    %v2292 = vpop.f32.mrb[0].mxu0
    %v2293 = vadd.f32 %v2215, %v2292
    %v2294 = vpop.f32.mrb[0].mxu0
    %2295 = vmatprep.mubr.f32.mxu0 0.0
    %2296 = vmatmul.mubr.f32.gmra.mrb[0].mxu0 %v2221
    %v2297 = vpop.f32.mrb[0].mxu0
    %v2298 = vadd.f32 %v2215, %v2297
    %v2299 = vpop.f32.mrb[0].mxu0
    %2300 = vmatprep.mubr.f32.mxu0 0.0
    %2301 = vmatmul.mubr.f32.gmra.mrb[0].mxu0 %v2224
    %v2302 = vpop.f32.mrb[0].mxu0
    %v2303 = vadd.f32 %v2215, %v2302
    %v2304 = vpop.f32.mrb[0].mxu0
    %2305 = vdwg.mxu0
    %v2306 = vmul.f32 %v2293, 0.5
    %v2307 = vmul.f32 %v2298, 0.5
    %v2308 = vmul.f32 %v2303, 0.5
    %v2309 = vmul.f32 %v2293, 0.70710677
    %v2310 = vmul.f32 %v2298, 0.70710677
    %v2311 = vmul.f32 %v2303, 0.70710677
    %v2312 = verf.f32.pop %v2309
    %v2313 = verf.f32.pop %v2310
    %v2314 = verf.f32.pop %v2311
    %v2315 = vadd.f32 %v2312, 1.0
    %v2316 = vadd.f32 %v2313, 1.0
    %v2317 = vadd.f32 %v2314, 1.0
    %v2318 = vmul.f32 %v2306, %v2315
    %v2319 = vmul.f32 %v2307, %v2316
    %v2320 = vmul.f32 %v2308, %v2317
    %v2321 = vld [vmem:[%s15] sm:$0xff]
    %v2322 = vld [vmem:[%s15 + $0x8] sm:$0xff]
    %v2323 = vld [vmem:[%s15 + $0x10] sm:$0xff]
    %v2324 = vld [vmem:[%s15 + $0x18] sm:$0xff]
    %v2325 = vld [vmem:[%s15 + $0x20] sm:$0xff]
    %v2326 = vld [vmem:[%s15 + $0x28] sm:$0xff]
    %v2327 = vld [vmem:[%s15 + $0x30] sm:$0xff]
    %v2328 = vld [vmem:[%s15 + $0x38] sm:$0xff]
    %v2329 = vld [vmem:[%s16] sm:$0x1]
    %v2331 = vlaneseq
    %v2332 = vshrl.u32 %v2331, 7
    %v2333 = vsub.s32 0, %v2332
    %v2334 = vrot.slane %v2329, %v2333
    %vm2336 = vcmask 523264
    %v2338 = vsel %vm2336, %v2318, 0
    %v2341 = vsel %vm2336, %v2319, 0
    %v2344 = vsel %vm2336, %v2320, 0
    %2346 = vmatprep.subr.mxu0 0.0
    %2347 = vmatpush1.msra.mxu0 %v2321
    %2348 = vmatprep.subr.mxu0 0.0
    %2349 = vmatpush1.msra.mxu0 %v2322
    %2350 = vmatprep.subr.mxu0 0.0
    %2351 = vmatpush1.msra.mxu0 %v2323
    %2352 = vmatprep.subr.mxu0 0.0
    %2353 = vmatpush1.msra.mxu0 %v2324
    %2354 = vmatprep.subr.mxu0 0.0
    %2355 = vmatpush1.msra.mxu0 %v2325
    %2356 = vmatprep.subr.mxu0 0.0
    %2357 = vmatpush1.msra.mxu0 %v2326
    %2358 = vmatprep.subr.mxu0 0.0
    %2359 = vmatpush1.msra.mxu0 %v2327
    %2360 = vmatprep.subr.mxu0 0.0
    %2361 = vmatpush1.msra.mxu0 %v2328
    %2362 = vmatprep.subr.mxu0 0.0
    %2363 = vmatpush1.msra.mxu0 0.0
    %2364 = vmatprep.subr.mxu0 0.0
    %2365 = vmatpush1.msra.mxu0 0.0
    %2366 = vmatprep.subr.mxu0 0.0
    %2367 = vmatpush1.msra.mxu0 0.0
    %2368 = vmatprep.subr.mxu0 0.0
    %2369 = vmatpush1.msra.mxu0 0.0
    %2370 = vmatprep.subr.mxu0 0.0
    %2371 = vmatpush1.msra.mxu0 0.0
    %2372 = vmatprep.subr.mxu0 0.0
    %2373 = vmatpush1.msra.mxu0 0.0
    %2374 = vmatprep.subr.mxu0 0.0
    %2375 = vmatpush1.msra.mxu0 0.0
    %2376 = vmatprep.subr.mxu0 0.0
    %2377 = vmatpush1.msra.mxu0 0.0
    %2378 = vmatprep.subr.mxu0 0.0
    %2379 = vmatpush1.msra.mxu0 0.0
    %2380 = vmatprep.subr.mxu0 0.0
    %2381 = vmatpush1.msra.mxu0 0.0
    %2382 = vmatprep.subr.mxu0 0.0
    %2383 = vmatpush1.msra.mxu0 0.0
    %2384 = vmatprep.subr.mxu0 0.0
    %2385 = vmatpush1.msra.mxu0 0.0
    %2386 = vmatprep.subr.mxu0 0.0
    %2387 = vmatpush1.msra.mxu0 0.0
    %2388 = vmatprep.subr.mxu0 0.0
    %2389 = vmatpush1.msra.mxu0 0.0
    %2390 = vmatprep.subr.mxu0 0.0
    %2391 = vmatpush1.msra.mxu0 0.0
    %2392 = vmatprep.subr.mxu0 0.0
    %2393 = vmatpush1.msra.mxu0 0.0
    %2394 = vmatprep.subr.mxu0 0.0
    %2395 = vmatpush1.msra.mxu0 0.0
    %2396 = vmatprep.subr.mxu0 0.0
    %2397 = vmatpush1.msra.mxu0 0.0
    %2398 = vmatprep.subr.mxu0 0.0
    %2399 = vmatpush1.msra.mxu0 0.0
    %2400 = vmatprep.subr.mxu0 0.0
    %2401 = vmatpush1.msra.mxu0 0.0
    %2402 = vmatprep.subr.mxu0 0.0
    %2403 = vmatpush1.msra.mxu0 0.0
    %2404 = vmatprep.subr.mxu0 0.0
    %2405 = vmatpush1.msra.mxu0 0.0
    %2406 = vmatprep.subr.mxu0 0.0
    %2407 = vmatpush1.msra.mxu0 0.0
    %2408 = vmatprep.subr.mxu0 0.0
    %2409 = vmatpush1.msra.mxu0 0.0
    %2410 = vmatprep.mubr.f32.mxu0 0.0
    %2411 = vmatmul.mubr.f32.gmra.mrb[0].mxu0 %v2338
    %v2412 = vpop.f32.mrb[0].mxu0
    %v2413 = vadd.f32 %v2334, %v2412
    %v2414 = vpop.f32.mrb[0].mxu0
    %2415 = vmatprep.mubr.f32.mxu0 0.0
    %2416 = vmatmul.mubr.f32.gmra.mrb[0].mxu0 %v2341
    %v2417 = vpop.f32.mrb[0].mxu0
    %v2418 = vadd.f32 %v2334, %v2417
    %v2419 = vpop.f32.mrb[0].mxu0
    %2420 = vmatprep.mubr.f32.mxu0 0.0
    %2421 = vmatmul.mubr.f32.gmra.mrb[0].mxu0 %v2344
    %v2422 = vpop.f32.mrb[0].mxu0
    %v2423 = vadd.f32 %v2334, %v2422
    %v2424 = vpop.f32.mrb[0].mxu0
    %2425 = vdwg.mxu0
    %v2426 = vadd.f32 %v2413, %v2203
    %v2427 = vadd.f32 %v2418, %v2204
    %v2428 = vadd.f32 %v2423, %v2205
    %v2429 = vld [vmem:[%s17] sm:$0x1]
    %v2430 = vld [vmem:[%s18] sm:$0x1]
    %v2431 = vsel %vm79, %v2426, 0.0
    %2432 = vadd.xlane.f32.xlu0 %v2431
    %v2433 = vpop.xlane.xlu0 %2432
    %v2434 = vsel %vm79, %v2427, 0.0
    %2435 = vadd.xlane.f32.xlu0 %v2434
    %v2436 = vpop.xlane.xlu0 %2435
    %v2437 = vsel %vm79, %v2428, 0.0
    %2438 = vadd.xlane.f32.xlu0 %v2437
    %v2439 = vpop.xlane.xlu0 %2438
    %v2440 = vmul.f32 %v2433, %v86
    %v2441 = vmul.f32 %v2436, %v86
    %v2442 = vmul.f32 %v2439, %v86
    %v2443 = vsub.f32 %v2426, %v2440
    %v2444 = vsub.f32 %v2427, %v2441
    %v2445 = vsub.f32 %v2428, %v2442
    %v2446 = vmul.f32 %v2443, %v2443
    %v2447 = vmul.f32 %v2444, %v2444
    %v2448 = vmul.f32 %v2445, %v2445
    %v2449 = vsel %vm79, %v2446, 0.0
    %2450 = vadd.xlane.f32.xlu0 %v2449
    %v2451 = vpop.xlane.xlu0 %2450
    %v2452 = vsel %vm79, %v2447, 0.0
    %2453 = vadd.xlane.f32.xlu0 %v2452
    %v2454 = vpop.xlane.xlu0 %2453
    %v2455 = vsel %vm79, %v2448, 0.0
    %2456 = vadd.xlane.f32.xlu0 %v2455
    %v2457 = vpop.xlane.xlu0 %2456
    %v2458 = vmul.f32 %v2451, %v86
    %v2459 = vmul.f32 %v2454, %v86
    %v2460 = vmul.f32 %v2457, %v86
    %v2461 = vadd.f32 %v2458, 1e-12
    %v2462 = vadd.f32 %v2459, 1e-12
    %v2463 = vadd.f32 %v2460, 1e-12
    %v2464 = vrsqrt.pop %v2461
    %v2465 = vrsqrt.pop %v2462
    %v2466 = vrsqrt.pop %v2463
    %v2467 = vmul.f32 %v2443, %v2464
    %v2468 = vmul.f32 %v2444, %v2465
    %v2469 = vmul.f32 %v2445, %v2466
    %v2471 = vlaneseq
    %v2472 = vshrl.u32 %v2471, 7
    %v2473 = vsub.s32 0, %v2472
    %v2474 = vrot.slane %v2429, %v2473
    %v2476 = vmul.f32 %v2467, %v2474
    %v2477 = vmul.f32 %v2468, %v2474
    %v2478 = vmul.f32 %v2469, %v2474
    %v2480 = vlaneseq
    %v2481 = vshrl.u32 %v2480, 7
    %v2482 = vsub.s32 0, %v2481
    %v2483 = vrot.slane %v2430, %v2482
    %v2485 = vadd.f32 %v2476, %v2483
    %v2486 = vadd.f32 %v2477, %v2483
    %v2487 = vadd.f32 %v2478, %v2483
    %2488 = vst.msk [vmem:[#allocation2] sm:$0xff] %vm79, %v2485
    %2489 = vst.msk [vmem:[#allocation2 + $0x8] sm:$0xff] %vm79, %v2486
    %2490 = vst.msk [vmem:[#allocation2 + $0x10] sm:$0xff] %vm79, %v2487
    %vm2491 = vcmask 261124
    %2492 = vst.msk [vmem:[#allocation2 - $0x3] sm:$0xf0] %vm2491, %v204
    %2493 = vst.msk [vmem:[#allocation2 + $0x9] sm:$0xf0] %vm2491, %v204
    %v2494 = vld [vmem:[#allocation2] sm:$0xff]
    %v2495 = vld [vmem:[#allocation2 + $0x8] sm:$0xff]
    %v2496 = vld [vmem:[#allocation2 + $0x10] sm:$0xff]
    %s2497 = scalar_lea.vmem %s7, 32
    %v2498 = vld [vmem:[%s2497] sm:$0xff]
    %v2499 = vld [vmem:[%s2497 + $0x8] sm:$0xff]
    %v2500 = vld [vmem:[%s2497 + $0x10] sm:$0xff]
    %v2501 = vld [vmem:[%s2497 + $0x18] sm:$0xff]
    %s2502 = scalar_lea.vmem %s8, 1
    %v2503 = vld [vmem:[%s2502] sm:$0x1]
    %v2505 = vlaneseq
    %v2506 = vshrl.u32 %v2505, 7
    %v2507 = vsub.s32 0, %v2506
    %v2508 = vrot.slane %v2503, %v2507
    %v2511 = vsel %vm79, %v2494, 0
    %v2514 = vsel %vm79, %v2495, 0
    %v2517 = vsel %vm79, %v2496, 0
    %2519 = vmatprep.subr.mxu0 0.0
    %2520 = vmatpush1.msra.mxu0 %v2498
    %2521 = vmatprep.subr.mxu0 0.0
    %2522 = vmatpush1.msra.mxu0 %v2499
    %2523 = vmatprep.subr.mxu0 0.0
    %2524 = vmatpush1.msra.mxu0 %v2500
    %2525 = vmatprep.subr.mxu0 0.0
    %2526 = vmatpush1.msra.mxu0 %v2501
    %2527 = vmatprep.subr.mxu0 0.0
    %2528 = vmatpush1.msra.mxu0 0.0
    %2529 = vmatprep.subr.mxu0 0.0
    %2530 = vmatpush1.msra.mxu0 0.0
    %2531 = vmatprep.subr.mxu0 0.0
    %2532 = vmatpush1.msra.mxu0 0.0
    %2533 = vmatprep.subr.mxu0 0.0
    %2534 = vmatpush1.msra.mxu0 0.0
    %2535 = vmatprep.subr.mxu0 0.0
    %2536 = vmatpush1.msra.mxu0 0.0
    %2537 = vmatprep.subr.mxu0 0.0
    %2538 = vmatpush1.msra.mxu0 0.0
    %2539 = vmatprep.subr.mxu0 0.0
    %2540 = vmatpush1.msra.mxu0 0.0
    %2541 = vmatprep.subr.mxu0 0.0
    %2542 = vmatpush1.msra.mxu0 0.0
    %2543 = vmatprep.subr.mxu0 0.0
    %2544 = vmatpush1.msra.mxu0 0.0
    %2545 = vmatprep.subr.mxu0 0.0
    %2546 = vmatpush1.msra.mxu0 0.0
    %2547 = vmatprep.subr.mxu0 0.0
    %2548 = vmatpush1.msra.mxu0 0.0
    %2549 = vmatprep.subr.mxu0 0.0
    %2550 = vmatpush1.msra.mxu0 0.0
    %2551 = vmatprep.subr.mxu0 0.0
    %2552 = vmatpush1.msra.mxu0 0.0
    %2553 = vmatprep.subr.mxu0 0.0
    %2554 = vmatpush1.msra.mxu0 0.0
    %2555 = vmatprep.subr.mxu0 0.0
    %2556 = vmatpush1.msra.mxu0 0.0
    %2557 = vmatprep.subr.mxu0 0.0
    %2558 = vmatpush1.msra.mxu0 0.0
    %2559 = vmatprep.subr.mxu0 0.0
    %2560 = vmatpush1.msra.mxu0 0.0
    %2561 = vmatprep.subr.mxu0 0.0
    %2562 = vmatpush1.msra.mxu0 0.0
    %2563 = vmatprep.subr.mxu0 0.0
    %2564 = vmatpush1.msra.mxu0 0.0
    %2565 = vmatprep.subr.mxu0 0.0
    %2566 = vmatpush1.msra.mxu0 0.0
    %2567 = vmatprep.subr.mxu0 0.0
    %2568 = vmatpush1.msra.mxu0 0.0
    %2569 = vmatprep.subr.mxu0 0.0
    %2570 = vmatpush1.msra.mxu0 0.0
    %2571 = vmatprep.subr.mxu0 0.0
    %2572 = vmatpush1.msra.mxu0 0.0
    %2573 = vmatprep.subr.mxu0 0.0
    %2574 = vmatpush1.msra.mxu0 0.0
    %2575 = vmatprep.subr.mxu0 0.0
    %2576 = vmatpush1.msra.mxu0 0.0
    %2577 = vmatprep.subr.mxu0 0.0
    %2578 = vmatpush1.msra.mxu0 0.0
    %2579 = vmatprep.subr.mxu0 0.0
    %2580 = vmatpush1.msra.mxu0 0.0
    %2581 = vmatprep.subr.mxu0 0.0
    %2582 = vmatpush1.msra.mxu0 0.0
    %2583 = vmatprep.mubr.f32.mxu0 0.0
    %2584 = vmatmul.mubr.f32.gmra.mrb[0].mxu0 %v2511
    %v2585 = vpop.f32.mrb[0].mxu0
    %v2586 = vadd.f32 %v2508, %v2585
    %v2587 = vpop.f32.mrb[0].mxu0
    %2588 = vmatprep.mubr.f32.mxu0 0.0
    %2589 = vmatmul.mubr.f32.gmra.mrb[0].mxu0 %v2514
    %v2590 = vpop.f32.mrb[0].mxu0
    %v2591 = vadd.f32 %v2508, %v2590
    %v2592 = vpop.f32.mrb[0].mxu0
    %2593 = vmatprep.mubr.f32.mxu0 0.0
    %2594 = vmatmul.mubr.f32.gmra.mrb[0].mxu0 %v2517
    %v2595 = vpop.f32.mrb[0].mxu0
    %v2596 = vadd.f32 %v2508, %v2595
    %v2597 = vpop.f32.mrb[0].mxu0
    %2598 = vdwg.mxu0
    %2601 = vrot.lane.b32.xlu0 %v2586, 96
    %v2602 = vpop.permute.xlu0 %2601
    %2603 = vrot.lane.b32.xlu0 %v2591, 96
    %v2604 = vpop.permute.xlu0 %2603
    %v2605 = vsel %vm326, %v2586, 0
    %v2607 = vsel %vm326, %v2591, 0
    %v2609 = vsel %vm326, %v2602, 0
    %v2611 = vsel %vm326, %v2604, 0
    %2613 = vmatprep.subr.mxu0 0.0
    %2614 = vmatpush1.xpose.msra.mxu0 %v2609
    %2615 = vmatprep.subr.mxu0 0.0
    %2616 = vmatpush1.xpose.msra.mxu0 %v2611
    %2617 = vmatprep.subr.mxu0 0.0
    %2618 = vmatpush1.xpose.msra.mxu0 0.0
    %2619 = vmatprep.subr.mxu0 0.0
    %2620 = vmatpush1.xpose.msra.mxu0 0.0
    %2621 = vmatprep.subr.mxu0 0.0
    %2622 = vmatpush1.xpose.msra.mxu0 0.0
    %2623 = vmatprep.subr.mxu0 0.0
    %2624 = vmatpush1.xpose.msra.mxu0 0.0
    %2625 = vmatprep.subr.mxu0 0.0
    %2626 = vmatpush1.xpose.msra.mxu0 0.0
    %2627 = vmatprep.subr.mxu0 0.0
    %2628 = vmatpush1.xpose.msra.mxu0 0.0
    %2629 = vmatprep.subr.mxu0 0.0
    %2630 = vmatpush1.xpose.msra.mxu0 0.0
    %2631 = vmatprep.subr.mxu0 0.0
    %2632 = vmatpush1.xpose.msra.mxu0 0.0
    %2633 = vmatprep.subr.mxu0 0.0
    %2634 = vmatpush1.xpose.msra.mxu0 0.0
    %2635 = vmatprep.subr.mxu0 0.0
    %2636 = vmatpush1.xpose.msra.mxu0 0.0
    %2637 = vmatprep.subr.mxu0 0.0
    %2638 = vmatpush1.xpose.msra.mxu0 0.0
    %2639 = vmatprep.subr.mxu0 0.0
    %2640 = vmatpush1.xpose.msra.mxu0 0.0
    %2641 = vmatprep.subr.mxu0 0.0
    %2642 = vmatpush1.xpose.msra.mxu0 0.0
    %2643 = vmatprep.subr.mxu0 0.0
    %2644 = vmatpush1.xpose.msra.mxu0 0.0
    %2645 = vmatprep.subr.mxu0 0.0
    %2646 = vmatpush1.xpose.msra.mxu0 0.0
    %2647 = vmatprep.subr.mxu0 0.0
    %2648 = vmatpush1.xpose.msra.mxu0 0.0
    %2649 = vmatprep.subr.mxu0 0.0
    %2650 = vmatpush1.xpose.msra.mxu0 0.0
    %2651 = vmatprep.subr.mxu0 0.0
    %2652 = vmatpush1.xpose.msra.mxu0 0.0
    %2653 = vmatprep.subr.mxu0 0.0
    %2654 = vmatpush1.xpose.msra.mxu0 0.0
    %2655 = vmatprep.subr.mxu0 0.0
    %2656 = vmatpush1.xpose.msra.mxu0 0.0
    %2657 = vmatprep.subr.mxu0 0.0
    %2658 = vmatpush1.xpose.msra.mxu0 0.0
    %2659 = vmatprep.subr.mxu0 0.0
    %2660 = vmatpush1.xpose.msra.mxu0 0.0
    %2661 = vmatprep.subr.mxu0 0.0
    %2662 = vmatpush1.xpose.msra.mxu0 0.0
    %2663 = vmatprep.subr.mxu0 0.0
    %2664 = vmatpush1.xpose.msra.mxu0 0.0
    %2665 = vmatprep.subr.mxu0 0.0
    %2666 = vmatpush1.xpose.msra.mxu0 0.0
    %2667 = vmatprep.subr.mxu0 0.0
    %2668 = vmatpush1.xpose.msra.mxu0 0.0
    %2669 = vmatprep.subr.mxu0 0.0
    %2670 = vmatpush1.xpose.msra.mxu0 0.0
    %2671 = vmatprep.subr.mxu0 0.0
    %2672 = vmatpush1.xpose.msra.mxu0 0.0
    %2673 = vmatprep.subr.mxu0 0.0
    %2674 = vmatpush1.xpose.msra.mxu0 0.0
    %2675 = vmatprep.subr.mxu0 0.0
    %2676 = vmatpush1.xpose.msra.mxu0 0.0
    %2677 = vmatprep.mubr.f32.mxu0 0.0
    %2678 = vmatmul.mubr.f32.gmra.mrb[0].mxu0 %v2605
    %v2679 = vpop.f32.mrb[0].mxu0
    %v2680 = vadd.f32 0.0, %v2679
    %v2681 = vpop.f32.mrb[0].mxu0
    %2682 = vmatprep.mubr.f32.mxu0 0.0
    %2683 = vmatmul.mubr.f32.gmra.mrb[0].mxu0 %v2607
    %v2684 = vpop.f32.mrb[0].mxu0
    %v2685 = vadd.f32 0.0, %v2684
    %v2686 = vpop.f32.mrb[0].mxu0
    %2687 = vdwg.mxu0
    %v2688 = vmul.f32 %v2680, 0.35355338
    %v2689 = vmul.f32 %v2685, 0.35355338
    %v2690 = vadd.f32 %v2688, %v415
    %v2691 = vadd.f32 %v2689, %v415
    %v2692 = vsel %vm418, %v2690, -inf
    %2693 = vmax.xlane.f32.xlu0 %v2692
    %v2694 = vpop.xlane.xlu0 %2693
    %v2695 = vsel %vm422, %v2691, -inf
    %2696 = vmax.xlane.f32.xlu0 %v2695
    %v2697 = vpop.xlane.xlu0 %2696
    %v2698 = vsub.f32 %v2690, %v2694
    %v2699 = vsub.f32 %v2691, %v2697
    %v2700 = vmul.f32 %v2698, 1.442695
    %v2701 = vpow.pop %v2700
    %v2702 = vmul.f32 %v2699, 1.442695
    %v2703 = vpow.pop %v2702
    %v2704 = vsel %vm418, %v2701, 0.0
    %2705 = vadd.xlane.f32.xlu0 %v2704
    %v2706 = vpop.xlane.xlu0 %2705
    %v2707 = vsel %vm422, %v2703, 0.0
    %2708 = vadd.xlane.f32.xlu0 %v2707
    %v2709 = vpop.xlane.xlu0 %2708
    %v2710 = vrcp.pop %v2706
    %v2711 = vrcp.pop %v2709
    %v2712 = vmul.f32 %v2701, %v2710
    %v2713 = vmul.f32 %v2703, %v2711
    %2714 = vrot.lane.b32.xlu0 %v2586, 64
    %v2715 = vpop.permute.xlu0 %2714
    %2716 = vrot.lane.b32.xlu0 %v2591, 64
    %v2717 = vpop.permute.xlu0 %2716
    %v2720 = vsel %vm418, %v2712, 0
    %v2723 = vsel %vm418, %v2713, 0
    %v2725 = vsel %vm453, %v2717, 0
    %2727 = vmatprep.subr.mxu0 0.0
    %2728 = vmatpush1.msra.mxu0 %v2715
    %2729 = vmatprep.subr.mxu0 0.0
    %2730 = vmatpush1.msra.mxu0 %v2725
    %2731 = vmatprep.subr.mxu0 0.0
    %2732 = vmatpush1.msra.mxu0 0.0
    %2733 = vmatprep.subr.mxu0 0.0
    %2734 = vmatpush1.msra.mxu0 0.0
    %2735 = vmatprep.subr.mxu0 0.0
    %2736 = vmatpush1.msra.mxu0 0.0
    %2737 = vmatprep.subr.mxu0 0.0
    %2738 = vmatpush1.msra.mxu0 0.0
    %2739 = vmatprep.subr.mxu0 0.0
    %2740 = vmatpush1.msra.mxu0 0.0
    %2741 = vmatprep.subr.mxu0 0.0
    %2742 = vmatpush1.msra.mxu0 0.0
    %2743 = vmatprep.subr.mxu0 0.0
    %2744 = vmatpush1.msra.mxu0 0.0
    %2745 = vmatprep.subr.mxu0 0.0
    %2746 = vmatpush1.msra.mxu0 0.0
    %2747 = vmatprep.subr.mxu0 0.0
    %2748 = vmatpush1.msra.mxu0 0.0
    %2749 = vmatprep.subr.mxu0 0.0
    %2750 = vmatpush1.msra.mxu0 0.0
    %2751 = vmatprep.subr.mxu0 0.0
    %2752 = vmatpush1.msra.mxu0 0.0
    %2753 = vmatprep.subr.mxu0 0.0
    %2754 = vmatpush1.msra.mxu0 0.0
    %2755 = vmatprep.subr.mxu0 0.0
    %2756 = vmatpush1.msra.mxu0 0.0
    %2757 = vmatprep.subr.mxu0 0.0
    %2758 = vmatpush1.msra.mxu0 0.0
    %2759 = vmatprep.subr.mxu0 0.0
    %2760 = vmatpush1.msra.mxu0 0.0
    %2761 = vmatprep.subr.mxu0 0.0
    %2762 = vmatpush1.msra.mxu0 0.0
    %2763 = vmatprep.subr.mxu0 0.0
    %2764 = vmatpush1.msra.mxu0 0.0
    %2765 = vmatprep.subr.mxu0 0.0
    %2766 = vmatpush1.msra.mxu0 0.0
    %2767 = vmatprep.subr.mxu0 0.0
    %2768 = vmatpush1.msra.mxu0 0.0
    %2769 = vmatprep.subr.mxu0 0.0
    %2770 = vmatpush1.msra.mxu0 0.0
    %2771 = vmatprep.subr.mxu0 0.0
    %2772 = vmatpush1.msra.mxu0 0.0
    %2773 = vmatprep.subr.mxu0 0.0
    %2774 = vmatpush1.msra.mxu0 0.0
    %2775 = vmatprep.subr.mxu0 0.0
    %2776 = vmatpush1.msra.mxu0 0.0
    %2777 = vmatprep.subr.mxu0 0.0
    %2778 = vmatpush1.msra.mxu0 0.0
    %2779 = vmatprep.subr.mxu0 0.0
    %2780 = vmatpush1.msra.mxu0 0.0
    %2781 = vmatprep.subr.mxu0 0.0
    %2782 = vmatpush1.msra.mxu0 0.0
    %2783 = vmatprep.subr.mxu0 0.0
    %2784 = vmatpush1.msra.mxu0 0.0
    %2785 = vmatprep.subr.mxu0 0.0
    %2786 = vmatpush1.msra.mxu0 0.0
    %2787 = vmatprep.subr.mxu0 0.0
    %2788 = vmatpush1.msra.mxu0 0.0
    %2789 = vmatprep.subr.mxu0 0.0
    %2790 = vmatpush1.msra.mxu0 0.0
    %2791 = vmatprep.mubr.f32.mxu0 0.0
    %2792 = vmatmul.mubr.f32.gmra.mrb[0].mxu0 %v2720
    %v2793 = vpop.f32.mrb[0].mxu0
    %v2794 = vadd.f32 0.0, %v2793
    %v2795 = vpop.f32.mrb[0].mxu0
    %2796 = vmatprep.mubr.f32.mxu0 0.0
    %2797 = vmatmul.mubr.f32.gmra.mrb[0].mxu0 %v2723
    %v2798 = vpop.f32.mrb[0].mxu0
    %v2799 = vadd.f32 0.0, %v2798
    %v2800 = vpop.f32.mrb[0].mxu0
    %2801 = vdwg.mxu0
    %2802 = vst.msk [vmem:[#allocation3] sm:$0xff] %vm326, %v2794
    %2803 = vst.msk [vmem:[#allocation3 + $0x8] sm:$0xf] %vm532, %v2799
    %2804 = vrot.lane.b32.xlu0 %v2586, 120
    %v2805 = vpop.permute.xlu0 %2804
    %2806 = vrot.lane.b32.xlu0 %v2591, 120
    %v2807 = vpop.permute.xlu0 %2806
    %2808 = vrot.lane.b32.xlu0 %v2586, 88
    %v2809 = vpop.permute.xlu0 %2808
    %2810 = vrot.lane.b32.xlu0 %v2591, 88
    %v2811 = vpop.permute.xlu0 %2810
    %v2812 = vsel %vm326, %v2805, 0
    %v2814 = vsel %vm326, %v2807, 0
    %v2816 = vsel %vm326, %v2809, 0
    %v2818 = vsel %vm326, %v2811, 0
    %2820 = vmatprep.subr.mxu0 0.0
    %2821 = vmatpush1.xpose.msra.mxu0 %v2816
    %2822 = vmatprep.subr.mxu0 0.0
    %2823 = vmatpush1.xpose.msra.mxu0 %v2818
    %2824 = vmatprep.subr.mxu0 0.0
    %2825 = vmatpush1.xpose.msra.mxu0 0.0
    %2826 = vmatprep.subr.mxu0 0.0
    %2827 = vmatpush1.xpose.msra.mxu0 0.0
    %2828 = vmatprep.subr.mxu0 0.0
    %2829 = vmatpush1.xpose.msra.mxu0 0.0
    %2830 = vmatprep.subr.mxu0 0.0
    %2831 = vmatpush1.xpose.msra.mxu0 0.0
    %2832 = vmatprep.subr.mxu0 0.0
    %2833 = vmatpush1.xpose.msra.mxu0 0.0
    %2834 = vmatprep.subr.mxu0 0.0
    %2835 = vmatpush1.xpose.msra.mxu0 0.0
    %2836 = vmatprep.subr.mxu0 0.0
    %2837 = vmatpush1.xpose.msra.mxu0 0.0
    %2838 = vmatprep.subr.mxu0 0.0
    %2839 = vmatpush1.xpose.msra.mxu0 0.0
    %2840 = vmatprep.subr.mxu0 0.0
    %2841 = vmatpush1.xpose.msra.mxu0 0.0
    %2842 = vmatprep.subr.mxu0 0.0
    %2843 = vmatpush1.xpose.msra.mxu0 0.0
    %2844 = vmatprep.subr.mxu0 0.0
    %2845 = vmatpush1.xpose.msra.mxu0 0.0
    %2846 = vmatprep.subr.mxu0 0.0
    %2847 = vmatpush1.xpose.msra.mxu0 0.0
    %2848 = vmatprep.subr.mxu0 0.0
    %2849 = vmatpush1.xpose.msra.mxu0 0.0
    %2850 = vmatprep.subr.mxu0 0.0
    %2851 = vmatpush1.xpose.msra.mxu0 0.0
    %2852 = vmatprep.subr.mxu0 0.0
    %2853 = vmatpush1.xpose.msra.mxu0 0.0
    %2854 = vmatprep.subr.mxu0 0.0
    %2855 = vmatpush1.xpose.msra.mxu0 0.0
    %2856 = vmatprep.subr.mxu0 0.0
    %2857 = vmatpush1.xpose.msra.mxu0 0.0
    %2858 = vmatprep.subr.mxu0 0.0
    %2859 = vmatpush1.xpose.msra.mxu0 0.0
    %2860 = vmatprep.subr.mxu0 0.0
    %2861 = vmatpush1.xpose.msra.mxu0 0.0
    %2862 = vmatprep.subr.mxu0 0.0
    %2863 = vmatpush1.xpose.msra.mxu0 0.0
    %2864 = vmatprep.subr.mxu0 0.0
    %2865 = vmatpush1.xpose.msra.mxu0 0.0
    %2866 = vmatprep.subr.mxu0 0.0
    %2867 = vmatpush1.xpose.msra.mxu0 0.0
    %2868 = vmatprep.subr.mxu0 0.0
    %2869 = vmatpush1.xpose.msra.mxu0 0.0
    %2870 = vmatprep.subr.mxu0 0.0
    %2871 = vmatpush1.xpose.msra.mxu0 0.0
    %2872 = vmatprep.subr.mxu0 0.0
    %2873 = vmatpush1.xpose.msra.mxu0 0.0
    %2874 = vmatprep.subr.mxu0 0.0
    %2875 = vmatpush1.xpose.msra.mxu0 0.0
    %2876 = vmatprep.subr.mxu0 0.0
    %2877 = vmatpush1.xpose.msra.mxu0 0.0
    %2878 = vmatprep.subr.mxu0 0.0
    %2879 = vmatpush1.xpose.msra.mxu0 0.0
    %2880 = vmatprep.subr.mxu0 0.0
    %2881 = vmatpush1.xpose.msra.mxu0 0.0
    %2882 = vmatprep.subr.mxu0 0.0
    %2883 = vmatpush1.xpose.msra.mxu0 0.0
    %2884 = vmatprep.mubr.f32.mxu0 0.0
    %2885 = vmatmul.mubr.f32.gmra.mrb[0].mxu0 %v2812
    %v2886 = vpop.f32.mrb[0].mxu0
    %v2887 = vadd.f32 0.0, %v2886
    %v2888 = vpop.f32.mrb[0].mxu0
    %2889 = vmatprep.mubr.f32.mxu0 0.0
    %2890 = vmatmul.mubr.f32.gmra.mrb[0].mxu0 %v2814
    %v2891 = vpop.f32.mrb[0].mxu0
    %v2892 = vadd.f32 0.0, %v2891
    %v2893 = vpop.f32.mrb[0].mxu0
    %2894 = vdwg.mxu0
    %v2895 = vmul.f32 %v2887, 0.35355338
    %v2896 = vmul.f32 %v2892, 0.35355338
    %v2897 = vadd.f32 %v2895, %v415
    %v2898 = vadd.f32 %v2896, %v415
    %v2899 = vsel %vm418, %v2897, -inf
    %2900 = vmax.xlane.f32.xlu0 %v2899
    %v2901 = vpop.xlane.xlu0 %2900
    %v2902 = vsel %vm422, %v2898, -inf
    %2903 = vmax.xlane.f32.xlu0 %v2902
    %v2904 = vpop.xlane.xlu0 %2903
    %v2905 = vsub.f32 %v2897, %v2901
    %v2906 = vsub.f32 %v2898, %v2904
    %v2907 = vmul.f32 %v2905, 1.442695
    %v2908 = vpow.pop %v2907
    %v2909 = vmul.f32 %v2906, 1.442695
    %v2910 = vpow.pop %v2909
    %v2911 = vsel %vm418, %v2908, 0.0
    %2912 = vadd.xlane.f32.xlu0 %v2911
    %v2913 = vpop.xlane.xlu0 %2912
    %v2914 = vsel %vm422, %v2910, 0.0
    %2915 = vadd.xlane.f32.xlu0 %v2914
    %v2916 = vpop.xlane.xlu0 %2915
    %v2917 = vrcp.pop %v2913
    %v2918 = vrcp.pop %v2916
    %v2919 = vmul.f32 %v2908, %v2917
    %v2920 = vmul.f32 %v2910, %v2918
    %2921 = vrot.lane.b32.xlu0 %v2586, 56
    %v2922 = vpop.permute.xlu0 %2921
    %2923 = vrot.lane.b32.xlu0 %v2591, 56
    %v2924 = vpop.permute.xlu0 %2923
    %v2927 = vsel %vm418, %v2919, 0
    %v2930 = vsel %vm418, %v2920, 0
    %v2932 = vsel %vm453, %v2924, 0
    %2934 = vmatprep.subr.mxu0 0.0
    %2935 = vmatpush1.msra.mxu0 %v2922
    %2936 = vmatprep.subr.mxu0 0.0
    %2937 = vmatpush1.msra.mxu0 %v2932
    %2938 = vmatprep.subr.mxu0 0.0
    %2939 = vmatpush1.msra.mxu0 0.0
    %2940 = vmatprep.subr.mxu0 0.0
    %2941 = vmatpush1.msra.mxu0 0.0
    %2942 = vmatprep.subr.mxu0 0.0
    %2943 = vmatpush1.msra.mxu0 0.0
    %2944 = vmatprep.subr.mxu0 0.0
    %2945 = vmatpush1.msra.mxu0 0.0
    %2946 = vmatprep.subr.mxu0 0.0
    %2947 = vmatpush1.msra.mxu0 0.0
    %2948 = vmatprep.subr.mxu0 0.0
    %2949 = vmatpush1.msra.mxu0 0.0
    %2950 = vmatprep.subr.mxu0 0.0
    %2951 = vmatpush1.msra.mxu0 0.0
    %2952 = vmatprep.subr.mxu0 0.0
    %2953 = vmatpush1.msra.mxu0 0.0
    %2954 = vmatprep.subr.mxu0 0.0
    %2955 = vmatpush1.msra.mxu0 0.0
    %2956 = vmatprep.subr.mxu0 0.0
    %2957 = vmatpush1.msra.mxu0 0.0
    %2958 = vmatprep.subr.mxu0 0.0
    %2959 = vmatpush1.msra.mxu0 0.0
    %2960 = vmatprep.subr.mxu0 0.0
    %2961 = vmatpush1.msra.mxu0 0.0
    %2962 = vmatprep.subr.mxu0 0.0
    %2963 = vmatpush1.msra.mxu0 0.0
    %2964 = vmatprep.subr.mxu0 0.0
    %2965 = vmatpush1.msra.mxu0 0.0
    %2966 = vmatprep.subr.mxu0 0.0
    %2967 = vmatpush1.msra.mxu0 0.0
    %2968 = vmatprep.subr.mxu0 0.0
    %2969 = vmatpush1.msra.mxu0 0.0
    %2970 = vmatprep.subr.mxu0 0.0
    %2971 = vmatpush1.msra.mxu0 0.0
    %2972 = vmatprep.subr.mxu0 0.0
    %2973 = vmatpush1.msra.mxu0 0.0
    %2974 = vmatprep.subr.mxu0 0.0
    %2975 = vmatpush1.msra.mxu0 0.0
    %2976 = vmatprep.subr.mxu0 0.0
    %2977 = vmatpush1.msra.mxu0 0.0
    %2978 = vmatprep.subr.mxu0 0.0
    %2979 = vmatpush1.msra.mxu0 0.0
    %2980 = vmatprep.subr.mxu0 0.0
    %2981 = vmatpush1.msra.mxu0 0.0
    %2982 = vmatprep.subr.mxu0 0.0
    %2983 = vmatpush1.msra.mxu0 0.0
    %2984 = vmatprep.subr.mxu0 0.0
    %2985 = vmatpush1.msra.mxu0 0.0
    %2986 = vmatprep.subr.mxu0 0.0
    %2987 = vmatpush1.msra.mxu0 0.0
    %2988 = vmatprep.subr.mxu0 0.0
    %2989 = vmatpush1.msra.mxu0 0.0
    %2990 = vmatprep.subr.mxu0 0.0
    %2991 = vmatpush1.msra.mxu0 0.0
    %2992 = vmatprep.subr.mxu0 0.0
    %2993 = vmatpush1.msra.mxu0 0.0
    %2994 = vmatprep.subr.mxu0 0.0
    %2995 = vmatpush1.msra.mxu0 0.0
    %2996 = vmatprep.subr.mxu0 0.0
    %2997 = vmatpush1.msra.mxu0 0.0
    %2998 = vmatprep.mubr.f32.mxu0 0.0
    %2999 = vmatmul.mubr.f32.gmra.mrb[0].mxu0 %v2927
    %v3000 = vpop.f32.mrb[0].mxu0
    %v3001 = vadd.f32 0.0, %v3000
    %v3002 = vpop.f32.mrb[0].mxu0
    %3003 = vmatprep.mubr.f32.mxu0 0.0
    %3004 = vmatmul.mubr.f32.gmra.mrb[0].mxu0 %v2930
    %v3005 = vpop.f32.mrb[0].mxu0
    %v3006 = vadd.f32 0.0, %v3005
    %v3007 = vpop.f32.mrb[0].mxu0
    %3008 = vdwg.mxu0
    %3011 = vrot.lane.b32.xlu0 %v3001, 8
    %v3012 = vpop.permute.xlu0 %3011
    %3013 = vrot.lane.b32.xlu0 %v3006, 8
    %v3014 = vpop.permute.xlu0 %3013
    %3017 = vst.msk [vmem:[#allocation3] sm:$0xff] %vm747, %v3012
    %3018 = vst.msk [vmem:[#allocation3 + $0x8] sm:$0xf] %vm749, %v3014
    %3019 = vrot.lane.b32.xlu0 %v2586, 112
    %v3020 = vpop.permute.xlu0 %3019
    %3021 = vrot.lane.b32.xlu0 %v2591, 112
    %v3022 = vpop.permute.xlu0 %3021
    %3023 = vrot.lane.b32.xlu0 %v2586, 80
    %v3024 = vpop.permute.xlu0 %3023
    %3025 = vrot.lane.b32.xlu0 %v2591, 80
    %v3026 = vpop.permute.xlu0 %3025
    %v3027 = vsel %vm326, %v3020, 0
    %v3029 = vsel %vm326, %v3022, 0
    %v3031 = vsel %vm326, %v3024, 0
    %v3033 = vsel %vm326, %v3026, 0
    %3035 = vmatprep.subr.mxu0 0.0
    %3036 = vmatpush1.xpose.msra.mxu0 %v3031
    %3037 = vmatprep.subr.mxu0 0.0
    %3038 = vmatpush1.xpose.msra.mxu0 %v3033
    %3039 = vmatprep.subr.mxu0 0.0
    %3040 = vmatpush1.xpose.msra.mxu0 0.0
    %3041 = vmatprep.subr.mxu0 0.0
    %3042 = vmatpush1.xpose.msra.mxu0 0.0
    %3043 = vmatprep.subr.mxu0 0.0
    %3044 = vmatpush1.xpose.msra.mxu0 0.0
    %3045 = vmatprep.subr.mxu0 0.0
    %3046 = vmatpush1.xpose.msra.mxu0 0.0
    %3047 = vmatprep.subr.mxu0 0.0
    %3048 = vmatpush1.xpose.msra.mxu0 0.0
    %3049 = vmatprep.subr.mxu0 0.0
    %3050 = vmatpush1.xpose.msra.mxu0 0.0
    %3051 = vmatprep.subr.mxu0 0.0
    %3052 = vmatpush1.xpose.msra.mxu0 0.0
    %3053 = vmatprep.subr.mxu0 0.0
    %3054 = vmatpush1.xpose.msra.mxu0 0.0
    %3055 = vmatprep.subr.mxu0 0.0
    %3056 = vmatpush1.xpose.msra.mxu0 0.0
    %3057 = vmatprep.subr.mxu0 0.0
    %3058 = vmatpush1.xpose.msra.mxu0 0.0
    %3059 = vmatprep.subr.mxu0 0.0
    %3060 = vmatpush1.xpose.msra.mxu0 0.0
    %3061 = vmatprep.subr.mxu0 0.0
    %3062 = vmatpush1.xpose.msra.mxu0 0.0
    %3063 = vmatprep.subr.mxu0 0.0
    %3064 = vmatpush1.xpose.msra.mxu0 0.0
    %3065 = vmatprep.subr.mxu0 0.0
    %3066 = vmatpush1.xpose.msra.mxu0 0.0
    %3067 = vmatprep.subr.mxu0 0.0
    %3068 = vmatpush1.xpose.msra.mxu0 0.0
    %3069 = vmatprep.subr.mxu0 0.0
    %3070 = vmatpush1.xpose.msra.mxu0 0.0
    %3071 = vmatprep.subr.mxu0 0.0
    %3072 = vmatpush1.xpose.msra.mxu0 0.0
    %3073 = vmatprep.subr.mxu0 0.0
    %3074 = vmatpush1.xpose.msra.mxu0 0.0
    %3075 = vmatprep.subr.mxu0 0.0
    %3076 = vmatpush1.xpose.msra.mxu0 0.0
    %3077 = vmatprep.subr.mxu0 0.0
    %3078 = vmatpush1.xpose.msra.mxu0 0.0
    %3079 = vmatprep.subr.mxu0 0.0
    %3080 = vmatpush1.xpose.msra.mxu0 0.0
    %3081 = vmatprep.subr.mxu0 0.0
    %3082 = vmatpush1.xpose.msra.mxu0 0.0
    %3083 = vmatprep.subr.mxu0 0.0
    %3084 = vmatpush1.xpose.msra.mxu0 0.0
    %3085 = vmatprep.subr.mxu0 0.0
    %3086 = vmatpush1.xpose.msra.mxu0 0.0
    %3087 = vmatprep.subr.mxu0 0.0
    %3088 = vmatpush1.xpose.msra.mxu0 0.0
    %3089 = vmatprep.subr.mxu0 0.0
    %3090 = vmatpush1.xpose.msra.mxu0 0.0
    %3091 = vmatprep.subr.mxu0 0.0
    %3092 = vmatpush1.xpose.msra.mxu0 0.0
    %3093 = vmatprep.subr.mxu0 0.0
    %3094 = vmatpush1.xpose.msra.mxu0 0.0
    %3095 = vmatprep.subr.mxu0 0.0
    %3096 = vmatpush1.xpose.msra.mxu0 0.0
    %3097 = vmatprep.subr.mxu0 0.0
    %3098 = vmatpush1.xpose.msra.mxu0 0.0
    %3099 = vmatprep.mubr.f32.mxu0 0.0
    %3100 = vmatmul.mubr.f32.gmra.mrb[0].mxu0 %v3027
    %v3101 = vpop.f32.mrb[0].mxu0
    %v3102 = vadd.f32 0.0, %v3101
    %v3103 = vpop.f32.mrb[0].mxu0
    %3104 = vmatprep.mubr.f32.mxu0 0.0
    %3105 = vmatmul.mubr.f32.gmra.mrb[0].mxu0 %v3029
    %v3106 = vpop.f32.mrb[0].mxu0
    %v3107 = vadd.f32 0.0, %v3106
    %v3108 = vpop.f32.mrb[0].mxu0
    %3109 = vdwg.mxu0
    %v3110 = vmul.f32 %v3102, 0.35355338
    %v3111 = vmul.f32 %v3107, 0.35355338
    %v3112 = vadd.f32 %v3110, %v415
    %v3113 = vadd.f32 %v3111, %v415
    %v3114 = vsel %vm418, %v3112, -inf
    %3115 = vmax.xlane.f32.xlu0 %v3114
    %v3116 = vpop.xlane.xlu0 %3115
    %v3117 = vsel %vm422, %v3113, -inf
    %3118 = vmax.xlane.f32.xlu0 %v3117
    %v3119 = vpop.xlane.xlu0 %3118
    %v3120 = vsub.f32 %v3112, %v3116
    %v3121 = vsub.f32 %v3113, %v3119
    %v3122 = vmul.f32 %v3120, 1.442695
    %v3123 = vpow.pop %v3122
    %v3124 = vmul.f32 %v3121, 1.442695
    %v3125 = vpow.pop %v3124
    %v3126 = vsel %vm418, %v3123, 0.0
    %3127 = vadd.xlane.f32.xlu0 %v3126
    %v3128 = vpop.xlane.xlu0 %3127
    %v3129 = vsel %vm422, %v3125, 0.0
    %3130 = vadd.xlane.f32.xlu0 %v3129
    %v3131 = vpop.xlane.xlu0 %3130
    %v3132 = vrcp.pop %v3128
    %v3133 = vrcp.pop %v3131
    %v3134 = vmul.f32 %v3123, %v3132
    %v3135 = vmul.f32 %v3125, %v3133
    %3136 = vrot.lane.b32.xlu0 %v2586, 48
    %v3137 = vpop.permute.xlu0 %3136
    %3138 = vrot.lane.b32.xlu0 %v2591, 48
    %v3139 = vpop.permute.xlu0 %3138
    %v3142 = vsel %vm418, %v3134, 0
    %v3145 = vsel %vm418, %v3135, 0
    %v3147 = vsel %vm453, %v3139, 0
    %3149 = vmatprep.subr.mxu0 0.0
    %3150 = vmatpush1.msra.mxu0 %v3137
    %3151 = vmatprep.subr.mxu0 0.0
    %3152 = vmatpush1.msra.mxu0 %v3147
    %3153 = vmatprep.subr.mxu0 0.0
    %3154 = vmatpush1.msra.mxu0 0.0
    %3155 = vmatprep.subr.mxu0 0.0
    %3156 = vmatpush1.msra.mxu0 0.0
    %3157 = vmatprep.subr.mxu0 0.0
    %3158 = vmatpush1.msra.mxu0 0.0
    %3159 = vmatprep.subr.mxu0 0.0
    %3160 = vmatpush1.msra.mxu0 0.0
    %3161 = vmatprep.subr.mxu0 0.0
    %3162 = vmatpush1.msra.mxu0 0.0
    %3163 = vmatprep.subr.mxu0 0.0
    %3164 = vmatpush1.msra.mxu0 0.0
    %3165 = vmatprep.subr.mxu0 0.0
    %3166 = vmatpush1.msra.mxu0 0.0
    %3167 = vmatprep.subr.mxu0 0.0
    %3168 = vmatpush1.msra.mxu0 0.0
    %3169 = vmatprep.subr.mxu0 0.0
    %3170 = vmatpush1.msra.mxu0 0.0
    %3171 = vmatprep.subr.mxu0 0.0
    %3172 = vmatpush1.msra.mxu0 0.0
    %3173 = vmatprep.subr.mxu0 0.0
    %3174 = vmatpush1.msra.mxu0 0.0
    %3175 = vmatprep.subr.mxu0 0.0
    %3176 = vmatpush1.msra.mxu0 0.0
    %3177 = vmatprep.subr.mxu0 0.0
    %3178 = vmatpush1.msra.mxu0 0.0
    %3179 = vmatprep.subr.mxu0 0.0
    %3180 = vmatpush1.msra.mxu0 0.0
    %3181 = vmatprep.subr.mxu0 0.0
    %3182 = vmatpush1.msra.mxu0 0.0
    %3183 = vmatprep.subr.mxu0 0.0
    %3184 = vmatpush1.msra.mxu0 0.0
    %3185 = vmatprep.subr.mxu0 0.0
    %3186 = vmatpush1.msra.mxu0 0.0
    %3187 = vmatprep.subr.mxu0 0.0
    %3188 = vmatpush1.msra.mxu0 0.0
    %3189 = vmatprep.subr.mxu0 0.0
    %3190 = vmatpush1.msra.mxu0 0.0
    %3191 = vmatprep.subr.mxu0 0.0
    %3192 = vmatpush1.msra.mxu0 0.0
    %3193 = vmatprep.subr.mxu0 0.0
    %3194 = vmatpush1.msra.mxu0 0.0
    %3195 = vmatprep.subr.mxu0 0.0
    %3196 = vmatpush1.msra.mxu0 0.0
    %3197 = vmatprep.subr.mxu0 0.0
    %3198 = vmatpush1.msra.mxu0 0.0
    %3199 = vmatprep.subr.mxu0 0.0
    %3200 = vmatpush1.msra.mxu0 0.0
    %3201 = vmatprep.subr.mxu0 0.0
    %3202 = vmatpush1.msra.mxu0 0.0
    %3203 = vmatprep.subr.mxu0 0.0
    %3204 = vmatpush1.msra.mxu0 0.0
    %3205 = vmatprep.subr.mxu0 0.0
    %3206 = vmatpush1.msra.mxu0 0.0
    %3207 = vmatprep.subr.mxu0 0.0
    %3208 = vmatpush1.msra.mxu0 0.0
    %3209 = vmatprep.subr.mxu0 0.0
    %3210 = vmatpush1.msra.mxu0 0.0
    %3211 = vmatprep.subr.mxu0 0.0
    %3212 = vmatpush1.msra.mxu0 0.0
    %3213 = vmatprep.mubr.f32.mxu0 0.0
    %3214 = vmatmul.mubr.f32.gmra.mrb[0].mxu0 %v3142
    %v3215 = vpop.f32.mrb[0].mxu0
    %v3216 = vadd.f32 0.0, %v3215
    %v3217 = vpop.f32.mrb[0].mxu0
    %3218 = vmatprep.mubr.f32.mxu0 0.0
    %3219 = vmatmul.mubr.f32.gmra.mrb[0].mxu0 %v3145
    %v3220 = vpop.f32.mrb[0].mxu0
    %v3221 = vadd.f32 0.0, %v3220
    %v3222 = vpop.f32.mrb[0].mxu0
    %3223 = vdwg.mxu0
    %3226 = vrot.lane.b32.xlu0 %v3216, 16
    %v3227 = vpop.permute.xlu0 %3226
    %3228 = vrot.lane.b32.xlu0 %v3221, 16
    %v3229 = vpop.permute.xlu0 %3228
    %3232 = vst.msk [vmem:[#allocation3] sm:$0xff] %vm964, %v3227
    %3233 = vst.msk [vmem:[#allocation3 + $0x8] sm:$0xf] %vm966, %v3229
    %3234 = vrot.lane.b32.xlu0 %v2586, 104
    %v3235 = vpop.permute.xlu0 %3234
    %3236 = vrot.lane.b32.xlu0 %v2591, 104
    %v3237 = vpop.permute.xlu0 %3236
    %3238 = vrot.lane.b32.xlu0 %v2586, 72
    %v3239 = vpop.permute.xlu0 %3238
    %3240 = vrot.lane.b32.xlu0 %v2591, 72
    %v3241 = vpop.permute.xlu0 %3240
    %v3242 = vsel %vm326, %v3235, 0
    %v3244 = vsel %vm326, %v3237, 0
    %v3246 = vsel %vm326, %v3239, 0
    %v3248 = vsel %vm326, %v3241, 0
    %3250 = vmatprep.subr.mxu0 0.0
    %3251 = vmatpush1.xpose.msra.mxu0 %v3246
    %3252 = vmatprep.subr.mxu0 0.0
    %3253 = vmatpush1.xpose.msra.mxu0 %v3248
    %3254 = vmatprep.subr.mxu0 0.0
    %3255 = vmatpush1.xpose.msra.mxu0 0.0
    %3256 = vmatprep.subr.mxu0 0.0
    %3257 = vmatpush1.xpose.msra.mxu0 0.0
    %3258 = vmatprep.subr.mxu0 0.0
    %3259 = vmatpush1.xpose.msra.mxu0 0.0
    %3260 = vmatprep.subr.mxu0 0.0
    %3261 = vmatpush1.xpose.msra.mxu0 0.0
    %3262 = vmatprep.subr.mxu0 0.0
    %3263 = vmatpush1.xpose.msra.mxu0 0.0
    %3264 = vmatprep.subr.mxu0 0.0
    %3265 = vmatpush1.xpose.msra.mxu0 0.0
    %3266 = vmatprep.subr.mxu0 0.0
    %3267 = vmatpush1.xpose.msra.mxu0 0.0
    %3268 = vmatprep.subr.mxu0 0.0
    %3269 = vmatpush1.xpose.msra.mxu0 0.0
    %3270 = vmatprep.subr.mxu0 0.0
    %3271 = vmatpush1.xpose.msra.mxu0 0.0
    %3272 = vmatprep.subr.mxu0 0.0
    %3273 = vmatpush1.xpose.msra.mxu0 0.0
    %3274 = vmatprep.subr.mxu0 0.0
    %3275 = vmatpush1.xpose.msra.mxu0 0.0
    %3276 = vmatprep.subr.mxu0 0.0
    %3277 = vmatpush1.xpose.msra.mxu0 0.0
    %3278 = vmatprep.subr.mxu0 0.0
    %3279 = vmatpush1.xpose.msra.mxu0 0.0
    %3280 = vmatprep.subr.mxu0 0.0
    %3281 = vmatpush1.xpose.msra.mxu0 0.0
    %3282 = vmatprep.subr.mxu0 0.0
    %3283 = vmatpush1.xpose.msra.mxu0 0.0
    %3284 = vmatprep.subr.mxu0 0.0
    %3285 = vmatpush1.xpose.msra.mxu0 0.0
    %3286 = vmatprep.subr.mxu0 0.0
    %3287 = vmatpush1.xpose.msra.mxu0 0.0
    %3288 = vmatprep.subr.mxu0 0.0
    %3289 = vmatpush1.xpose.msra.mxu0 0.0
    %3290 = vmatprep.subr.mxu0 0.0
    %3291 = vmatpush1.xpose.msra.mxu0 0.0
    %3292 = vmatprep.subr.mxu0 0.0
    %3293 = vmatpush1.xpose.msra.mxu0 0.0
    %3294 = vmatprep.subr.mxu0 0.0
    %3295 = vmatpush1.xpose.msra.mxu0 0.0
    %3296 = vmatprep.subr.mxu0 0.0
    %3297 = vmatpush1.xpose.msra.mxu0 0.0
    %3298 = vmatprep.subr.mxu0 0.0
    %3299 = vmatpush1.xpose.msra.mxu0 0.0
    %3300 = vmatprep.subr.mxu0 0.0
    %3301 = vmatpush1.xpose.msra.mxu0 0.0
    %3302 = vmatprep.subr.mxu0 0.0
    %3303 = vmatpush1.xpose.msra.mxu0 0.0
    %3304 = vmatprep.subr.mxu0 0.0
    %3305 = vmatpush1.xpose.msra.mxu0 0.0
    %3306 = vmatprep.subr.mxu0 0.0
    %3307 = vmatpush1.xpose.msra.mxu0 0.0
    %3308 = vmatprep.subr.mxu0 0.0
    %3309 = vmatpush1.xpose.msra.mxu0 0.0
    %3310 = vmatprep.subr.mxu0 0.0
    %3311 = vmatpush1.xpose.msra.mxu0 0.0
    %3312 = vmatprep.subr.mxu0 0.0
    %3313 = vmatpush1.xpose.msra.mxu0 0.0
    %3314 = vmatprep.mubr.f32.mxu0 0.0
    %3315 = vmatmul.mubr.f32.gmra.mrb[0].mxu0 %v3242
    %v3316 = vpop.f32.mrb[0].mxu0
    %v3317 = vadd.f32 0.0, %v3316
    %v3318 = vpop.f32.mrb[0].mxu0
    %3319 = vmatprep.mubr.f32.mxu0 0.0
    %3320 = vmatmul.mubr.f32.gmra.mrb[0].mxu0 %v3244
    %v3321 = vpop.f32.mrb[0].mxu0
    %v3322 = vadd.f32 0.0, %v3321
    %v3323 = vpop.f32.mrb[0].mxu0
    %3324 = vdwg.mxu0
    %v3325 = vmul.f32 %v3317, 0.35355338
    %v3326 = vmul.f32 %v3322, 0.35355338
    %v3327 = vadd.f32 %v3325, %v415
    %v3328 = vadd.f32 %v3326, %v415
    %v3329 = vsel %vm418, %v3327, -inf
    %3330 = vmax.xlane.f32.xlu0 %v3329
    %v3331 = vpop.xlane.xlu0 %3330
    %v3332 = vsel %vm422, %v3328, -inf
    %3333 = vmax.xlane.f32.xlu0 %v3332
    %v3334 = vpop.xlane.xlu0 %3333
    %v3335 = vsub.f32 %v3327, %v3331
    %v3336 = vsub.f32 %v3328, %v3334
    %v3337 = vmul.f32 %v3335, 1.442695
    %v3338 = vpow.pop %v3337
    %v3339 = vmul.f32 %v3336, 1.442695
    %v3340 = vpow.pop %v3339
    %v3341 = vsel %vm418, %v3338, 0.0
    %3342 = vadd.xlane.f32.xlu0 %v3341
    %v3343 = vpop.xlane.xlu0 %3342
    %v3344 = vsel %vm422, %v3340, 0.0
    %3345 = vadd.xlane.f32.xlu0 %v3344
    %v3346 = vpop.xlane.xlu0 %3345
    %v3347 = vrcp.pop %v3343
    %v3348 = vrcp.pop %v3346
    %v3349 = vmul.f32 %v3338, %v3347
    %v3350 = vmul.f32 %v3340, %v3348
    %3351 = vrot.lane.b32.xlu0 %v2586, 40
    %v3352 = vpop.permute.xlu0 %3351
    %3353 = vrot.lane.b32.xlu0 %v2591, 40
    %v3354 = vpop.permute.xlu0 %3353
    %v3357 = vsel %vm418, %v3349, 0
    %v3360 = vsel %vm418, %v3350, 0
    %v3362 = vsel %vm453, %v3354, 0
    %3364 = vmatprep.subr.mxu0 0.0
    %3365 = vmatpush1.msra.mxu0 %v3352
    %3366 = vmatprep.subr.mxu0 0.0
    %3367 = vmatpush1.msra.mxu0 %v3362
    %3368 = vmatprep.subr.mxu0 0.0
    %3369 = vmatpush1.msra.mxu0 0.0
    %3370 = vmatprep.subr.mxu0 0.0
    %3371 = vmatpush1.msra.mxu0 0.0
    %3372 = vmatprep.subr.mxu0 0.0
    %3373 = vmatpush1.msra.mxu0 0.0
    %3374 = vmatprep.subr.mxu0 0.0
    %3375 = vmatpush1.msra.mxu0 0.0
    %3376 = vmatprep.subr.mxu0 0.0
    %3377 = vmatpush1.msra.mxu0 0.0
    %3378 = vmatprep.subr.mxu0 0.0
    %3379 = vmatpush1.msra.mxu0 0.0
    %3380 = vmatprep.subr.mxu0 0.0
    %3381 = vmatpush1.msra.mxu0 0.0
    %3382 = vmatprep.subr.mxu0 0.0
    %3383 = vmatpush1.msra.mxu0 0.0
    %3384 = vmatprep.subr.mxu0 0.0
    %3385 = vmatpush1.msra.mxu0 0.0
    %3386 = vmatprep.subr.mxu0 0.0
    %3387 = vmatpush1.msra.mxu0 0.0
    %3388 = vmatprep.subr.mxu0 0.0
    %3389 = vmatpush1.msra.mxu0 0.0
    %3390 = vmatprep.subr.mxu0 0.0
    %3391 = vmatpush1.msra.mxu0 0.0
    %3392 = vmatprep.subr.mxu0 0.0
    %3393 = vmatpush1.msra.mxu0 0.0
    %3394 = vmatprep.subr.mxu0 0.0
    %3395 = vmatpush1.msra.mxu0 0.0
    %3396 = vmatprep.subr.mxu0 0.0
    %3397 = vmatpush1.msra.mxu0 0.0
    %3398 = vmatprep.subr.mxu0 0.0
    %3399 = vmatpush1.msra.mxu0 0.0
    %3400 = vmatprep.subr.mxu0 0.0
    %3401 = vmatpush1.msra.mxu0 0.0
    %3402 = vmatprep.subr.mxu0 0.0
    %3403 = vmatpush1.msra.mxu0 0.0
    %3404 = vmatprep.subr.mxu0 0.0
    %3405 = vmatpush1.msra.mxu0 0.0
    %3406 = vmatprep.subr.mxu0 0.0
    %3407 = vmatpush1.msra.mxu0 0.0
    %3408 = vmatprep.subr.mxu0 0.0
    %3409 = vmatpush1.msra.mxu0 0.0
    %3410 = vmatprep.subr.mxu0 0.0
    %3411 = vmatpush1.msra.mxu0 0.0
    %3412 = vmatprep.subr.mxu0 0.0
    %3413 = vmatpush1.msra.mxu0 0.0
    %3414 = vmatprep.subr.mxu0 0.0
    %3415 = vmatpush1.msra.mxu0 0.0
    %3416 = vmatprep.subr.mxu0 0.0
    %3417 = vmatpush1.msra.mxu0 0.0
    %3418 = vmatprep.subr.mxu0 0.0
    %3419 = vmatpush1.msra.mxu0 0.0
    %3420 = vmatprep.subr.mxu0 0.0
    %3421 = vmatpush1.msra.mxu0 0.0
    %3422 = vmatprep.subr.mxu0 0.0
    %3423 = vmatpush1.msra.mxu0 0.0
    %3424 = vmatprep.subr.mxu0 0.0
    %3425 = vmatpush1.msra.mxu0 0.0
    %3426 = vmatprep.subr.mxu0 0.0
    %3427 = vmatpush1.msra.mxu0 0.0
    %3428 = vmatprep.mubr.f32.mxu0 0.0
    %3429 = vmatmul.mubr.f32.gmra.mrb[0].mxu0 %v3357
    %v3430 = vpop.f32.mrb[0].mxu0
    %v3431 = vadd.f32 0.0, %v3430
    %v3432 = vpop.f32.mrb[0].mxu0
    %3433 = vmatprep.mubr.f32.mxu0 0.0
    %3434 = vmatmul.mubr.f32.gmra.mrb[0].mxu0 %v3360
    %v3435 = vpop.f32.mrb[0].mxu0
    %v3436 = vadd.f32 0.0, %v3435
    %v3437 = vpop.f32.mrb[0].mxu0
    %3438 = vdwg.mxu0
    %3441 = vrot.lane.b32.xlu0 %v3431, 24
    %v3442 = vpop.permute.xlu0 %3441
    %3443 = vrot.lane.b32.xlu0 %v3436, 24
    %v3444 = vpop.permute.xlu0 %3443
    %3447 = vst.msk [vmem:[#allocation3] sm:$0xff] %vm1181, %v3442
    %3448 = vst.msk [vmem:[#allocation3 + $0x8] sm:$0xf] %vm1183, %v3444
    %v3450 = vrot.slane %v2591, 4
    %v3451 = vrot.slane %v2596, 4
    %v3452 = vsel %vm453, %v3450, %v3451
    %3453 = vrot.lane.b32.xlu0 %v3452, 96
    %v3454 = vpop.permute.xlu0 %3453
    %3455 = vrot.lane.b32.xlu0 %v3451, 96
    %v3456 = vpop.permute.xlu0 %3455
    %v3457 = vsel %vm326, %v3452, 0
    %v3459 = vsel %vm326, %v3451, 0
    %v3461 = vsel %vm326, %v3454, 0
    %v3463 = vsel %vm326, %v3456, 0
    %3465 = vmatprep.subr.mxu0 0.0
    %3466 = vmatpush1.xpose.msra.mxu0 %v3461
    %3467 = vmatprep.subr.mxu0 0.0
    %3468 = vmatpush1.xpose.msra.mxu0 %v3463
    %3469 = vmatprep.subr.mxu0 0.0
    %3470 = vmatpush1.xpose.msra.mxu0 0.0
    %3471 = vmatprep.subr.mxu0 0.0
    %3472 = vmatpush1.xpose.msra.mxu0 0.0
    %3473 = vmatprep.subr.mxu0 0.0
    %3474 = vmatpush1.xpose.msra.mxu0 0.0
    %3475 = vmatprep.subr.mxu0 0.0
    %3476 = vmatpush1.xpose.msra.mxu0 0.0
    %3477 = vmatprep.subr.mxu0 0.0
    %3478 = vmatpush1.xpose.msra.mxu0 0.0
    %3479 = vmatprep.subr.mxu0 0.0
    %3480 = vmatpush1.xpose.msra.mxu0 0.0
    %3481 = vmatprep.subr.mxu0 0.0
    %3482 = vmatpush1.xpose.msra.mxu0 0.0
    %3483 = vmatprep.subr.mxu0 0.0
    %3484 = vmatpush1.xpose.msra.mxu0 0.0
    %3485 = vmatprep.subr.mxu0 0.0
    %3486 = vmatpush1.xpose.msra.mxu0 0.0
    %3487 = vmatprep.subr.mxu0 0.0
    %3488 = vmatpush1.xpose.msra.mxu0 0.0
    %3489 = vmatprep.subr.mxu0 0.0
    %3490 = vmatpush1.xpose.msra.mxu0 0.0
    %3491 = vmatprep.subr.mxu0 0.0
    %3492 = vmatpush1.xpose.msra.mxu0 0.0
    %3493 = vmatprep.subr.mxu0 0.0
    %3494 = vmatpush1.xpose.msra.mxu0 0.0
    %3495 = vmatprep.subr.mxu0 0.0
    %3496 = vmatpush1.xpose.msra.mxu0 0.0
    %3497 = vmatprep.subr.mxu0 0.0
    %3498 = vmatpush1.xpose.msra.mxu0 0.0
    %3499 = vmatprep.subr.mxu0 0.0
    %3500 = vmatpush1.xpose.msra.mxu0 0.0
    %3501 = vmatprep.subr.mxu0 0.0
    %3502 = vmatpush1.xpose.msra.mxu0 0.0
    %3503 = vmatprep.subr.mxu0 0.0
    %3504 = vmatpush1.xpose.msra.mxu0 0.0
    %3505 = vmatprep.subr.mxu0 0.0
    %3506 = vmatpush1.xpose.msra.mxu0 0.0
    %3507 = vmatprep.subr.mxu0 0.0
    %3508 = vmatpush1.xpose.msra.mxu0 0.0
    %3509 = vmatprep.subr.mxu0 0.0
    %3510 = vmatpush1.xpose.msra.mxu0 0.0
    %3511 = vmatprep.subr.mxu0 0.0
    %3512 = vmatpush1.xpose.msra.mxu0 0.0
    %3513 = vmatprep.subr.mxu0 0.0
    %3514 = vmatpush1.xpose.msra.mxu0 0.0
    %3515 = vmatprep.subr.mxu0 0.0
    %3516 = vmatpush1.xpose.msra.mxu0 0.0
    %3517 = vmatprep.subr.mxu0 0.0
    %3518 = vmatpush1.xpose.msra.mxu0 0.0
    %3519 = vmatprep.subr.mxu0 0.0
    %3520 = vmatpush1.xpose.msra.mxu0 0.0
    %3521 = vmatprep.subr.mxu0 0.0
    %3522 = vmatpush1.xpose.msra.mxu0 0.0
    %3523 = vmatprep.subr.mxu0 0.0
    %3524 = vmatpush1.xpose.msra.mxu0 0.0
    %3525 = vmatprep.subr.mxu0 0.0
    %3526 = vmatpush1.xpose.msra.mxu0 0.0
    %3527 = vmatprep.subr.mxu0 0.0
    %3528 = vmatpush1.xpose.msra.mxu0 0.0
    %3529 = vmatprep.mubr.f32.mxu0 0.0
    %3530 = vmatmul.mubr.f32.gmra.mrb[0].mxu0 %v3457
    %v3531 = vpop.f32.mrb[0].mxu0
    %v3532 = vadd.f32 0.0, %v3531
    %v3533 = vpop.f32.mrb[0].mxu0
    %3534 = vmatprep.mubr.f32.mxu0 0.0
    %3535 = vmatmul.mubr.f32.gmra.mrb[0].mxu0 %v3459
    %v3536 = vpop.f32.mrb[0].mxu0
    %v3537 = vadd.f32 0.0, %v3536
    %v3538 = vpop.f32.mrb[0].mxu0
    %3539 = vdwg.mxu0
    %v3540 = vmul.f32 %v3532, 0.35355338
    %v3541 = vmul.f32 %v3537, 0.35355338
    %v3542 = vadd.f32 %v3540, %v1281
    %v3543 = vadd.f32 %v3541, %v1281
    %v3544 = vsel %vm418, %v3542, -inf
    %3545 = vmax.xlane.f32.xlu0 %v3544
    %v3546 = vpop.xlane.xlu0 %3545
    %v3547 = vsel %vm422, %v3543, -inf
    %3548 = vmax.xlane.f32.xlu0 %v3547
    %v3549 = vpop.xlane.xlu0 %3548
    %v3550 = vsub.f32 %v3542, %v3546
    %v3551 = vsub.f32 %v3543, %v3549
    %v3552 = vmul.f32 %v3550, 1.442695
    %v3553 = vpow.pop %v3552
    %v3554 = vmul.f32 %v3551, 1.442695
    %v3555 = vpow.pop %v3554
    %v3556 = vsel %vm418, %v3553, 0.0
    %3557 = vadd.xlane.f32.xlu0 %v3556
    %v3558 = vpop.xlane.xlu0 %3557
    %v3559 = vsel %vm422, %v3555, 0.0
    %3560 = vadd.xlane.f32.xlu0 %v3559
    %v3561 = vpop.xlane.xlu0 %3560
    %v3562 = vrcp.pop %v3558
    %v3563 = vrcp.pop %v3561
    %v3564 = vmul.f32 %v3553, %v3562
    %v3565 = vmul.f32 %v3555, %v3563
    %3566 = vrot.lane.b32.xlu0 %v3452, 64
    %v3567 = vpop.permute.xlu0 %3566
    %3568 = vrot.lane.b32.xlu0 %v3451, 64
    %v3569 = vpop.permute.xlu0 %3568
    %v3572 = vsel %vm418, %v3564, 0
    %v3575 = vsel %vm418, %v3565, 0
    %v3577 = vsel %vm453, %v3569, 0
    %3579 = vmatprep.subr.mxu0 0.0
    %3580 = vmatpush1.msra.mxu0 %v3567
    %3581 = vmatprep.subr.mxu0 0.0
    %3582 = vmatpush1.msra.mxu0 %v3577
    %3583 = vmatprep.subr.mxu0 0.0
    %3584 = vmatpush1.msra.mxu0 0.0
    %3585 = vmatprep.subr.mxu0 0.0
    %3586 = vmatpush1.msra.mxu0 0.0
    %3587 = vmatprep.subr.mxu0 0.0
    %3588 = vmatpush1.msra.mxu0 0.0
    %3589 = vmatprep.subr.mxu0 0.0
    %3590 = vmatpush1.msra.mxu0 0.0
    %3591 = vmatprep.subr.mxu0 0.0
    %3592 = vmatpush1.msra.mxu0 0.0
    %3593 = vmatprep.subr.mxu0 0.0
    %3594 = vmatpush1.msra.mxu0 0.0
    %3595 = vmatprep.subr.mxu0 0.0
    %3596 = vmatpush1.msra.mxu0 0.0
    %3597 = vmatprep.subr.mxu0 0.0
    %3598 = vmatpush1.msra.mxu0 0.0
    %3599 = vmatprep.subr.mxu0 0.0
    %3600 = vmatpush1.msra.mxu0 0.0
    %3601 = vmatprep.subr.mxu0 0.0
    %3602 = vmatpush1.msra.mxu0 0.0
    %3603 = vmatprep.subr.mxu0 0.0
    %3604 = vmatpush1.msra.mxu0 0.0
    %3605 = vmatprep.subr.mxu0 0.0
    %3606 = vmatpush1.msra.mxu0 0.0
    %3607 = vmatprep.subr.mxu0 0.0
    %3608 = vmatpush1.msra.mxu0 0.0
    %3609 = vmatprep.subr.mxu0 0.0
    %3610 = vmatpush1.msra.mxu0 0.0
    %3611 = vmatprep.subr.mxu0 0.0
    %3612 = vmatpush1.msra.mxu0 0.0
    %3613 = vmatprep.subr.mxu0 0.0
    %3614 = vmatpush1.msra.mxu0 0.0
    %3615 = vmatprep.subr.mxu0 0.0
    %3616 = vmatpush1.msra.mxu0 0.0
    %3617 = vmatprep.subr.mxu0 0.0
    %3618 = vmatpush1.msra.mxu0 0.0
    %3619 = vmatprep.subr.mxu0 0.0
    %3620 = vmatpush1.msra.mxu0 0.0
    %3621 = vmatprep.subr.mxu0 0.0
    %3622 = vmatpush1.msra.mxu0 0.0
    %3623 = vmatprep.subr.mxu0 0.0
    %3624 = vmatpush1.msra.mxu0 0.0
    %3625 = vmatprep.subr.mxu0 0.0
    %3626 = vmatpush1.msra.mxu0 0.0
    %3627 = vmatprep.subr.mxu0 0.0
    %3628 = vmatpush1.msra.mxu0 0.0
    %3629 = vmatprep.subr.mxu0 0.0
    %3630 = vmatpush1.msra.mxu0 0.0
    %3631 = vmatprep.subr.mxu0 0.0
    %3632 = vmatpush1.msra.mxu0 0.0
    %3633 = vmatprep.subr.mxu0 0.0
    %3634 = vmatpush1.msra.mxu0 0.0
    %3635 = vmatprep.subr.mxu0 0.0
    %3636 = vmatpush1.msra.mxu0 0.0
    %3637 = vmatprep.subr.mxu0 0.0
    %3638 = vmatpush1.msra.mxu0 0.0
    %3639 = vmatprep.subr.mxu0 0.0
    %3640 = vmatpush1.msra.mxu0 0.0
    %3641 = vmatprep.subr.mxu0 0.0
    %3642 = vmatpush1.msra.mxu0 0.0
    %3643 = vmatprep.mubr.f32.mxu0 0.0
    %3644 = vmatmul.mubr.f32.gmra.mrb[0].mxu0 %v3572
    %v3645 = vpop.f32.mrb[0].mxu0
    %v3646 = vadd.f32 0.0, %v3645
    %v3647 = vpop.f32.mrb[0].mxu0
    %3648 = vmatprep.mubr.f32.mxu0 0.0
    %3649 = vmatmul.mubr.f32.gmra.mrb[0].mxu0 %v3575
    %v3650 = vpop.f32.mrb[0].mxu0
    %v3651 = vadd.f32 0.0, %v3650
    %v3652 = vpop.f32.mrb[0].mxu0
    %3653 = vdwg.mxu0
    %3654 = vst.msk [vmem:[#allocation3 + $0xc] sm:$0xff] %vm326, %v3646
    %3655 = vst.msk [vmem:[#allocation3 + $0x14] sm:$0xf] %vm532, %v3651
    %3656 = vrot.lane.b32.xlu0 %v3452, 120
    %v3657 = vpop.permute.xlu0 %3656
    %3658 = vrot.lane.b32.xlu0 %v3451, 120
    %v3659 = vpop.permute.xlu0 %3658
    %3660 = vrot.lane.b32.xlu0 %v3452, 88
    %v3661 = vpop.permute.xlu0 %3660
    %3662 = vrot.lane.b32.xlu0 %v3451, 88
    %v3663 = vpop.permute.xlu0 %3662
    %v3664 = vsel %vm326, %v3657, 0
    %v3666 = vsel %vm326, %v3659, 0
    %v3668 = vsel %vm326, %v3661, 0
    %v3670 = vsel %vm326, %v3663, 0
    %3672 = vmatprep.subr.mxu0 0.0
    %3673 = vmatpush1.xpose.msra.mxu0 %v3668
    %3674 = vmatprep.subr.mxu0 0.0
    %3675 = vmatpush1.xpose.msra.mxu0 %v3670
    %3676 = vmatprep.subr.mxu0 0.0
    %3677 = vmatpush1.xpose.msra.mxu0 0.0
    %3678 = vmatprep.subr.mxu0 0.0
    %3679 = vmatpush1.xpose.msra.mxu0 0.0
    %3680 = vmatprep.subr.mxu0 0.0
    %3681 = vmatpush1.xpose.msra.mxu0 0.0
    %3682 = vmatprep.subr.mxu0 0.0
    %3683 = vmatpush1.xpose.msra.mxu0 0.0
    %3684 = vmatprep.subr.mxu0 0.0
    %3685 = vmatpush1.xpose.msra.mxu0 0.0
    %3686 = vmatprep.subr.mxu0 0.0
    %3687 = vmatpush1.xpose.msra.mxu0 0.0
    %3688 = vmatprep.subr.mxu0 0.0
    %3689 = vmatpush1.xpose.msra.mxu0 0.0
    %3690 = vmatprep.subr.mxu0 0.0
    %3691 = vmatpush1.xpose.msra.mxu0 0.0
    %3692 = vmatprep.subr.mxu0 0.0
    %3693 = vmatpush1.xpose.msra.mxu0 0.0
    %3694 = vmatprep.subr.mxu0 0.0
    %3695 = vmatpush1.xpose.msra.mxu0 0.0
    %3696 = vmatprep.subr.mxu0 0.0
    %3697 = vmatpush1.xpose.msra.mxu0 0.0
    %3698 = vmatprep.subr.mxu0 0.0
    %3699 = vmatpush1.xpose.msra.mxu0 0.0
    %3700 = vmatprep.subr.mxu0 0.0
    %3701 = vmatpush1.xpose.msra.mxu0 0.0
    %3702 = vmatprep.subr.mxu0 0.0
    %3703 = vmatpush1.xpose.msra.mxu0 0.0
    %3704 = vmatprep.subr.mxu0 0.0
    %3705 = vmatpush1.xpose.msra.mxu0 0.0
    %3706 = vmatprep.subr.mxu0 0.0
    %3707 = vmatpush1.xpose.msra.mxu0 0.0
    %3708 = vmatprep.subr.mxu0 0.0
    %3709 = vmatpush1.xpose.msra.mxu0 0.0
    %3710 = vmatprep.subr.mxu0 0.0
    %3711 = vmatpush1.xpose.msra.mxu0 0.0
    %3712 = vmatprep.subr.mxu0 0.0
    %3713 = vmatpush1.xpose.msra.mxu0 0.0
    %3714 = vmatprep.subr.mxu0 0.0
    %3715 = vmatpush1.xpose.msra.mxu0 0.0
    %3716 = vmatprep.subr.mxu0 0.0
    %3717 = vmatpush1.xpose.msra.mxu0 0.0
    %3718 = vmatprep.subr.mxu0 0.0
    %3719 = vmatpush1.xpose.msra.mxu0 0.0
    %3720 = vmatprep.subr.mxu0 0.0
    %3721 = vmatpush1.xpose.msra.mxu0 0.0
    %3722 = vmatprep.subr.mxu0 0.0
    %3723 = vmatpush1.xpose.msra.mxu0 0.0
    %3724 = vmatprep.subr.mxu0 0.0
    %3725 = vmatpush1.xpose.msra.mxu0 0.0
    %3726 = vmatprep.subr.mxu0 0.0
    %3727 = vmatpush1.xpose.msra.mxu0 0.0
    %3728 = vmatprep.subr.mxu0 0.0
    %3729 = vmatpush1.xpose.msra.mxu0 0.0
    %3730 = vmatprep.subr.mxu0 0.0
    %3731 = vmatpush1.xpose.msra.mxu0 0.0
    %3732 = vmatprep.subr.mxu0 0.0
    %3733 = vmatpush1.xpose.msra.mxu0 0.0
    %3734 = vmatprep.subr.mxu0 0.0
    %3735 = vmatpush1.xpose.msra.mxu0 0.0
    %3736 = vmatprep.mubr.f32.mxu0 0.0
    %3737 = vmatmul.mubr.f32.gmra.mrb[0].mxu0 %v3664
    %v3738 = vpop.f32.mrb[0].mxu0
    %v3739 = vadd.f32 0.0, %v3738
    %v3740 = vpop.f32.mrb[0].mxu0
    %3741 = vmatprep.mubr.f32.mxu0 0.0
    %3742 = vmatmul.mubr.f32.gmra.mrb[0].mxu0 %v3666
    %v3743 = vpop.f32.mrb[0].mxu0
    %v3744 = vadd.f32 0.0, %v3743
    %v3745 = vpop.f32.mrb[0].mxu0
    %3746 = vdwg.mxu0
    %v3747 = vmul.f32 %v3739, 0.35355338
    %v3748 = vmul.f32 %v3744, 0.35355338
    %v3749 = vadd.f32 %v3747, %v1281
    %v3750 = vadd.f32 %v3748, %v1281
    %v3751 = vsel %vm418, %v3749, -inf
    %3752 = vmax.xlane.f32.xlu0 %v3751
    %v3753 = vpop.xlane.xlu0 %3752
    %v3754 = vsel %vm422, %v3750, -inf
    %3755 = vmax.xlane.f32.xlu0 %v3754
    %v3756 = vpop.xlane.xlu0 %3755
    %v3757 = vsub.f32 %v3749, %v3753
    %v3758 = vsub.f32 %v3750, %v3756
    %v3759 = vmul.f32 %v3757, 1.442695
    %v3760 = vpow.pop %v3759
    %v3761 = vmul.f32 %v3758, 1.442695
    %v3762 = vpow.pop %v3761
    %v3763 = vsel %vm418, %v3760, 0.0
    %3764 = vadd.xlane.f32.xlu0 %v3763
    %v3765 = vpop.xlane.xlu0 %3764
    %v3766 = vsel %vm422, %v3762, 0.0
    %3767 = vadd.xlane.f32.xlu0 %v3766
    %v3768 = vpop.xlane.xlu0 %3767
    %v3769 = vrcp.pop %v3765
    %v3770 = vrcp.pop %v3768
    %v3771 = vmul.f32 %v3760, %v3769
    %v3772 = vmul.f32 %v3762, %v3770
    %3773 = vrot.lane.b32.xlu0 %v3452, 56
    %v3774 = vpop.permute.xlu0 %3773
    %3775 = vrot.lane.b32.xlu0 %v3451, 56
    %v3776 = vpop.permute.xlu0 %3775
    %v3779 = vsel %vm418, %v3771, 0
    %v3782 = vsel %vm418, %v3772, 0
    %v3784 = vsel %vm453, %v3776, 0
    %3786 = vmatprep.subr.mxu0 0.0
    %3787 = vmatpush1.msra.mxu0 %v3774
    %3788 = vmatprep.subr.mxu0 0.0
    %3789 = vmatpush1.msra.mxu0 %v3784
    %3790 = vmatprep.subr.mxu0 0.0
    %3791 = vmatpush1.msra.mxu0 0.0
    %3792 = vmatprep.subr.mxu0 0.0
    %3793 = vmatpush1.msra.mxu0 0.0
    %3794 = vmatprep.subr.mxu0 0.0
    %3795 = vmatpush1.msra.mxu0 0.0
    %3796 = vmatprep.subr.mxu0 0.0
    %3797 = vmatpush1.msra.mxu0 0.0
    %3798 = vmatprep.subr.mxu0 0.0
    %3799 = vmatpush1.msra.mxu0 0.0
    %3800 = vmatprep.subr.mxu0 0.0
    %3801 = vmatpush1.msra.mxu0 0.0
    %3802 = vmatprep.subr.mxu0 0.0
    %3803 = vmatpush1.msra.mxu0 0.0
    %3804 = vmatprep.subr.mxu0 0.0
    %3805 = vmatpush1.msra.mxu0 0.0
    %3806 = vmatprep.subr.mxu0 0.0
    %3807 = vmatpush1.msra.mxu0 0.0
    %3808 = vmatprep.subr.mxu0 0.0
    %3809 = vmatpush1.msra.mxu0 0.0
    %3810 = vmatprep.subr.mxu0 0.0
    %3811 = vmatpush1.msra.mxu0 0.0
    %3812 = vmatprep.subr.mxu0 0.0
    %3813 = vmatpush1.msra.mxu0 0.0
    %3814 = vmatprep.subr.mxu0 0.0
    %3815 = vmatpush1.msra.mxu0 0.0
    %3816 = vmatprep.subr.mxu0 0.0
    %3817 = vmatpush1.msra.mxu0 0.0
    %3818 = vmatprep.subr.mxu0 0.0
    %3819 = vmatpush1.msra.mxu0 0.0
    %3820 = vmatprep.subr.mxu0 0.0
    %3821 = vmatpush1.msra.mxu0 0.0
    %3822 = vmatprep.subr.mxu0 0.0
    %3823 = vmatpush1.msra.mxu0 0.0
    %3824 = vmatprep.subr.mxu0 0.0
    %3825 = vmatpush1.msra.mxu0 0.0
    %3826 = vmatprep.subr.mxu0 0.0
    %3827 = vmatpush1.msra.mxu0 0.0
    %3828 = vmatprep.subr.mxu0 0.0
    %3829 = vmatpush1.msra.mxu0 0.0
    %3830 = vmatprep.subr.mxu0 0.0
    %3831 = vmatpush1.msra.mxu0 0.0
    %3832 = vmatprep.subr.mxu0 0.0
    %3833 = vmatpush1.msra.mxu0 0.0
    %3834 = vmatprep.subr.mxu0 0.0
    %3835 = vmatpush1.msra.mxu0 0.0
    %3836 = vmatprep.subr.mxu0 0.0
    %3837 = vmatpush1.msra.mxu0 0.0
    %3838 = vmatprep.subr.mxu0 0.0
    %3839 = vmatpush1.msra.mxu0 0.0
    %3840 = vmatprep.subr.mxu0 0.0
    %3841 = vmatpush1.msra.mxu0 0.0
    %3842 = vmatprep.subr.mxu0 0.0
    %3843 = vmatpush1.msra.mxu0 0.0
    %3844 = vmatprep.subr.mxu0 0.0
    %3845 = vmatpush1.msra.mxu0 0.0
    %3846 = vmatprep.subr.mxu0 0.0
    %3847 = vmatpush1.msra.mxu0 0.0
    %3848 = vmatprep.subr.mxu0 0.0
    %3849 = vmatpush1.msra.mxu0 0.0
    %3850 = vmatprep.mubr.f32.mxu0 0.0
    %3851 = vmatmul.mubr.f32.gmra.mrb[0].mxu0 %v3779
    %v3852 = vpop.f32.mrb[0].mxu0
    %v3853 = vadd.f32 0.0, %v3852
    %v3854 = vpop.f32.mrb[0].mxu0
    %3855 = vmatprep.mubr.f32.mxu0 0.0
    %3856 = vmatmul.mubr.f32.gmra.mrb[0].mxu0 %v3782
    %v3857 = vpop.f32.mrb[0].mxu0
    %v3858 = vadd.f32 0.0, %v3857
    %v3859 = vpop.f32.mrb[0].mxu0
    %3860 = vdwg.mxu0
    %3863 = vrot.lane.b32.xlu0 %v3853, 8
    %v3864 = vpop.permute.xlu0 %3863
    %3865 = vrot.lane.b32.xlu0 %v3858, 8
    %v3866 = vpop.permute.xlu0 %3865
    %3869 = vst.msk [vmem:[#allocation3 + $0xc] sm:$0xff] %vm747, %v3864
    %3870 = vst.msk [vmem:[#allocation3 + $0x14] sm:$0xf] %vm749, %v3866
    %3871 = vrot.lane.b32.xlu0 %v3452, 112
    %v3872 = vpop.permute.xlu0 %3871
    %3873 = vrot.lane.b32.xlu0 %v3451, 112
    %v3874 = vpop.permute.xlu0 %3873
    %3875 = vrot.lane.b32.xlu0 %v3452, 80
    %v3876 = vpop.permute.xlu0 %3875
    %3877 = vrot.lane.b32.xlu0 %v3451, 80
    %v3878 = vpop.permute.xlu0 %3877
    %v3879 = vsel %vm326, %v3872, 0
    %v3881 = vsel %vm326, %v3874, 0
    %v3883 = vsel %vm326, %v3876, 0
    %v3885 = vsel %vm326, %v3878, 0
    %3887 = vmatprep.subr.mxu0 0.0
    %3888 = vmatpush1.xpose.msra.mxu0 %v3883
    %3889 = vmatprep.subr.mxu0 0.0
    %3890 = vmatpush1.xpose.msra.mxu0 %v3885
    %3891 = vmatprep.subr.mxu0 0.0
    %3892 = vmatpush1.xpose.msra.mxu0 0.0
    %3893 = vmatprep.subr.mxu0 0.0
    %3894 = vmatpush1.xpose.msra.mxu0 0.0
    %3895 = vmatprep.subr.mxu0 0.0
    %3896 = vmatpush1.xpose.msra.mxu0 0.0
    %3897 = vmatprep.subr.mxu0 0.0
    %3898 = vmatpush1.xpose.msra.mxu0 0.0
    %3899 = vmatprep.subr.mxu0 0.0
    %3900 = vmatpush1.xpose.msra.mxu0 0.0
    %3901 = vmatprep.subr.mxu0 0.0
    %3902 = vmatpush1.xpose.msra.mxu0 0.0
    %3903 = vmatprep.subr.mxu0 0.0
    %3904 = vmatpush1.xpose.msra.mxu0 0.0
    %3905 = vmatprep.subr.mxu0 0.0
    %3906 = vmatpush1.xpose.msra.mxu0 0.0
    %3907 = vmatprep.subr.mxu0 0.0
    %3908 = vmatpush1.xpose.msra.mxu0 0.0
    %3909 = vmatprep.subr.mxu0 0.0
    %3910 = vmatpush1.xpose.msra.mxu0 0.0
    %3911 = vmatprep.subr.mxu0 0.0
    %3912 = vmatpush1.xpose.msra.mxu0 0.0
    %3913 = vmatprep.subr.mxu0 0.0
    %3914 = vmatpush1.xpose.msra.mxu0 0.0
    %3915 = vmatprep.subr.mxu0 0.0
    %3916 = vmatpush1.xpose.msra.mxu0 0.0
    %3917 = vmatprep.subr.mxu0 0.0
    %3918 = vmatpush1.xpose.msra.mxu0 0.0
    %3919 = vmatprep.subr.mxu0 0.0
    %3920 = vmatpush1.xpose.msra.mxu0 0.0
    %3921 = vmatprep.subr.mxu0 0.0
    %3922 = vmatpush1.xpose.msra.mxu0 0.0
    %3923 = vmatprep.subr.mxu0 0.0
    %3924 = vmatpush1.xpose.msra.mxu0 0.0
    %3925 = vmatprep.subr.mxu0 0.0
    %3926 = vmatpush1.xpose.msra.mxu0 0.0
    %3927 = vmatprep.subr.mxu0 0.0
    %3928 = vmatpush1.xpose.msra.mxu0 0.0
    %3929 = vmatprep.subr.mxu0 0.0
    %3930 = vmatpush1.xpose.msra.mxu0 0.0
    %3931 = vmatprep.subr.mxu0 0.0
    %3932 = vmatpush1.xpose.msra.mxu0 0.0
    %3933 = vmatprep.subr.mxu0 0.0
    %3934 = vmatpush1.xpose.msra.mxu0 0.0
    %3935 = vmatprep.subr.mxu0 0.0
    %3936 = vmatpush1.xpose.msra.mxu0 0.0
    %3937 = vmatprep.subr.mxu0 0.0
    %3938 = vmatpush1.xpose.msra.mxu0 0.0
    %3939 = vmatprep.subr.mxu0 0.0
    %3940 = vmatpush1.xpose.msra.mxu0 0.0
    %3941 = vmatprep.subr.mxu0 0.0
    %3942 = vmatpush1.xpose.msra.mxu0 0.0
    %3943 = vmatprep.subr.mxu0 0.0
    %3944 = vmatpush1.xpose.msra.mxu0 0.0
    %3945 = vmatprep.subr.mxu0 0.0
    %3946 = vmatpush1.xpose.msra.mxu0 0.0
    %3947 = vmatprep.subr.mxu0 0.0
    %3948 = vmatpush1.xpose.msra.mxu0 0.0
    %3949 = vmatprep.subr.mxu0 0.0
    %3950 = vmatpush1.xpose.msra.mxu0 0.0
    %3951 = vmatprep.mubr.f32.mxu0 0.0
    %3952 = vmatmul.mubr.f32.gmra.mrb[0].mxu0 %v3879
    %v3953 = vpop.f32.mrb[0].mxu0
    %v3954 = vadd.f32 0.0, %v3953
    %v3955 = vpop.f32.mrb[0].mxu0
    %3956 = vmatprep.mubr.f32.mxu0 0.0
    %3957 = vmatmul.mubr.f32.gmra.mrb[0].mxu0 %v3881
    %v3958 = vpop.f32.mrb[0].mxu0
    %v3959 = vadd.f32 0.0, %v3958
    %v3960 = vpop.f32.mrb[0].mxu0
    %3961 = vdwg.mxu0
    %v3962 = vmul.f32 %v3954, 0.35355338
    %v3963 = vmul.f32 %v3959, 0.35355338
    %v3964 = vadd.f32 %v3962, %v1281
    %v3965 = vadd.f32 %v3963, %v1281
    %v3966 = vsel %vm418, %v3964, -inf
    %3967 = vmax.xlane.f32.xlu0 %v3966
    %v3968 = vpop.xlane.xlu0 %3967
    %v3969 = vsel %vm422, %v3965, -inf
    %3970 = vmax.xlane.f32.xlu0 %v3969
    %v3971 = vpop.xlane.xlu0 %3970
    %v3972 = vsub.f32 %v3964, %v3968
    %v3973 = vsub.f32 %v3965, %v3971
    %v3974 = vmul.f32 %v3972, 1.442695
    %v3975 = vpow.pop %v3974
    %v3976 = vmul.f32 %v3973, 1.442695
    %v3977 = vpow.pop %v3976
    %v3978 = vsel %vm418, %v3975, 0.0
    %3979 = vadd.xlane.f32.xlu0 %v3978
    %v3980 = vpop.xlane.xlu0 %3979
    %v3981 = vsel %vm422, %v3977, 0.0
    %3982 = vadd.xlane.f32.xlu0 %v3981
    %v3983 = vpop.xlane.xlu0 %3982
    %v3984 = vrcp.pop %v3980
    %v3985 = vrcp.pop %v3983
    %v3986 = vmul.f32 %v3975, %v3984
    %v3987 = vmul.f32 %v3977, %v3985
    %3988 = vrot.lane.b32.xlu0 %v3452, 48
    %v3989 = vpop.permute.xlu0 %3988
    %3990 = vrot.lane.b32.xlu0 %v3451, 48
    %v3991 = vpop.permute.xlu0 %3990
    %v3994 = vsel %vm418, %v3986, 0
    %v3997 = vsel %vm418, %v3987, 0
    %v3999 = vsel %vm453, %v3991, 0
    %4001 = vmatprep.subr.mxu0 0.0
    %4002 = vmatpush1.msra.mxu0 %v3989
    %4003 = vmatprep.subr.mxu0 0.0
    %4004 = vmatpush1.msra.mxu0 %v3999
    %4005 = vmatprep.subr.mxu0 0.0
    %4006 = vmatpush1.msra.mxu0 0.0
    %4007 = vmatprep.subr.mxu0 0.0
    %4008 = vmatpush1.msra.mxu0 0.0
    %4009 = vmatprep.subr.mxu0 0.0
    %4010 = vmatpush1.msra.mxu0 0.0
    %4011 = vmatprep.subr.mxu0 0.0
    %4012 = vmatpush1.msra.mxu0 0.0
    %4013 = vmatprep.subr.mxu0 0.0
    %4014 = vmatpush1.msra.mxu0 0.0
    %4015 = vmatprep.subr.mxu0 0.0
    %4016 = vmatpush1.msra.mxu0 0.0
    %4017 = vmatprep.subr.mxu0 0.0
    %4018 = vmatpush1.msra.mxu0 0.0
    %4019 = vmatprep.subr.mxu0 0.0
    %4020 = vmatpush1.msra.mxu0 0.0
    %4021 = vmatprep.subr.mxu0 0.0
    %4022 = vmatpush1.msra.mxu0 0.0
    %4023 = vmatprep.subr.mxu0 0.0
    %4024 = vmatpush1.msra.mxu0 0.0
    %4025 = vmatprep.subr.mxu0 0.0
    %4026 = vmatpush1.msra.mxu0 0.0
    %4027 = vmatprep.subr.mxu0 0.0
    %4028 = vmatpush1.msra.mxu0 0.0
    %4029 = vmatprep.subr.mxu0 0.0
    %4030 = vmatpush1.msra.mxu0 0.0
    %4031 = vmatprep.subr.mxu0 0.0
    %4032 = vmatpush1.msra.mxu0 0.0
    %4033 = vmatprep.subr.mxu0 0.0
    %4034 = vmatpush1.msra.mxu0 0.0
    %4035 = vmatprep.subr.mxu0 0.0
    %4036 = vmatpush1.msra.mxu0 0.0
    %4037 = vmatprep.subr.mxu0 0.0
    %4038 = vmatpush1.msra.mxu0 0.0
    %4039 = vmatprep.subr.mxu0 0.0
    %4040 = vmatpush1.msra.mxu0 0.0
    %4041 = vmatprep.subr.mxu0 0.0
    %4042 = vmatpush1.msra.mxu0 0.0
    %4043 = vmatprep.subr.mxu0 0.0
    %4044 = vmatpush1.msra.mxu0 0.0
    %4045 = vmatprep.subr.mxu0 0.0
    %4046 = vmatpush1.msra.mxu0 0.0
    %4047 = vmatprep.subr.mxu0 0.0
    %4048 = vmatpush1.msra.mxu0 0.0
    %4049 = vmatprep.subr.mxu0 0.0
    %4050 = vmatpush1.msra.mxu0 0.0
    %4051 = vmatprep.subr.mxu0 0.0
    %4052 = vmatpush1.msra.mxu0 0.0
    %4053 = vmatprep.subr.mxu0 0.0
    %4054 = vmatpush1.msra.mxu0 0.0
    %4055 = vmatprep.subr.mxu0 0.0
    %4056 = vmatpush1.msra.mxu0 0.0
    %4057 = vmatprep.subr.mxu0 0.0
    %4058 = vmatpush1.msra.mxu0 0.0
    %4059 = vmatprep.subr.mxu0 0.0
    %4060 = vmatpush1.msra.mxu0 0.0
    %4061 = vmatprep.subr.mxu0 0.0
    %4062 = vmatpush1.msra.mxu0 0.0
    %4063 = vmatprep.subr.mxu0 0.0
    %4064 = vmatpush1.msra.mxu0 0.0
    %4065 = vmatprep.mubr.f32.mxu0 0.0
    %4066 = vmatmul.mubr.f32.gmra.mrb[0].mxu0 %v3994
    %v4067 = vpop.f32.mrb[0].mxu0
    %v4068 = vadd.f32 0.0, %v4067
    %v4069 = vpop.f32.mrb[0].mxu0
    %4070 = vmatprep.mubr.f32.mxu0 0.0
    %4071 = vmatmul.mubr.f32.gmra.mrb[0].mxu0 %v3997
    %v4072 = vpop.f32.mrb[0].mxu0
    %v4073 = vadd.f32 0.0, %v4072
    %v4074 = vpop.f32.mrb[0].mxu0
    %4075 = vdwg.mxu0
    %4078 = vrot.lane.b32.xlu0 %v4068, 16
    %v4079 = vpop.permute.xlu0 %4078
    %4080 = vrot.lane.b32.xlu0 %v4073, 16
    %v4081 = vpop.permute.xlu0 %4080
    %4084 = vst.msk [vmem:[#allocation3 + $0xc] sm:$0xff] %vm964, %v4079
    %4085 = vst.msk [vmem:[#allocation3 + $0x14] sm:$0xf] %vm966, %v4081
    %4086 = vrot.lane.b32.xlu0 %v3452, 104
    %v4087 = vpop.permute.xlu0 %4086
    %4088 = vrot.lane.b32.xlu0 %v3451, 104
    %v4089 = vpop.permute.xlu0 %4088
    %4090 = vrot.lane.b32.xlu0 %v3452, 72
    %v4091 = vpop.permute.xlu0 %4090
    %4092 = vrot.lane.b32.xlu0 %v3451, 72
    %v4093 = vpop.permute.xlu0 %4092
    %v4094 = vsel %vm326, %v4087, 0
    %v4096 = vsel %vm326, %v4089, 0
    %v4098 = vsel %vm326, %v4091, 0
    %v4100 = vsel %vm326, %v4093, 0
    %4102 = vmatprep.subr.mxu0 0.0
    %4103 = vmatpush1.xpose.msra.mxu0 %v4098
    %4104 = vmatprep.subr.mxu0 0.0
    %4105 = vmatpush1.xpose.msra.mxu0 %v4100
    %4106 = vmatprep.subr.mxu0 0.0
    %4107 = vmatpush1.xpose.msra.mxu0 0.0
    %4108 = vmatprep.subr.mxu0 0.0
    %4109 = vmatpush1.xpose.msra.mxu0 0.0
    %4110 = vmatprep.subr.mxu0 0.0
    %4111 = vmatpush1.xpose.msra.mxu0 0.0
    %4112 = vmatprep.subr.mxu0 0.0
    %4113 = vmatpush1.xpose.msra.mxu0 0.0
    %4114 = vmatprep.subr.mxu0 0.0
    %4115 = vmatpush1.xpose.msra.mxu0 0.0
    %4116 = vmatprep.subr.mxu0 0.0
    %4117 = vmatpush1.xpose.msra.mxu0 0.0
    %4118 = vmatprep.subr.mxu0 0.0
    %4119 = vmatpush1.xpose.msra.mxu0 0.0
    %4120 = vmatprep.subr.mxu0 0.0
    %4121 = vmatpush1.xpose.msra.mxu0 0.0
    %4122 = vmatprep.subr.mxu0 0.0
    %4123 = vmatpush1.xpose.msra.mxu0 0.0
    %4124 = vmatprep.subr.mxu0 0.0
    %4125 = vmatpush1.xpose.msra.mxu0 0.0
    %4126 = vmatprep.subr.mxu0 0.0
    %4127 = vmatpush1.xpose.msra.mxu0 0.0
    %4128 = vmatprep.subr.mxu0 0.0
    %4129 = vmatpush1.xpose.msra.mxu0 0.0
    %4130 = vmatprep.subr.mxu0 0.0
    %4131 = vmatpush1.xpose.msra.mxu0 0.0
    %4132 = vmatprep.subr.mxu0 0.0
    %4133 = vmatpush1.xpose.msra.mxu0 0.0
    %4134 = vmatprep.subr.mxu0 0.0
    %4135 = vmatpush1.xpose.msra.mxu0 0.0
    %4136 = vmatprep.subr.mxu0 0.0
    %4137 = vmatpush1.xpose.msra.mxu0 0.0
    %4138 = vmatprep.subr.mxu0 0.0
    %4139 = vmatpush1.xpose.msra.mxu0 0.0
    %4140 = vmatprep.subr.mxu0 0.0
    %4141 = vmatpush1.xpose.msra.mxu0 0.0
    %4142 = vmatprep.subr.mxu0 0.0
    %4143 = vmatpush1.xpose.msra.mxu0 0.0
    %4144 = vmatprep.subr.mxu0 0.0
    %4145 = vmatpush1.xpose.msra.mxu0 0.0
    %4146 = vmatprep.subr.mxu0 0.0
    %4147 = vmatpush1.xpose.msra.mxu0 0.0
    %4148 = vmatprep.subr.mxu0 0.0
    %4149 = vmatpush1.xpose.msra.mxu0 0.0
    %4150 = vmatprep.subr.mxu0 0.0
    %4151 = vmatpush1.xpose.msra.mxu0 0.0
    %4152 = vmatprep.subr.mxu0 0.0
    %4153 = vmatpush1.xpose.msra.mxu0 0.0
    %4154 = vmatprep.subr.mxu0 0.0
    %4155 = vmatpush1.xpose.msra.mxu0 0.0
    %4156 = vmatprep.subr.mxu0 0.0
    %4157 = vmatpush1.xpose.msra.mxu0 0.0
    %4158 = vmatprep.subr.mxu0 0.0
    %4159 = vmatpush1.xpose.msra.mxu0 0.0
    %4160 = vmatprep.subr.mxu0 0.0
    %4161 = vmatpush1.xpose.msra.mxu0 0.0
    %4162 = vmatprep.subr.mxu0 0.0
    %4163 = vmatpush1.xpose.msra.mxu0 0.0
    %4164 = vmatprep.subr.mxu0 0.0
    %4165 = vmatpush1.xpose.msra.mxu0 0.0
    %4166 = vmatprep.mubr.f32.mxu0 0.0
    %4167 = vmatmul.mubr.f32.gmra.mrb[0].mxu0 %v4094
    %v4168 = vpop.f32.mrb[0].mxu0
    %v4169 = vadd.f32 0.0, %v4168
    %v4170 = vpop.f32.mrb[0].mxu0
    %4171 = vmatprep.mubr.f32.mxu0 0.0
    %4172 = vmatmul.mubr.f32.gmra.mrb[0].mxu0 %v4096
    %v4173 = vpop.f32.mrb[0].mxu0
    %v4174 = vadd.f32 0.0, %v4173
    %v4175 = vpop.f32.mrb[0].mxu0
    %4176 = vdwg.mxu0
    %v4177 = vmul.f32 %v4169, 0.35355338
    %v4178 = vmul.f32 %v4174, 0.35355338
    %v4179 = vadd.f32 %v4177, %v1281
    %v4180 = vadd.f32 %v4178, %v1281
    %v4181 = vsel %vm418, %v4179, -inf
    %4182 = vmax.xlane.f32.xlu0 %v4181
    %v4183 = vpop.xlane.xlu0 %4182
    %v4184 = vsel %vm422, %v4180, -inf
    %4185 = vmax.xlane.f32.xlu0 %v4184
    %v4186 = vpop.xlane.xlu0 %4185
    %v4187 = vsub.f32 %v4179, %v4183
    %v4188 = vsub.f32 %v4180, %v4186
    %v4189 = vmul.f32 %v4187, 1.442695
    %v4190 = vpow.pop %v4189
    %v4191 = vmul.f32 %v4188, 1.442695
    %v4192 = vpow.pop %v4191
    %v4193 = vsel %vm418, %v4190, 0.0
    %4194 = vadd.xlane.f32.xlu0 %v4193
    %v4195 = vpop.xlane.xlu0 %4194
    %v4196 = vsel %vm422, %v4192, 0.0
    %4197 = vadd.xlane.f32.xlu0 %v4196
    %v4198 = vpop.xlane.xlu0 %4197
    %v4199 = vrcp.pop %v4195
    %v4200 = vrcp.pop %v4198
    %v4201 = vmul.f32 %v4190, %v4199
    %v4202 = vmul.f32 %v4192, %v4200
    %4203 = vrot.lane.b32.xlu0 %v3452, 40
    %v4204 = vpop.permute.xlu0 %4203
    %4205 = vrot.lane.b32.xlu0 %v3451, 40
    %v4206 = vpop.permute.xlu0 %4205
    %v4209 = vsel %vm418, %v4201, 0
    %v4212 = vsel %vm418, %v4202, 0
    %v4214 = vsel %vm453, %v4206, 0
    %4216 = vmatprep.subr.mxu0 0.0
    %4217 = vmatpush1.msra.mxu0 %v4204
    %4218 = vmatprep.subr.mxu0 0.0
    %4219 = vmatpush1.msra.mxu0 %v4214
    %4220 = vmatprep.subr.mxu0 0.0
    %4221 = vmatpush1.msra.mxu0 0.0
    %4222 = vmatprep.subr.mxu0 0.0
    %4223 = vmatpush1.msra.mxu0 0.0
    %4224 = vmatprep.subr.mxu0 0.0
    %4225 = vmatpush1.msra.mxu0 0.0
    %4226 = vmatprep.subr.mxu0 0.0
    %4227 = vmatpush1.msra.mxu0 0.0
    %4228 = vmatprep.subr.mxu0 0.0
    %4229 = vmatpush1.msra.mxu0 0.0
    %4230 = vmatprep.subr.mxu0 0.0
    %4231 = vmatpush1.msra.mxu0 0.0
    %4232 = vmatprep.subr.mxu0 0.0
    %4233 = vmatpush1.msra.mxu0 0.0
    %4234 = vmatprep.subr.mxu0 0.0
    %4235 = vmatpush1.msra.mxu0 0.0
    %4236 = vmatprep.subr.mxu0 0.0
    %4237 = vmatpush1.msra.mxu0 0.0
    %4238 = vmatprep.subr.mxu0 0.0
    %4239 = vmatpush1.msra.mxu0 0.0
    %4240 = vmatprep.subr.mxu0 0.0
    %4241 = vmatpush1.msra.mxu0 0.0
    %4242 = vmatprep.subr.mxu0 0.0
    %4243 = vmatpush1.msra.mxu0 0.0
    %4244 = vmatprep.subr.mxu0 0.0
    %4245 = vmatpush1.msra.mxu0 0.0
    %4246 = vmatprep.subr.mxu0 0.0
    %4247 = vmatpush1.msra.mxu0 0.0
    %4248 = vmatprep.subr.mxu0 0.0
    %4249 = vmatpush1.msra.mxu0 0.0
    %4250 = vmatprep.subr.mxu0 0.0
    %4251 = vmatpush1.msra.mxu0 0.0
    %4252 = vmatprep.subr.mxu0 0.0
    %4253 = vmatpush1.msra.mxu0 0.0
    %4254 = vmatprep.subr.mxu0 0.0
    %4255 = vmatpush1.msra.mxu0 0.0
    %4256 = vmatprep.subr.mxu0 0.0
    %4257 = vmatpush1.msra.mxu0 0.0
    %4258 = vmatprep.subr.mxu0 0.0
    %4259 = vmatpush1.msra.mxu0 0.0
    %4260 = vmatprep.subr.mxu0 0.0
    %4261 = vmatpush1.msra.mxu0 0.0
    %4262 = vmatprep.subr.mxu0 0.0
    %4263 = vmatpush1.msra.mxu0 0.0
    %4264 = vmatprep.subr.mxu0 0.0
    %4265 = vmatpush1.msra.mxu0 0.0
    %4266 = vmatprep.subr.mxu0 0.0
    %4267 = vmatpush1.msra.mxu0 0.0
    %4268 = vmatprep.subr.mxu0 0.0
    %4269 = vmatpush1.msra.mxu0 0.0
    %4270 = vmatprep.subr.mxu0 0.0
    %4271 = vmatpush1.msra.mxu0 0.0
    %4272 = vmatprep.subr.mxu0 0.0
    %4273 = vmatpush1.msra.mxu0 0.0
    %4274 = vmatprep.subr.mxu0 0.0
    %4275 = vmatpush1.msra.mxu0 0.0
    %4276 = vmatprep.subr.mxu0 0.0
    %4277 = vmatpush1.msra.mxu0 0.0
    %4278 = vmatprep.subr.mxu0 0.0
    %4279 = vmatpush1.msra.mxu0 0.0
    %4280 = vmatprep.mubr.f32.mxu0 0.0
    %4281 = vmatmul.mubr.f32.gmra.mrb[0].mxu0 %v4209
    %v4282 = vpop.f32.mrb[0].mxu0
    %v4283 = vadd.f32 0.0, %v4282
    %v4284 = vpop.f32.mrb[0].mxu0
    %4285 = vmatprep.mubr.f32.mxu0 0.0
    %4286 = vmatmul.mubr.f32.gmra.mrb[0].mxu0 %v4212
    %v4287 = vpop.f32.mrb[0].mxu0
    %v4288 = vadd.f32 0.0, %v4287
    %v4289 = vpop.f32.mrb[0].mxu0
    %4290 = vdwg.mxu0
    %4293 = vrot.lane.b32.xlu0 %v4283, 24
    %v4294 = vpop.permute.xlu0 %4293
    %4295 = vrot.lane.b32.xlu0 %v4288, 24
    %v4296 = vpop.permute.xlu0 %4295
    %4299 = vst.msk [vmem:[#allocation3 + $0xc] sm:$0xff] %vm1181, %v4294
    %4300 = vst.msk [vmem:[#allocation3 + $0x14] sm:$0xf] %vm1183, %v4296
    %v4301 = vld [vmem:[#allocation3] sm:$0xff]
    %v4302 = vld [vmem:[#allocation3 + $0x8] sm:$0xff]
    %v4303 = vld [vmem:[#allocation3 + $0x10] sm:$0xff]
    %s4304 = scalar_lea.vmem %s9, 32
    %v4305 = vld [vmem:[%s4304] sm:$0xff]
    %v4306 = vld [vmem:[%s4304 + $0x8] sm:$0xff]
    %v4307 = vld [vmem:[%s4304 + $0x10] sm:$0xff]
    %v4308 = vld [vmem:[%s4304 + $0x18] sm:$0xff]
    %s4309 = scalar_lea.vmem %s10, 1
    %v4310 = vld [vmem:[%s4309] sm:$0x1]
    %v4312 = vlaneseq
    %v4313 = vshrl.u32 %v4312, 7
    %v4314 = vsub.s32 0, %v4313
    %v4315 = vrot.slane %v4310, %v4314
    %v4318 = vsel %vm79, %v4301, 0
    %v4321 = vsel %vm79, %v4302, 0
    %v4324 = vsel %vm79, %v4303, 0
    %4326 = vmatprep.subr.mxu0 0.0
    %4327 = vmatpush1.msra.mxu0 %v4305
    %4328 = vmatprep.subr.mxu0 0.0
    %4329 = vmatpush1.msra.mxu0 %v4306
    %4330 = vmatprep.subr.mxu0 0.0
    %4331 = vmatpush1.msra.mxu0 %v4307
    %4332 = vmatprep.subr.mxu0 0.0
    %4333 = vmatpush1.msra.mxu0 %v4308
    %4334 = vmatprep.subr.mxu0 0.0
    %4335 = vmatpush1.msra.mxu0 0.0
    %4336 = vmatprep.subr.mxu0 0.0
    %4337 = vmatpush1.msra.mxu0 0.0
    %4338 = vmatprep.subr.mxu0 0.0
    %4339 = vmatpush1.msra.mxu0 0.0
    %4340 = vmatprep.subr.mxu0 0.0
    %4341 = vmatpush1.msra.mxu0 0.0
    %4342 = vmatprep.subr.mxu0 0.0
    %4343 = vmatpush1.msra.mxu0 0.0
    %4344 = vmatprep.subr.mxu0 0.0
    %4345 = vmatpush1.msra.mxu0 0.0
    %4346 = vmatprep.subr.mxu0 0.0
    %4347 = vmatpush1.msra.mxu0 0.0
    %4348 = vmatprep.subr.mxu0 0.0
    %4349 = vmatpush1.msra.mxu0 0.0
    %4350 = vmatprep.subr.mxu0 0.0
    %4351 = vmatpush1.msra.mxu0 0.0
    %4352 = vmatprep.subr.mxu0 0.0
    %4353 = vmatpush1.msra.mxu0 0.0
    %4354 = vmatprep.subr.mxu0 0.0
    %4355 = vmatpush1.msra.mxu0 0.0
    %4356 = vmatprep.subr.mxu0 0.0
    %4357 = vmatpush1.msra.mxu0 0.0
    %4358 = vmatprep.subr.mxu0 0.0
    %4359 = vmatpush1.msra.mxu0 0.0
    %4360 = vmatprep.subr.mxu0 0.0
    %4361 = vmatpush1.msra.mxu0 0.0
    %4362 = vmatprep.subr.mxu0 0.0
    %4363 = vmatpush1.msra.mxu0 0.0
    %4364 = vmatprep.subr.mxu0 0.0
    %4365 = vmatpush1.msra.mxu0 0.0
    %4366 = vmatprep.subr.mxu0 0.0
    %4367 = vmatpush1.msra.mxu0 0.0
    %4368 = vmatprep.subr.mxu0 0.0
    %4369 = vmatpush1.msra.mxu0 0.0
    %4370 = vmatprep.subr.mxu0 0.0
    %4371 = vmatpush1.msra.mxu0 0.0
    %4372 = vmatprep.subr.mxu0 0.0
    %4373 = vmatpush1.msra.mxu0 0.0
    %4374 = vmatprep.subr.mxu0 0.0
    %4375 = vmatpush1.msra.mxu0 0.0
    %4376 = vmatprep.subr.mxu0 0.0
    %4377 = vmatpush1.msra.mxu0 0.0
    %4378 = vmatprep.subr.mxu0 0.0
    %4379 = vmatpush1.msra.mxu0 0.0
    %4380 = vmatprep.subr.mxu0 0.0
    %4381 = vmatpush1.msra.mxu0 0.0
    %4382 = vmatprep.subr.mxu0 0.0
    %4383 = vmatpush1.msra.mxu0 0.0
    %4384 = vmatprep.subr.mxu0 0.0
    %4385 = vmatpush1.msra.mxu0 0.0
    %4386 = vmatprep.subr.mxu0 0.0
    %4387 = vmatpush1.msra.mxu0 0.0
    %4388 = vmatprep.subr.mxu0 0.0
    %4389 = vmatpush1.msra.mxu0 0.0
    %4390 = vmatprep.mubr.f32.mxu0 0.0
    %4391 = vmatmul.mubr.f32.gmra.mrb[0].mxu0 %v4318
    %v4392 = vpop.f32.mrb[0].mxu0
    %v4393 = vadd.f32 %v4315, %v4392
    %v4394 = vpop.f32.mrb[0].mxu0
    %4395 = vmatprep.mubr.f32.mxu0 0.0
    %4396 = vmatmul.mubr.f32.gmra.mrb[0].mxu0 %v4321
    %v4397 = vpop.f32.mrb[0].mxu0
    %v4398 = vadd.f32 %v4315, %v4397
    %v4399 = vpop.f32.mrb[0].mxu0
    %4400 = vmatprep.mubr.f32.mxu0 0.0
    %4401 = vmatmul.mubr.f32.gmra.mrb[0].mxu0 %v4324
    %v4402 = vpop.f32.mrb[0].mxu0
    %v4403 = vadd.f32 %v4315, %v4402
    %v4404 = vpop.f32.mrb[0].mxu0
    %4405 = vdwg.mxu0
    %v4406 = vadd.f32 %v4393, %v2494
    %v4407 = vadd.f32 %v4398, %v2495
    %v4408 = vadd.f32 %v4403, %v2496
    %s4409 = scalar_lea.vmem %s11, 1
    %v4410 = vld [vmem:[%s4409] sm:$0x1]
    %s4411 = scalar_lea.vmem %s12, 1
    %v4412 = vld [vmem:[%s4411] sm:$0x1]
    %v4413 = vsel %vm79, %v4406, 0.0
    %4414 = vadd.xlane.f32.xlu0 %v4413
    %v4415 = vpop.xlane.xlu0 %4414
    %v4416 = vsel %vm79, %v4407, 0.0
    %4417 = vadd.xlane.f32.xlu0 %v4416
    %v4418 = vpop.xlane.xlu0 %4417
    %v4419 = vsel %vm79, %v4408, 0.0
    %4420 = vadd.xlane.f32.xlu0 %v4419
    %v4421 = vpop.xlane.xlu0 %4420
    %v4422 = vmul.f32 %v4415, %v86
    %v4423 = vmul.f32 %v4418, %v86
    %v4424 = vmul.f32 %v4421, %v86
    %v4425 = vsub.f32 %v4406, %v4422
    %v4426 = vsub.f32 %v4407, %v4423
    %v4427 = vsub.f32 %v4408, %v4424
    %v4428 = vmul.f32 %v4425, %v4425
    %v4429 = vmul.f32 %v4426, %v4426
    %v4430 = vmul.f32 %v4427, %v4427
    %v4431 = vsel %vm79, %v4428, 0.0
    %4432 = vadd.xlane.f32.xlu0 %v4431
    %v4433 = vpop.xlane.xlu0 %4432
    %v4434 = vsel %vm79, %v4429, 0.0
    %4435 = vadd.xlane.f32.xlu0 %v4434
    %v4436 = vpop.xlane.xlu0 %4435
    %v4437 = vsel %vm79, %v4430, 0.0
    %4438 = vadd.xlane.f32.xlu0 %v4437
    %v4439 = vpop.xlane.xlu0 %4438
    %v4440 = vmul.f32 %v4433, %v86
    %v4441 = vmul.f32 %v4436, %v86
    %v4442 = vmul.f32 %v4439, %v86
    %v4443 = vadd.f32 %v4440, 1e-12
    %v4444 = vadd.f32 %v4441, 1e-12
    %v4445 = vadd.f32 %v4442, 1e-12
    %v4446 = vrsqrt.pop %v4443
    %v4447 = vrsqrt.pop %v4444
    %v4448 = vrsqrt.pop %v4445
    %v4449 = vmul.f32 %v4425, %v4446
    %v4450 = vmul.f32 %v4426, %v4447
    %v4451 = vmul.f32 %v4427, %v4448
    %v4453 = vlaneseq
    %v4454 = vshrl.u32 %v4453, 7
    %v4455 = vsub.s32 0, %v4454
    %v4456 = vrot.slane %v4410, %v4455
    %v4458 = vmul.f32 %v4449, %v4456
    %v4459 = vmul.f32 %v4450, %v4456
    %v4460 = vmul.f32 %v4451, %v4456
    %v4462 = vlaneseq
    %v4463 = vshrl.u32 %v4462, 7
    %v4464 = vsub.s32 0, %v4463
    %v4465 = vrot.slane %v4412, %v4464
    %v4467 = vadd.f32 %v4458, %v4465
    %v4468 = vadd.f32 %v4459, %v4465
    %v4469 = vadd.f32 %v4460, %v4465
    %s4470 = scalar_lea.vmem %s13, 32
    %v4471 = vld [vmem:[%s4470] sm:$0xff]
    %v4472 = vld [vmem:[%s4470 + $0x8] sm:$0xff]
    %v4473 = vld [vmem:[%s4470 + $0x10] sm:$0xff]
    %v4474 = vld [vmem:[%s4470 + $0x18] sm:$0xff]
    %s4475 = scalar_lea.vmem %s14, 1
    %v4476 = vld [vmem:[%s4475] sm:$0x1]
    %v4478 = vlaneseq
    %v4479 = vshrl.u32 %v4478, 7
    %v4480 = vsub.s32 0, %v4479
    %v4481 = vrot.slane %v4476, %v4480
    %v4484 = vsel %vm79, %v4467, 0
    %v4487 = vsel %vm79, %v4468, 0
    %v4490 = vsel %vm79, %v4469, 0
    %4492 = vmatprep.subr.mxu0 0.0
    %4493 = vmatpush1.msra.mxu0 %v4471
    %4494 = vmatprep.subr.mxu0 0.0
    %4495 = vmatpush1.msra.mxu0 %v4472
    %4496 = vmatprep.subr.mxu0 0.0
    %4497 = vmatpush1.msra.mxu0 %v4473
    %4498 = vmatprep.subr.mxu0 0.0
    %4499 = vmatpush1.msra.mxu0 %v4474
    %4500 = vmatprep.subr.mxu0 0.0
    %4501 = vmatpush1.msra.mxu0 0.0
    %4502 = vmatprep.subr.mxu0 0.0
    %4503 = vmatpush1.msra.mxu0 0.0
    %4504 = vmatprep.subr.mxu0 0.0
    %4505 = vmatpush1.msra.mxu0 0.0
    %4506 = vmatprep.subr.mxu0 0.0
    %4507 = vmatpush1.msra.mxu0 0.0
    %4508 = vmatprep.subr.mxu0 0.0
    %4509 = vmatpush1.msra.mxu0 0.0
    %4510 = vmatprep.subr.mxu0 0.0
    %4511 = vmatpush1.msra.mxu0 0.0
    %4512 = vmatprep.subr.mxu0 0.0
    %4513 = vmatpush1.msra.mxu0 0.0
    %4514 = vmatprep.subr.mxu0 0.0
    %4515 = vmatpush1.msra.mxu0 0.0
    %4516 = vmatprep.subr.mxu0 0.0
    %4517 = vmatpush1.msra.mxu0 0.0
    %4518 = vmatprep.subr.mxu0 0.0
    %4519 = vmatpush1.msra.mxu0 0.0
    %4520 = vmatprep.subr.mxu0 0.0
    %4521 = vmatpush1.msra.mxu0 0.0
    %4522 = vmatprep.subr.mxu0 0.0
    %4523 = vmatpush1.msra.mxu0 0.0
    %4524 = vmatprep.subr.mxu0 0.0
    %4525 = vmatpush1.msra.mxu0 0.0
    %4526 = vmatprep.subr.mxu0 0.0
    %4527 = vmatpush1.msra.mxu0 0.0
    %4528 = vmatprep.subr.mxu0 0.0
    %4529 = vmatpush1.msra.mxu0 0.0
    %4530 = vmatprep.subr.mxu0 0.0
    %4531 = vmatpush1.msra.mxu0 0.0
    %4532 = vmatprep.subr.mxu0 0.0
    %4533 = vmatpush1.msra.mxu0 0.0
    %4534 = vmatprep.subr.mxu0 0.0
    %4535 = vmatpush1.msra.mxu0 0.0
    %4536 = vmatprep.subr.mxu0 0.0
    %4537 = vmatpush1.msra.mxu0 0.0
    %4538 = vmatprep.subr.mxu0 0.0
    %4539 = vmatpush1.msra.mxu0 0.0
    %4540 = vmatprep.subr.mxu0 0.0
    %4541 = vmatpush1.msra.mxu0 0.0
    %4542 = vmatprep.subr.mxu0 0.0
    %4543 = vmatpush1.msra.mxu0 0.0
    %4544 = vmatprep.subr.mxu0 0.0
    %4545 = vmatpush1.msra.mxu0 0.0
    %4546 = vmatprep.subr.mxu0 0.0
    %4547 = vmatpush1.msra.mxu0 0.0
    %4548 = vmatprep.subr.mxu0 0.0
    %4549 = vmatpush1.msra.mxu0 0.0
    %4550 = vmatprep.subr.mxu0 0.0
    %4551 = vmatpush1.msra.mxu0 0.0
    %4552 = vmatprep.subr.mxu0 0.0
    %4553 = vmatpush1.msra.mxu0 0.0
    %4554 = vmatprep.subr.mxu0 0.0
    %4555 = vmatpush1.msra.mxu0 0.0
    %4556 = vmatprep.mubr.f32.mxu0 0.0
    %4557 = vmatmul.mubr.f32.gmra.mrb[0].mxu0 %v4484
    %v4558 = vpop.f32.mrb[0].mxu0
    %v4559 = vadd.f32 %v4481, %v4558
    %v4560 = vpop.f32.mrb[0].mxu0
    %4561 = vmatprep.mubr.f32.mxu0 0.0
    %4562 = vmatmul.mubr.f32.gmra.mrb[0].mxu0 %v4487
    %v4563 = vpop.f32.mrb[0].mxu0
    %v4564 = vadd.f32 %v4481, %v4563
    %v4565 = vpop.f32.mrb[0].mxu0
    %4566 = vmatprep.mubr.f32.mxu0 0.0
    %4567 = vmatmul.mubr.f32.gmra.mrb[0].mxu0 %v4490
    %v4568 = vpop.f32.mrb[0].mxu0
    %v4569 = vadd.f32 %v4481, %v4568
    %v4570 = vpop.f32.mrb[0].mxu0
    %4571 = vdwg.mxu0
    %v4572 = vmul.f32 %v4559, 0.5
    %v4573 = vmul.f32 %v4564, 0.5
    %v4574 = vmul.f32 %v4569, 0.5
    %v4575 = vmul.f32 %v4559, 0.70710677
    %v4576 = vmul.f32 %v4564, 0.70710677
    %v4577 = vmul.f32 %v4569, 0.70710677
    %v4578 = verf.f32.pop %v4575
    %v4579 = verf.f32.pop %v4576
    %v4580 = verf.f32.pop %v4577
    %v4581 = vadd.f32 %v4578, 1.0
    %v4582 = vadd.f32 %v4579, 1.0
    %v4583 = vadd.f32 %v4580, 1.0
    %v4584 = vmul.f32 %v4572, %v4581
    %v4585 = vmul.f32 %v4573, %v4582
    %v4586 = vmul.f32 %v4574, %v4583
    %s4587 = scalar_lea.vmem %s15, 64
    %v4588 = vld [vmem:[%s4587] sm:$0xff]
    %v4589 = vld [vmem:[%s4587 + $0x8] sm:$0xff]
    %v4590 = vld [vmem:[%s4587 + $0x10] sm:$0xff]
    %v4591 = vld [vmem:[%s4587 + $0x18] sm:$0xff]
    %v4592 = vld [vmem:[%s4587 + $0x20] sm:$0xff]
    %v4593 = vld [vmem:[%s4587 + $0x28] sm:$0xff]
    %v4594 = vld [vmem:[%s4587 + $0x30] sm:$0xff]
    %v4595 = vld [vmem:[%s4587 + $0x38] sm:$0xff]
    %s4596 = scalar_lea.vmem %s16, 1
    %v4597 = vld [vmem:[%s4596] sm:$0x1]
    %v4599 = vlaneseq
    %v4600 = vshrl.u32 %v4599, 7
    %v4601 = vsub.s32 0, %v4600
    %v4602 = vrot.slane %v4597, %v4601
    %v4605 = vsel %vm2336, %v4584, 0
    %v4608 = vsel %vm2336, %v4585, 0
    %v4611 = vsel %vm2336, %v4586, 0
    %4613 = vmatprep.subr.mxu0 0.0
    %4614 = vmatpush1.msra.mxu0 %v4588
    %4615 = vmatprep.subr.mxu0 0.0
    %4616 = vmatpush1.msra.mxu0 %v4589
    %4617 = vmatprep.subr.mxu0 0.0
    %4618 = vmatpush1.msra.mxu0 %v4590
    %4619 = vmatprep.subr.mxu0 0.0
    %4620 = vmatpush1.msra.mxu0 %v4591
    %4621 = vmatprep.subr.mxu0 0.0
    %4622 = vmatpush1.msra.mxu0 %v4592
    %4623 = vmatprep.subr.mxu0 0.0
    %4624 = vmatpush1.msra.mxu0 %v4593
    %4625 = vmatprep.subr.mxu0 0.0
    %4626 = vmatpush1.msra.mxu0 %v4594
    %4627 = vmatprep.subr.mxu0 0.0
    %4628 = vmatpush1.msra.mxu0 %v4595
    %4629 = vmatprep.subr.mxu0 0.0
    %4630 = vmatpush1.msra.mxu0 0.0
    %4631 = vmatprep.subr.mxu0 0.0
    %4632 = vmatpush1.msra.mxu0 0.0
    %4633 = vmatprep.subr.mxu0 0.0
    %4634 = vmatpush1.msra.mxu0 0.0
    %4635 = vmatprep.subr.mxu0 0.0
    %4636 = vmatpush1.msra.mxu0 0.0
    %4637 = vmatprep.subr.mxu0 0.0
    %4638 = vmatpush1.msra.mxu0 0.0
    %4639 = vmatprep.subr.mxu0 0.0
    %4640 = vmatpush1.msra.mxu0 0.0
    %4641 = vmatprep.subr.mxu0 0.0
    %4642 = vmatpush1.msra.mxu0 0.0
    %4643 = vmatprep.subr.mxu0 0.0
    %4644 = vmatpush1.msra.mxu0 0.0
    %4645 = vmatprep.subr.mxu0 0.0
    %4646 = vmatpush1.msra.mxu0 0.0
    %4647 = vmatprep.subr.mxu0 0.0
    %4648 = vmatpush1.msra.mxu0 0.0
    %4649 = vmatprep.subr.mxu0 0.0
    %4650 = vmatpush1.msra.mxu0 0.0
    %4651 = vmatprep.subr.mxu0 0.0
    %4652 = vmatpush1.msra.mxu0 0.0
    %4653 = vmatprep.subr.mxu0 0.0
    %4654 = vmatpush1.msra.mxu0 0.0
    %4655 = vmatprep.subr.mxu0 0.0
    %4656 = vmatpush1.msra.mxu0 0.0
    %4657 = vmatprep.subr.mxu0 0.0
    %4658 = vmatpush1.msra.mxu0 0.0
    %4659 = vmatprep.subr.mxu0 0.0
    %4660 = vmatpush1.msra.mxu0 0.0
    %4661 = vmatprep.subr.mxu0 0.0
    %4662 = vmatpush1.msra.mxu0 0.0
    %4663 = vmatprep.subr.mxu0 0.0
    %4664 = vmatpush1.msra.mxu0 0.0
    %4665 = vmatprep.subr.mxu0 0.0
    %4666 = vmatpush1.msra.mxu0 0.0
    %4667 = vmatprep.subr.mxu0 0.0
    %4668 = vmatpush1.msra.mxu0 0.0
    %4669 = vmatprep.subr.mxu0 0.0
    %4670 = vmatpush1.msra.mxu0 0.0
    %4671 = vmatprep.subr.mxu0 0.0
    %4672 = vmatpush1.msra.mxu0 0.0
    %4673 = vmatprep.subr.mxu0 0.0
    %4674 = vmatpush1.msra.mxu0 0.0
    %4675 = vmatprep.subr.mxu0 0.0
    %4676 = vmatpush1.msra.mxu0 0.0
    %4677 = vmatprep.mubr.f32.mxu0 0.0
    %4678 = vmatmul.mubr.f32.gmra.mrb[0].mxu0 %v4605
    %v4679 = vpop.f32.mrb[0].mxu0
    %v4680 = vadd.f32 %v4602, %v4679
    %v4681 = vpop.f32.mrb[0].mxu0
    %4682 = vmatprep.mubr.f32.mxu0 0.0
    %4683 = vmatmul.mubr.f32.gmra.mrb[0].mxu0 %v4608
    %v4684 = vpop.f32.mrb[0].mxu0
    %v4685 = vadd.f32 %v4602, %v4684
    %v4686 = vpop.f32.mrb[0].mxu0
    %4687 = vmatprep.mubr.f32.mxu0 0.0
    %4688 = vmatmul.mubr.f32.gmra.mrb[0].mxu0 %v4611
    %v4689 = vpop.f32.mrb[0].mxu0
    %v4690 = vadd.f32 %v4602, %v4689
    %v4691 = vpop.f32.mrb[0].mxu0
    %4692 = vdwg.mxu0
    %v4693 = vadd.f32 %v4680, %v4467
    %v4694 = vadd.f32 %v4685, %v4468
    %v4695 = vadd.f32 %v4690, %v4469
    %s4696 = scalar_lea.vmem %s17, 1
    %v4697 = vld [vmem:[%s4696] sm:$0x1]
    %s4698 = scalar_lea.vmem %s18, 1
    %v4699 = vld [vmem:[%s4698] sm:$0x1]
    %v4700 = vsel %vm79, %v4693, 0.0
    %4701 = vadd.xlane.f32.xlu0 %v4700
    %v4702 = vpop.xlane.xlu0 %4701
    %v4703 = vsel %vm79, %v4694, 0.0
    %4704 = vadd.xlane.f32.xlu0 %v4703
    %v4705 = vpop.xlane.xlu0 %4704
    %v4706 = vsel %vm79, %v4695, 0.0
    %4707 = vadd.xlane.f32.xlu0 %v4706
    %v4708 = vpop.xlane.xlu0 %4707
    %v4709 = vmul.f32 %v4702, %v86
    %v4710 = vmul.f32 %v4705, %v86
    %v4711 = vmul.f32 %v4708, %v86
    %v4712 = vsub.f32 %v4693, %v4709
    %v4713 = vsub.f32 %v4694, %v4710
    %v4714 = vsub.f32 %v4695, %v4711
    %v4715 = vmul.f32 %v4712, %v4712
    %v4716 = vmul.f32 %v4713, %v4713
    %v4717 = vmul.f32 %v4714, %v4714
    %v4718 = vsel %vm79, %v4715, 0.0
    %4719 = vadd.xlane.f32.xlu0 %v4718
    %v4720 = vpop.xlane.xlu0 %4719
    %v4721 = vsel %vm79, %v4716, 0.0
    %4722 = vadd.xlane.f32.xlu0 %v4721
    %v4723 = vpop.xlane.xlu0 %4722
    %v4724 = vsel %vm79, %v4717, 0.0
    %4725 = vadd.xlane.f32.xlu0 %v4724
    %v4726 = vpop.xlane.xlu0 %4725
    %v4727 = vmul.f32 %v4720, %v86
    %v4728 = vmul.f32 %v4723, %v86
    %v4729 = vmul.f32 %v4726, %v86
    %v4730 = vadd.f32 %v4727, 1e-12
    %v4731 = vadd.f32 %v4728, 1e-12
    %v4732 = vadd.f32 %v4729, 1e-12
    %v4733 = vrsqrt.pop %v4730
    %v4734 = vrsqrt.pop %v4731
    %v4735 = vrsqrt.pop %v4732
    %v4736 = vmul.f32 %v4712, %v4733
    %v4737 = vmul.f32 %v4713, %v4734
    %v4738 = vmul.f32 %v4714, %v4735
    %v4740 = vlaneseq
    %v4741 = vshrl.u32 %v4740, 7
    %v4742 = vsub.s32 0, %v4741
    %v4743 = vrot.slane %v4697, %v4742
    %v4745 = vmul.f32 %v4736, %v4743
    %v4746 = vmul.f32 %v4737, %v4743
    %v4747 = vmul.f32 %v4738, %v4743
    %v4749 = vlaneseq
    %v4750 = vshrl.u32 %v4749, 7
    %v4751 = vsub.s32 0, %v4750
    %v4752 = vrot.slane %v4699, %v4751
    %v4754 = vadd.f32 %v4745, %v4752
    %v4755 = vadd.f32 %v4746, %v4752
    %v4756 = vadd.f32 %v4747, %v4752
    %4757 = vst.msk [vmem:[#allocation2] sm:$0xff] %vm79, %v4754
    %4758 = vst.msk [vmem:[#allocation2 + $0x8] sm:$0xff] %vm79, %v4755
    %4759 = vst.msk [vmem:[#allocation2 + $0x10] sm:$0xff] %vm79, %v4756
    %v4760 = vld [vmem:[#allocation2] sm:$0xff]
    %v4761 = vld [vmem:[#allocation2 + $0x8] sm:$0xff]
    %v4762 = vld [vmem:[#allocation2 + $0x10] sm:$0xff]
    %v4763 = vld [vmem:[%s19] sm:$0x1]
    %v4764 = vld [vmem:[%s20] sm:$0x1]
    %v4765 = vsel %vm79, %v4760, 0.0
    %4766 = vadd.xlane.f32.xlu0 %v4765
    %v4767 = vpop.xlane.xlu0 %4766
    %v4768 = vsel %vm79, %v4761, 0.0
    %4769 = vadd.xlane.f32.xlu0 %v4768
    %v4770 = vpop.xlane.xlu0 %4769
    %v4771 = vsel %vm79, %v4762, 0.0
    %4772 = vadd.xlane.f32.xlu0 %v4771
    %v4773 = vpop.xlane.xlu0 %4772
    %v4774 = vmul.f32 %v4767, %v86
    %v4775 = vmul.f32 %v4770, %v86
    %v4776 = vmul.f32 %v4773, %v86
    %v4777 = vsub.f32 %v4760, %v4774
    %v4778 = vsub.f32 %v4761, %v4775
    %v4779 = vsub.f32 %v4762, %v4776
    %v4780 = vmul.f32 %v4777, %v4777
    %v4781 = vmul.f32 %v4778, %v4778
    %v4782 = vmul.f32 %v4779, %v4779
    %v4783 = vsel %vm79, %v4780, 0.0
    %4784 = vadd.xlane.f32.xlu0 %v4783
    %v4785 = vpop.xlane.xlu0 %4784
    %v4786 = vsel %vm79, %v4781, 0.0
    %4787 = vadd.xlane.f32.xlu0 %v4786
    %v4788 = vpop.xlane.xlu0 %4787
    %v4789 = vsel %vm79, %v4782, 0.0
    %4790 = vadd.xlane.f32.xlu0 %v4789
    %v4791 = vpop.xlane.xlu0 %4790
    %v4792 = vmul.f32 %v4785, %v86
    %v4793 = vmul.f32 %v4788, %v86
    %v4794 = vmul.f32 %v4791, %v86
    %v4795 = vadd.f32 %v4792, 1e-05
    %v4796 = vadd.f32 %v4793, 1e-05
    %v4797 = vadd.f32 %v4794, 1e-05
    %v4798 = vrsqrt.pop %v4795
    %v4799 = vrsqrt.pop %v4796
    %v4800 = vrsqrt.pop %v4797
    %v4801 = vmul.f32 %v4777, %v4798
    %v4802 = vmul.f32 %v4778, %v4799
    %v4803 = vmul.f32 %v4779, %v4800
    %v4805 = vlaneseq
    %v4806 = vshrl.u32 %v4805, 7
    %v4807 = vsub.s32 0, %v4806
    %v4808 = vrot.slane %v4763, %v4807
    %v4810 = vmul.f32 %v4801, %v4808
    %v4811 = vmul.f32 %v4802, %v4808
    %v4812 = vmul.f32 %v4803, %v4808
    %v4814 = vlaneseq
    %v4815 = vshrl.u32 %v4814, 7
    %v4816 = vsub.s32 0, %v4815
    %v4817 = vrot.slane %v4764, %v4816
    %v4819 = vadd.f32 %v4810, %v4817
    %v4820 = vadd.f32 %v4811, %v4817
    %v4821 = vadd.f32 %v4812, %v4817
    %v4822 = vld [vmem:[%s21] sm:$0xff]
    %v4823 = vld [vmem:[%s21 + $0x8] sm:$0xff]
    %v4824 = vld [vmem:[%s21 + $0x10] sm:$0xff]
    %v4825 = vld [vmem:[%s21 + $0x18] sm:$0xff]
    %v4826 = vld [vmem:[%s22] sm:$0x1]
    %v4828 = vlaneseq
    %v4829 = vshrl.u32 %v4828, 7
    %v4830 = vsub.s32 0, %v4829
    %v4831 = vrot.slane %v4826, %v4830
    %v4834 = vsel %vm79, %v4819, 0
    %v4837 = vsel %vm79, %v4820, 0
    %v4840 = vsel %vm79, %v4821, 0
    %4842 = vmatprep.subr.mxu0 0.0
    %4843 = vmatpush1.msra.mxu0 %v4822
    %4844 = vmatprep.subr.mxu0 0.0
    %4845 = vmatpush1.msra.mxu0 %v4823
    %4846 = vmatprep.subr.mxu0 0.0
    %4847 = vmatpush1.msra.mxu0 %v4824
    %4848 = vmatprep.subr.mxu0 0.0
    %4849 = vmatpush1.msra.mxu0 %v4825
    %4850 = vmatprep.subr.mxu0 0.0
    %4851 = vmatpush1.msra.mxu0 0.0
    %4852 = vmatprep.subr.mxu0 0.0
    %4853 = vmatpush1.msra.mxu0 0.0
    %4854 = vmatprep.subr.mxu0 0.0
    %4855 = vmatpush1.msra.mxu0 0.0
    %4856 = vmatprep.subr.mxu0 0.0
    %4857 = vmatpush1.msra.mxu0 0.0
    %4858 = vmatprep.subr.mxu0 0.0
    %4859 = vmatpush1.msra.mxu0 0.0
    %4860 = vmatprep.subr.mxu0 0.0
    %4861 = vmatpush1.msra.mxu0 0.0
    %4862 = vmatprep.subr.mxu0 0.0
    %4863 = vmatpush1.msra.mxu0 0.0
    %4864 = vmatprep.subr.mxu0 0.0
    %4865 = vmatpush1.msra.mxu0 0.0
    %4866 = vmatprep.subr.mxu0 0.0
    %4867 = vmatpush1.msra.mxu0 0.0
    %4868 = vmatprep.subr.mxu0 0.0
    %4869 = vmatpush1.msra.mxu0 0.0
    %4870 = vmatprep.subr.mxu0 0.0
    %4871 = vmatpush1.msra.mxu0 0.0
    %4872 = vmatprep.subr.mxu0 0.0
    %4873 = vmatpush1.msra.mxu0 0.0
    %4874 = vmatprep.subr.mxu0 0.0
    %4875 = vmatpush1.msra.mxu0 0.0
    %4876 = vmatprep.subr.mxu0 0.0
    %4877 = vmatpush1.msra.mxu0 0.0
    %4878 = vmatprep.subr.mxu0 0.0
    %4879 = vmatpush1.msra.mxu0 0.0
    %4880 = vmatprep.subr.mxu0 0.0
    %4881 = vmatpush1.msra.mxu0 0.0
    %4882 = vmatprep.subr.mxu0 0.0
    %4883 = vmatpush1.msra.mxu0 0.0
    %4884 = vmatprep.subr.mxu0 0.0
    %4885 = vmatpush1.msra.mxu0 0.0
    %4886 = vmatprep.subr.mxu0 0.0
    %4887 = vmatpush1.msra.mxu0 0.0
    %4888 = vmatprep.subr.mxu0 0.0
    %4889 = vmatpush1.msra.mxu0 0.0
    %4890 = vmatprep.subr.mxu0 0.0
    %4891 = vmatpush1.msra.mxu0 0.0
    %4892 = vmatprep.subr.mxu0 0.0
    %4893 = vmatpush1.msra.mxu0 0.0
    %4894 = vmatprep.subr.mxu0 0.0
    %4895 = vmatpush1.msra.mxu0 0.0
    %4896 = vmatprep.subr.mxu0 0.0
    %4897 = vmatpush1.msra.mxu0 0.0
    %4898 = vmatprep.subr.mxu0 0.0
    %4899 = vmatpush1.msra.mxu0 0.0
    %4900 = vmatprep.subr.mxu0 0.0
    %4901 = vmatpush1.msra.mxu0 0.0
    %4902 = vmatprep.subr.mxu0 0.0
    %4903 = vmatpush1.msra.mxu0 0.0
    %4904 = vmatprep.subr.mxu0 0.0
    %4905 = vmatpush1.msra.mxu0 0.0
    %4906 = vmatprep.mubr.f32.mxu0 0.0
    %4907 = vmatmul.mubr.f32.gmra.mrb[0].mxu0 %v4834
    %v4908 = vpop.f32.mrb[0].mxu0
    %v4909 = vadd.f32 %v4831, %v4908
    %v4910 = vpop.f32.mrb[0].mxu0
    %4911 = vmatprep.mubr.f32.mxu0 0.0
    %4912 = vmatmul.mubr.f32.gmra.mrb[0].mxu0 %v4837
    %v4913 = vpop.f32.mrb[0].mxu0
    %v4914 = vadd.f32 %v4831, %v4913
    %v4915 = vpop.f32.mrb[0].mxu0
    %4916 = vmatprep.mubr.f32.mxu0 0.0
    %4917 = vmatmul.mubr.f32.gmra.mrb[0].mxu0 %v4840
    %v4918 = vpop.f32.mrb[0].mxu0
    %v4919 = vpop.f32.mrb[0].mxu0
    %4920 = vdwg.mxu0
    %vm4921 = vcmask 57344
    %4922 = vst.msk [vmem:[#allocation4] sm:$0x1] %vm4921, %v4909
    %vm4923 = vcmask 61444
    %4924 = vst.msk [vmem:[#allocation4 - $0x3] sm:$0x10] %vm4923, %v4914
    // Predicated region
    $region94: #{prompted_bert_forward.1} parent=1 // pred_check
      _
    $region95: #{prompted_bert_forward.1} parent=1 // pred_check_branch
      %4926 = sbr.rel (0) target = $region97
    $region96: #{prompted_bert_forward.1} parent=1 // pred_region
      %s4928 = ssub.s32 32, 32
      %4929 = vsyncadd [#allocation5], %s4928
      %s4931 = sshll.u32 [#allocation4], 4
      %s4932 = int_to_ptr.vmem [resolvable:$true] %s4931
      %4934 = dma.vmem_to_hbm [thread:$0]  %s4932, 32, %s23, [#allocation5]
    $region97: #{prompted_bert_forward.1} parent=1 // pred_fallthru
      _
    // Predicated region
    $region98: #{prompted_bert_forward.1} parent=1 // pred_check
      _
    $region99: #{prompted_bert_forward.1} parent=1 // pred_check_branch
      %4936 = sbr.rel (0) target = $region101
    $region100: #{prompted_bert_forward.1} parent=1 // pred_region
      %4937 = dma.done [#allocation5], 32
    $region101: #{prompted_bert_forward.1} parent=1 // pred_fallthru
      _
    %4938 = vsyncpa [#allocation5], 1

</llo_original>
